<compile_context>
chip_gen: v5e
topology: v5e:2x2
jax: 0.10.0
libtpu: 0.0.40
codegen_flags: <defaults>
</compile_context>

<pallas_src>
import functools
import random

import jax
import jax.numpy as jnp
from jax.experimental import pallas as pl
from jax.experimental.pallas import tpu as pltpu

LANE = 128


def _round_up(x, m):
    return (x + m - 1) // m * m


# ---------------------------------------------------------------------------
# Fused whole-model kernel (single grid point, recurrences as unrolled loops).
# ---------------------------------------------------------------------------
def seq2seq_kernel(trg_vocab,
                   use_tf_ref,                      # [steps] int32, SMEM (scalar prefetch)
                   enc_gx_ref,                      # [src_len, B, 4G] enc x@W_ih^T + b
                   enc_whh_ref,                     # [G, 4G]          enc W_hh^T (gate-padded)
                   dec_gtf_ref,                     # [steps,  B, 4G] dec teacher-forced x-gates + b
                   dec_whh_ref,                     # [G, 4G]          dec W_hh^T (gate-padded)
                   emb_ihb_ref,                     # [Vp, 4G] dec_emb @ W_ih^T + b (row table)
                   fcw_ref,                         # [G, Vp]  output projection (padded)
                   fcb_ref,                         # [1, Vp]  output bias (padded)
                   out_ref):                        # [trg_len, B, Vp] logits (lane-dense)
    src_len, B, _ = enc_gx_ref.shape
    steps = dec_gtf_ref.shape[0]
    G = enc_whh_ref.shape[0]                        # hidden dim padded to a 128-lane band
    Vp = out_ref.shape[2]
    V = trg_vocab                                   # true vocab (static closure value)

    def lstm_step(gx, h, c, whh_ref):
        # gx already holds x @ W_ih^T + (b_ih + b_hh); only the recurrent matmul is here.
        gates = gx + jnp.dot(h, whh_ref[...], preferred_element_type=jnp.float32)
        i = jax.nn.sigmoid(gates[:, 0 * G:1 * G])   # whole-vreg gate bands (PyTorch order)
        f = jax.nn.sigmoid(gates[:, 1 * G:2 * G])
        g = jnp.tanh(gates[:, 2 * G:3 * G])
        o = jax.nn.sigmoid(gates[:, 3 * G:4 * G])
        c_new = f * c + i * g
        h_new = o * jnp.tanh(c_new)
        return h_new, c_new                         # padded lanes [H:G] stay exactly 0

    # ---------------- Encoder recurrence ----------------
    def enc_body(t, carry):
        h, c = carry
        return lstm_step(enc_gx_ref[t], h, c, enc_whh_ref)

    zeros_bg = jnp.zeros((B, G), jnp.float32)
    h, c = jax.lax.fori_loop(0, src_len, enc_body, (zeros_bg, zeros_bg),
                             unroll=True)

    # outputs[0] is never written by the reference loop -> keep it zero.
    out_ref[0] = jnp.zeros((B, Vp), jnp.float32)

    # ---------------- Decoder recurrence ----------------
    col = jax.lax.broadcasted_iota(jnp.int32, (B, Vp), 1)
    colf = col.astype(jnp.float32)
    valid = col < V

    def dec_body(s, carry):
        h, c, gx_gen = carry
        # Input pre-activation: teacher-forced stream vs. previous argmax (blend of the
        # linear pre-activations with a 0/1 flag is exact).
        tf = (use_tf_ref[s] != 0).astype(jnp.float32)
        gx = dec_gtf_ref[s] * tf + gx_gen * (1.0 - tf)

        h, c = lstm_step(gx, h, c, dec_whh_ref)

        # Output projection (Vp multiple of 128 -> unmasked lane-dense store).
        logits = (jnp.dot(h, fcw_ref[...], preferred_element_type=jnp.float32)
                  + fcb_ref[...])
        out_ref[s + 1] = logits

        # First-max argmax over the valid vocab (matches torch.argmax), then fetch the
        # predicted token's x-gate pre-activation row via a one-hot MXU matmul.
        ml = jnp.where(valid, logits, jnp.float32(-1e30))
        row_max = jnp.max(ml, axis=1, keepdims=True)               # [B, 1]
        is_max = (ml >= row_max) & valid
        idxf = jnp.min(jnp.where(is_max, colf, jnp.float32(Vp)),
                       axis=1, keepdims=True)                      # [B, 1]
        onehot = (colf == idxf).astype(jnp.float32)                # [B, Vp]
        gx_gen_next = jnp.dot(onehot, emb_ihb_ref[...],
                              preferred_element_type=jnp.float32)  # [B, 4G]
        return h, c, gx_gen_next

    jax.lax.fori_loop(0, steps, dec_body,
                      (h, c, jnp.zeros((B, 4 * G), jnp.float32)),
                      unroll=True)


# ---------------------------------------------------------------------------
# pallas_call wrapper
# ---------------------------------------------------------------------------
def run_seq2seq_kernel(use_tf, enc_gx, dec_gtf, enc_whh, dec_whh, emb_ihb,
                       fc_w, fc_b, trg_vocab):
    src_len, B, _ = enc_gx.shape
    steps = dec_gtf.shape[0]
    trg_len = steps + 1
    Vp = fc_w.shape[1]

    kernel = functools.partial(seq2seq_kernel, trg_vocab)

    return pl.pallas_call(
        kernel,
        out_shape=jax.ShapeDtypeStruct((trg_len, B, Vp), jnp.float32),
        grid_spec=pltpu.PrefetchScalarGridSpec(
            num_scalar_prefetch=1,                              # use_tf -> SMEM
            grid=(1,),                                          # single invocation
            in_specs=[
                pl.BlockSpec(enc_gx.shape, lambda i, tf: (0, 0, 0)),
                pl.BlockSpec(enc_whh.shape, lambda i, tf: (0, 0)),
                pl.BlockSpec(dec_gtf.shape, lambda i, tf: (0, 0, 0)),
                pl.BlockSpec(dec_whh.shape, lambda i, tf: (0, 0)),
                pl.BlockSpec(emb_ihb.shape, lambda i, tf: (0, 0)),
                pl.BlockSpec(fc_w.shape, lambda i, tf: (0, 0)),
                pl.BlockSpec(fc_b.shape, lambda i, tf: (0, 0)),
            ],
            out_specs=pl.BlockSpec((trg_len, B, Vp), lambda i, tf: (0, 0, 0)),
        ),
        compiler_params=pltpu.CompilerParams(
            dimension_semantics=("arbitrary",)),
    )(use_tf, enc_gx, enc_whh, dec_gtf, dec_whh, emb_ihb, fc_w, fc_b)


# ---------------------------------------------------------------------------
# Parameters (PyTorch layout) and one-time kernel-layout preparation.
# ---------------------------------------------------------------------------
def init_params(key, src_vocab, trg_vocab, emb_dim, hid_dim):
    ks = jax.random.split(key, 12)
    s = 0.1
    H, E = hid_dim, emb_dim

    def u(k, shape):
        return jax.random.uniform(k, shape, jnp.float32, -s, s)

    return dict(
        enc_emb=u(ks[0], (src_vocab, E)),
        enc_w_ih=u(ks[1], (4 * H, E)), enc_w_hh=u(ks[2], (4 * H, H)),
        enc_b_ih=u(ks[3], (4 * H,)), enc_b_hh=u(ks[4], (4 * H,)),
        dec_emb=u(ks[5], (trg_vocab, E)),
        dec_w_ih=u(ks[6], (4 * H, E)), dec_w_hh=u(ks[7], (4 * H, H)),
        dec_b_ih=u(ks[8], (4 * H,)), dec_b_hh=u(ks[9], (4 * H,)),
        fc_w=u(ks[10], (trg_vocab, H)), fc_b=u(ks[11], (trg_vocab,)),
    )


def _prep_lstm(w_ih, w_hh, b_ih, b_hh, H, G):
    """Transpose + gate-pad PyTorch LSTM weights: gate k -> lanes [k*G, k*G+H)."""
    E = w_ih.shape[1]
    w_ih_t = jnp.zeros((E, 4 * G), jnp.float32)
    w_hh_t = jnp.zeros((G, 4 * G), jnp.float32)
    b = jnp.zeros((1, 4 * G), jnp.float32)
    bsum = b_ih + b_hh
    for k in range(4):
        w_ih_t = w_ih_t.at[:, k * G:k * G + H].set(w_ih[k * H:(k + 1) * H, :].T)
        w_hh_t = w_hh_t.at[:H, k * G:k * G + H].set(w_hh[k * H:(k + 1) * H, :].T)
        b = b.at[:, k * G:k * G + H].set(bsum[k * H:(k + 1) * H][None, :])
    return w_ih_t, w_hh_t, b


def prepare_kernel_params(params, hid_dim):
    """One-time (outside jit) layout prep: gate padding, transposes, lane padding."""
    H = hid_dim
    G = _round_up(H, LANE)
    V = params["fc_w"].shape[0]
    Vp = _round_up(V, LANE)

    enc_wih, enc_whh, enc_b = _prep_lstm(params["enc_w_ih"], params["enc_w_hh"],
                                         params["enc_b_ih"], params["enc_b_hh"], H, G)
    dec_wih, dec_whh, dec_b = _prep_lstm(params["dec_w_ih"], params["dec_w_hh"],
                                         params["dec_b_ih"], params["dec_b_hh"], H, G)

    # Output projection, hidden padded to G rows and vocab lane-padded to Vp.
    fc_w = jnp.zeros((G, Vp), jnp.float32).at[:H, :V].set(params["fc_w"].T)
    fc_b = jnp.zeros((1, Vp), jnp.float32).at[:, :V].set(params["fc_b"][None, :])

    # Generated-path row table: emb[v] @ W_ih^T + b, rows vocab-padded to Vp.
    emb_ihb = jnp.zeros((Vp, 4 * G), jnp.float32).at[:V, :].set(
        jnp.dot(params["dec_emb"], dec_wih) + dec_b)

    return dict(
        enc_emb=params["enc_emb"], enc_wih=enc_wih, enc_whh=enc_whh, enc_b=enc_b,
        dec_emb=params["dec_emb"], dec_wih=dec_wih, dec_whh=dec_whh, dec_b=dec_b,
        emb_ihb=emb_ihb, fc_w=fc_w, fc_b=fc_b,
    )


def make_teacher_forcing_flags(trg_len, teacher_forcing_ratio):
    # Same host-RNG call sequence as the reference's per-step random.random();
    # the flag drawn at the final loop step is unused, exactly as in the reference.
    flags = [random.random() < teacher_forcing_ratio for _ in range(1, trg_len)]
    # Input at decoder step s (reference t = s+1) is teacher-forced when s == 0
    # (always trg[0]) or when the flag drawn at the previous step is True.
    use_tf = [True] + flags[:trg_len - 2]
    return jnp.asarray(use_tf, dtype=jnp.int32)


# ---------------------------------------------------------------------------
# Forward pass (mirrors Seq2Seq.forward; eval-mode / inference semantics).
# ---------------------------------------------------------------------------
def _seq2seq_forward(src, trg, kp, use_tf, trg_vocab):
    # The reference reads batch_size/trg_len from trg while indexing it time-major;
    # it is only self-consistent for square trg.
    assert trg.shape[0] == trg.shape[1], "reference forward requires square trg"
    batch_size = trg.shape[0]
    V = trg_vocab

    # XLA preprocessing (hoisted out of the serial recurrence): embedding gathers and
    # input-to-hidden gate pre-activations as a few large matmuls.
    # TODO(synk): dropout on embeddings omitted (eval-mode / inference semantics).
    src_emb = jnp.take(kp["enc_emb"], src, axis=0)                 # [src_len, B, E]
    enc_gx = jnp.dot(src_emb, kp["enc_wih"]) + kp["enc_b"]         # [src_len, B, 4G]
    trg_emb = jnp.take(kp["dec_emb"], trg[:-1], axis=0)            # [steps,  B, E]
    dec_gtf = jnp.dot(trg_emb, kp["dec_wih"]) + kp["dec_b"]        # [steps,  B, 4G]

    logits_p = run_seq2seq_kernel(use_tf, enc_gx, dec_gtf,
                                  kp["enc_whh"], kp["dec_whh"], kp["emb_ihb"],
                                  kp["fc_w"], kp["fc_b"], V)       # [trg_len, B, Vp]
    del batch_size
    return logits_p[:, :, :V]                                      # drop lane padding


seq2seq_forward = jax.jit(_seq2seq_forward, static_argnums=(4,))


# ---------------------------------------------------------------------------
if __name__ == "__main__":
    random.seed(0)  # deterministic teacher-forcing decisions

    SRC_VOCAB = 32
    TRG_VOCAB = 32
    EMB_DIM = 16
    HID_DIM = 32
    SRC_LEN = 8
    TRG_LEN = 8
    BATCH = 8  # == TRG_LEN (see layout note)

    key = jax.random.PRNGKey(0)
    kparam, ksrc, ktrg = jax.random.split(key, 3)

    params = init_params(kparam, SRC_VOCAB, TRG_VOCAB, EMB_DIM, HID_DIM)
    kp = prepare_kernel_params(params, HID_DIM)

    src = jax.random.randint(ksrc, (SRC_LEN, BATCH), 0, SRC_VOCAB, jnp.int32)
    trg = jax.random.randint(ktrg, (TRG_LEN, BATCH), 0, TRG_VOCAB, jnp.int32)
    use_tf = make_teacher_forcing_flags(TRG_LEN, 0.5)

    outputs = seq2seq_forward(src, trg, kp, use_tf, TRG_VOCAB)
    outputs = jax.block_until_ready(outputs)

    assert outputs.shape == (TRG_LEN, BATCH, TRG_VOCAB)
    assert bool(jnp.all(jnp.isfinite(outputs)))
    print("KERNEL_OK")
</pallas_src>

<mosaic_0001>
module attributes {stable_mosaic.version = 11 : i64} {
  func.func @seq2seq_kernel(%arg0: i32, %arg1: memref<7xi32, #tpu.memory_space<smem>>, %arg2: memref<8x8x512xf32, #tpu.memory_space<vmem>>, %arg3: memref<128x512xf32, #tpu.memory_space<vmem>>, %arg4: memref<7x8x512xf32, #tpu.memory_space<vmem>>, %arg5: memref<128x512xf32, #tpu.memory_space<vmem>>, %arg6: memref<128x512xf32, #tpu.memory_space<vmem>>, %arg7: memref<128x128xf32, #tpu.memory_space<vmem>>, %arg8: memref<1x128xf32, #tpu.memory_space<vmem>>, %arg9: memref<8x8x128xf32, #tpu.memory_space<vmem>>) attributes {dimension_semantics = [#tpu.dimension_semantics<arbitrary>], iteration_bounds = array<i64: 1>, scalar_prefetch = 1 : i64, scratch_operands = 0 : i64, tpu.core_type = #tpu.core_type<tc>, window_params = [{pipeline_mode = #tpu.pipeline_mode<synchronous>, transform_indices = @transform_0, window_bounds = array<i64: 8, 8, 512>}, {pipeline_mode = #tpu.pipeline_mode<synchronous>, transform_indices = @transform_1, window_bounds = array<i64: 128, 512>}, {pipeline_mode = #tpu.pipeline_mode<synchronous>, transform_indices = @transform_2, window_bounds = array<i64: 7, 8, 512>}, {pipeline_mode = #tpu.pipeline_mode<synchronous>, transform_indices = @transform_3, window_bounds = array<i64: 128, 512>}, {pipeline_mode = #tpu.pipeline_mode<synchronous>, transform_indices = @transform_4, window_bounds = array<i64: 128, 512>}, {pipeline_mode = #tpu.pipeline_mode<synchronous>, transform_indices = @transform_5, window_bounds = array<i64: 128, 128>}, {pipeline_mode = #tpu.pipeline_mode<synchronous>, transform_indices = @transform_6, window_bounds = array<i64: 1, 128>}, {pipeline_mode = #tpu.pipeline_mode<synchronous>, transform_indices = @transform_7, window_bounds = array<i64: 8, 8, 128>}]} {
    %cst = arith.constant 0.000000e+00 : f32
    %0 = vector.broadcast %cst : f32 to vector<8x128xf32>
    %c0_i32 = arith.constant 0 : i32
    %1 = arith.index_cast %c0_i32 : i32 to index
    %c0 = arith.constant 0 : index
    %c0_0 = arith.constant 0 : index
    %2 = vector.load %arg2[%1, %c0, %c0_0] : memref<8x8x512xf32, #tpu.memory_space<vmem>>, vector<1x8x512xf32>
    %3 = vector.shape_cast %2 : vector<1x8x512xf32> to vector<8x512xf32>
    %c0_1 = arith.constant 0 : index
    %c0_2 = arith.constant 0 : index
    %4 = vector.load %arg3[%c0_1, %c0_2] : memref<128x512xf32, #tpu.memory_space<vmem>>, vector<128x512xf32>
    %cst_3 = arith.constant dense<0.000000e+00> : vector<8x512xf32>
    %5 = tpu.matmul %0, %4, %cst_3 {dimension_numbers = #tpu.dot_dimension_numbers<[1], [0], [0], [1], [0, 0, 1, 1], [], []>} : vector<8x128xf32>, vector<128x512xf32>, vector<8x512xf32> -> vector<8x512xf32>
    %6 = arith.addf %3, %5 : vector<8x512xf32>
    %7 = vector.extract_strided_slice %6 {offsets = [0, 0], sizes = [8, 128], strides = [1, 1]} : vector<8x512xf32> to vector<8x128xf32>
    %8 = arith.negf %7 : vector<8x128xf32>
    %9 = math.exp %8 : vector<8x128xf32>
    %cst_4 = arith.constant 1.000000e+00 : f32
    %10 = vector.broadcast %cst_4 : f32 to vector<8x128xf32>
    %11 = arith.addf %10, %9 : vector<8x128xf32>
    %12 = arith.divf %10, %11 : vector<8x128xf32>
    %13 = vector.extract_strided_slice %6 {offsets = [0, 128], sizes = [8, 128], strides = [1, 1]} : vector<8x512xf32> to vector<8x128xf32>
    %14 = arith.negf %13 : vector<8x128xf32>
    %15 = math.exp %14 : vector<8x128xf32>
    %cst_5 = arith.constant 1.000000e+00 : f32
    %16 = vector.broadcast %cst_5 : f32 to vector<8x128xf32>
    %17 = arith.addf %16, %15 : vector<8x128xf32>
    %18 = arith.divf %16, %17 : vector<8x128xf32>
    %19 = vector.extract_strided_slice %6 {offsets = [0, 256], sizes = [8, 128], strides = [1, 1]} : vector<8x512xf32> to vector<8x128xf32>
    %20 = math.tanh %19 : vector<8x128xf32>
    %21 = vector.extract_strided_slice %6 {offsets = [0, 384], sizes = [8, 128], strides = [1, 1]} : vector<8x512xf32> to vector<8x128xf32>
    %22 = arith.negf %21 : vector<8x128xf32>
    %23 = math.exp %22 : vector<8x128xf32>
    %cst_6 = arith.constant 1.000000e+00 : f32
    %24 = vector.broadcast %cst_6 : f32 to vector<8x128xf32>
    %25 = arith.addf %24, %23 : vector<8x128xf32>
    %26 = arith.divf %24, %25 : vector<8x128xf32>
    %27 = arith.mulf %18, %0 : vector<8x128xf32>
    %28 = arith.mulf %12, %20 : vector<8x128xf32>
    %29 = arith.addf %27, %28 : vector<8x128xf32>
    %30 = math.tanh %29 : vector<8x128xf32>
    %31 = arith.mulf %26, %30 : vector<8x128xf32>
    %c1_i32 = arith.constant 1 : i32
    %32 = arith.index_cast %c1_i32 : i32 to index
    %c0_7 = arith.constant 0 : index
    %c0_8 = arith.constant 0 : index
    %33 = vector.load %arg2[%32, %c0_7, %c0_8] : memref<8x8x512xf32, #tpu.memory_space<vmem>>, vector<1x8x512xf32>
    %34 = vector.shape_cast %33 : vector<1x8x512xf32> to vector<8x512xf32>
    %c0_9 = arith.constant 0 : index
    %c0_10 = arith.constant 0 : index
    %35 = vector.load %arg3[%c0_9, %c0_10] : memref<128x512xf32, #tpu.memory_space<vmem>>, vector<128x512xf32>
    %cst_11 = arith.constant dense<0.000000e+00> : vector<8x512xf32>
    %36 = tpu.matmul %31, %35, %cst_11 {dimension_numbers = #tpu.dot_dimension_numbers<[1], [0], [0], [1], [0, 0, 1, 1], [], []>} : vector<8x128xf32>, vector<128x512xf32>, vector<8x512xf32> -> vector<8x512xf32>
    %37 = arith.addf %34, %36 : vector<8x512xf32>
    %38 = vector.extract_strided_slice %37 {offsets = [0, 0], sizes = [8, 128], strides = [1, 1]} : vector<8x512xf32> to vector<8x128xf32>
    %39 = arith.negf %38 : vector<8x128xf32>
    %40 = math.exp %39 : vector<8x128xf32>
    %cst_12 = arith.constant 1.000000e+00 : f32
    %41 = vector.broadcast %cst_12 : f32 to vector<8x128xf32>
    %42 = arith.addf %41, %40 : vector<8x128xf32>
    %43 = arith.divf %41, %42 : vector<8x128xf32>
    %44 = vector.extract_strided_slice %37 {offsets = [0, 128], sizes = [8, 128], strides = [1, 1]} : vector<8x512xf32> to vector<8x128xf32>
    %45 = arith.negf %44 : vector<8x128xf32>
    %46 = math.exp %45 : vector<8x128xf32>
    %cst_13 = arith.constant 1.000000e+00 : f32
    %47 = vector.broadcast %cst_13 : f32 to vector<8x128xf32>
    %48 = arith.addf %47, %46 : vector<8x128xf32>
    %49 = arith.divf %47, %48 : vector<8x128xf32>
    %50 = vector.extract_strided_slice %37 {offsets = [0, 256], sizes = [8, 128], strides = [1, 1]} : vector<8x512xf32> to vector<8x128xf32>
    %51 = math.tanh %50 : vector<8x128xf32>
    %52 = vector.extract_strided_slice %37 {offsets = [0, 384], sizes = [8, 128], strides = [1, 1]} : vector<8x512xf32> to vector<8x128xf32>
    %53 = arith.negf %52 : vector<8x128xf32>
    %54 = math.exp %53 : vector<8x128xf32>
    %cst_14 = arith.constant 1.000000e+00 : f32
    %55 = vector.broadcast %cst_14 : f32 to vector<8x128xf32>
    %56 = arith.addf %55, %54 : vector<8x128xf32>
    %57 = arith.divf %55, %56 : vector<8x128xf32>
    %58 = arith.mulf %49, %29 : vector<8x128xf32>
    %59 = arith.mulf %43, %51 : vector<8x128xf32>
    %60 = arith.addf %58, %59 : vector<8x128xf32>
    %61 = math.tanh %60 : vector<8x128xf32>
    %62 = arith.mulf %57, %61 : vector<8x128xf32>
    %c2_i32 = arith.constant 2 : i32
    %63 = arith.index_cast %c2_i32 : i32 to index
    %c0_15 = arith.constant 0 : index
    %c0_16 = arith.constant 0 : index
    %64 = vector.load %arg2[%63, %c0_15, %c0_16] : memref<8x8x512xf32, #tpu.memory_space<vmem>>, vector<1x8x512xf32>
    %65 = vector.shape_cast %64 : vector<1x8x512xf32> to vector<8x512xf32>
    %c0_17 = arith.constant 0 : index
    %c0_18 = arith.constant 0 : index
    %66 = vector.load %arg3[%c0_17, %c0_18] : memref<128x512xf32, #tpu.memory_space<vmem>>, vector<128x512xf32>
    %cst_19 = arith.constant dense<0.000000e+00> : vector<8x512xf32>
    %67 = tpu.matmul %62, %66, %cst_19 {dimension_numbers = #tpu.dot_dimension_numbers<[1], [0], [0], [1], [0, 0, 1, 1], [], []>} : vector<8x128xf32>, vector<128x512xf32>, vector<8x512xf32> -> vector<8x512xf32>
    %68 = arith.addf %65, %67 : vector<8x512xf32>
    %69 = vector.extract_strided_slice %68 {offsets = [0, 0], sizes = [8, 128], strides = [1, 1]} : vector<8x512xf32> to vector<8x128xf32>
    %70 = arith.negf %69 : vector<8x128xf32>
    %71 = math.exp %70 : vector<8x128xf32>
    %cst_20 = arith.constant 1.000000e+00 : f32
    %72 = vector.broadcast %cst_20 : f32 to vector<8x128xf32>
    %73 = arith.addf %72, %71 : vector<8x128xf32>
    %74 = arith.divf %72, %73 : vector<8x128xf32>
    %75 = vector.extract_strided_slice %68 {offsets = [0, 128], sizes = [8, 128], strides = [1, 1]} : vector<8x512xf32> to vector<8x128xf32>
    %76 = arith.negf %75 : vector<8x128xf32>
    %77 = math.exp %76 : vector<8x128xf32>
    %cst_21 = arith.constant 1.000000e+00 : f32
    %78 = vector.broadcast %cst_21 : f32 to vector<8x128xf32>
    %79 = arith.addf %78, %77 : vector<8x128xf32>
    %80 = arith.divf %78, %79 : vector<8x128xf32>
    %81 = vector.extract_strided_slice %68 {offsets = [0, 256], sizes = [8, 128], strides = [1, 1]} : vector<8x512xf32> to vector<8x128xf32>
    %82 = math.tanh %81 : vector<8x128xf32>
    %83 = vector.extract_strided_slice %68 {offsets = [0, 384], sizes = [8, 128], strides = [1, 1]} : vector<8x512xf32> to vector<8x128xf32>
    %84 = arith.negf %83 : vector<8x128xf32>
    %85 = math.exp %84 : vector<8x128xf32>
    %cst_22 = arith.constant 1.000000e+00 : f32
    %86 = vector.broadcast %cst_22 : f32 to vector<8x128xf32>
    %87 = arith.addf %86, %85 : vector<8x128xf32>
    %88 = arith.divf %86, %87 : vector<8x128xf32>
    %89 = arith.mulf %80, %60 : vector<8x128xf32>
    %90 = arith.mulf %74, %82 : vector<8x128xf32>
    %91 = arith.addf %89, %90 : vector<8x128xf32>
    %92 = math.tanh %91 : vector<8x128xf32>
    %93 = arith.mulf %88, %92 : vector<8x128xf32>
    %c3_i32 = arith.constant 3 : i32
    %94 = arith.index_cast %c3_i32 : i32 to index
    %c0_23 = arith.constant 0 : index
    %c0_24 = arith.constant 0 : index
    %95 = vector.load %arg2[%94, %c0_23, %c0_24] : memref<8x8x512xf32, #tpu.memory_space<vmem>>, vector<1x8x512xf32>
    %96 = vector.shape_cast %95 : vector<1x8x512xf32> to vector<8x512xf32>
    %c0_25 = arith.constant 0 : index
    %c0_26 = arith.constant 0 : index
    %97 = vector.load %arg3[%c0_25, %c0_26] : memref<128x512xf32, #tpu.memory_space<vmem>>, vector<128x512xf32>
    %cst_27 = arith.constant dense<0.000000e+00> : vector<8x512xf32>
    %98 = tpu.matmul %93, %97, %cst_27 {dimension_numbers = #tpu.dot_dimension_numbers<[1], [0], [0], [1], [0, 0, 1, 1], [], []>} : vector<8x128xf32>, vector<128x512xf32>, vector<8x512xf32> -> vector<8x512xf32>
    %99 = arith.addf %96, %98 : vector<8x512xf32>
    %100 = vector.extract_strided_slice %99 {offsets = [0, 0], sizes = [8, 128], strides = [1, 1]} : vector<8x512xf32> to vector<8x128xf32>
    %101 = arith.negf %100 : vector<8x128xf32>
    %102 = math.exp %101 : vector<8x128xf32>
    %cst_28 = arith.constant 1.000000e+00 : f32
    %103 = vector.broadcast %cst_28 : f32 to vector<8x128xf32>
    %104 = arith.addf %103, %102 : vector<8x128xf32>
    %105 = arith.divf %103, %104 : vector<8x128xf32>
    %106 = vector.extract_strided_slice %99 {offsets = [0, 128], sizes = [8, 128], strides = [1, 1]} : vector<8x512xf32> to vector<8x128xf32>
    %107 = arith.negf %106 : vector<8x128xf32>
    %108 = math.exp %107 : vector<8x128xf32>
    %cst_29 = arith.constant 1.000000e+00 : f32
    %109 = vector.broadcast %cst_29 : f32 to vector<8x128xf32>
    %110 = arith.addf %109, %108 : vector<8x128xf32>
    %111 = arith.divf %109, %110 : vector<8x128xf32>
    %112 = vector.extract_strided_slice %99 {offsets = [0, 256], sizes = [8, 128], strides = [1, 1]} : vector<8x512xf32> to vector<8x128xf32>
    %113 = math.tanh %112 : vector<8x128xf32>
    %114 = vector.extract_strided_slice %99 {offsets = [0, 384], sizes = [8, 128], strides = [1, 1]} : vector<8x512xf32> to vector<8x128xf32>
    %115 = arith.negf %114 : vector<8x128xf32>
    %116 = math.exp %115 : vector<8x128xf32>
    %cst_30 = arith.constant 1.000000e+00 : f32
    %117 = vector.broadcast %cst_30 : f32 to vector<8x128xf32>
    %118 = arith.addf %117, %116 : vector<8x128xf32>
    %119 = arith.divf %117, %118 : vector<8x128xf32>
    %120 = arith.mulf %111, %91 : vector<8x128xf32>
    %121 = arith.mulf %105, %113 : vector<8x128xf32>
    %122 = arith.addf %120, %121 : vector<8x128xf32>
    %123 = math.tanh %122 : vector<8x128xf32>
    %124 = arith.mulf %119, %123 : vector<8x128xf32>
    %c4_i32 = arith.constant 4 : i32
    %125 = arith.index_cast %c4_i32 : i32 to index
    %c0_31 = arith.constant 0 : index
    %c0_32 = arith.constant 0 : index
    %126 = vector.load %arg2[%125, %c0_31, %c0_32] : memref<8x8x512xf32, #tpu.memory_space<vmem>>, vector<1x8x512xf32>
    %127 = vector.shape_cast %126 : vector<1x8x512xf32> to vector<8x512xf32>
    %c0_33 = arith.constant 0 : index
    %c0_34 = arith.constant 0 : index
    %128 = vector.load %arg3[%c0_33, %c0_34] : memref<128x512xf32, #tpu.memory_space<vmem>>, vector<128x512xf32>
    %cst_35 = arith.constant dense<0.000000e+00> : vector<8x512xf32>
    %129 = tpu.matmul %124, %128, %cst_35 {dimension_numbers = #tpu.dot_dimension_numbers<[1], [0], [0], [1], [0, 0, 1, 1], [], []>} : vector<8x128xf32>, vector<128x512xf32>, vector<8x512xf32> -> vector<8x512xf32>
    %130 = arith.addf %127, %129 : vector<8x512xf32>
    %131 = vector.extract_strided_slice %130 {offsets = [0, 0], sizes = [8, 128], strides = [1, 1]} : vector<8x512xf32> to vector<8x128xf32>
    %132 = arith.negf %131 : vector<8x128xf32>
    %133 = math.exp %132 : vector<8x128xf32>
    %cst_36 = arith.constant 1.000000e+00 : f32
    %134 = vector.broadcast %cst_36 : f32 to vector<8x128xf32>
    %135 = arith.addf %134, %133 : vector<8x128xf32>
    %136 = arith.divf %134, %135 : vector<8x128xf32>
    %137 = vector.extract_strided_slice %130 {offsets = [0, 128], sizes = [8, 128], strides = [1, 1]} : vector<8x512xf32> to vector<8x128xf32>
    %138 = arith.negf %137 : vector<8x128xf32>
    %139 = math.exp %138 : vector<8x128xf32>
    %cst_37 = arith.constant 1.000000e+00 : f32
    %140 = vector.broadcast %cst_37 : f32 to vector<8x128xf32>
    %141 = arith.addf %140, %139 : vector<8x128xf32>
    %142 = arith.divf %140, %141 : vector<8x128xf32>
    %143 = vector.extract_strided_slice %130 {offsets = [0, 256], sizes = [8, 128], strides = [1, 1]} : vector<8x512xf32> to vector<8x128xf32>
    %144 = math.tanh %143 : vector<8x128xf32>
    %145 = vector.extract_strided_slice %130 {offsets = [0, 384], sizes = [8, 128], strides = [1, 1]} : vector<8x512xf32> to vector<8x128xf32>
    %146 = arith.negf %145 : vector<8x128xf32>
    %147 = math.exp %146 : vector<8x128xf32>
    %cst_38 = arith.constant 1.000000e+00 : f32
    %148 = vector.broadcast %cst_38 : f32 to vector<8x128xf32>
    %149 = arith.addf %148, %147 : vector<8x128xf32>
    %150 = arith.divf %148, %149 : vector<8x128xf32>
    %151 = arith.mulf %142, %122 : vector<8x128xf32>
    %152 = arith.mulf %136, %144 : vector<8x128xf32>
    %153 = arith.addf %151, %152 : vector<8x128xf32>
    %154 = math.tanh %153 : vector<8x128xf32>
    %155 = arith.mulf %150, %154 : vector<8x128xf32>
    %c5_i32 = arith.constant 5 : i32
    %156 = arith.index_cast %c5_i32 : i32 to index
    %c0_39 = arith.constant 0 : index
    %c0_40 = arith.constant 0 : index
    %157 = vector.load %arg2[%156, %c0_39, %c0_40] : memref<8x8x512xf32, #tpu.memory_space<vmem>>, vector<1x8x512xf32>
    %158 = vector.shape_cast %157 : vector<1x8x512xf32> to vector<8x512xf32>
    %c0_41 = arith.constant 0 : index
    %c0_42 = arith.constant 0 : index
    %159 = vector.load %arg3[%c0_41, %c0_42] : memref<128x512xf32, #tpu.memory_space<vmem>>, vector<128x512xf32>
    %cst_43 = arith.constant dense<0.000000e+00> : vector<8x512xf32>
    %160 = tpu.matmul %155, %159, %cst_43 {dimension_numbers = #tpu.dot_dimension_numbers<[1], [0], [0], [1], [0, 0, 1, 1], [], []>} : vector<8x128xf32>, vector<128x512xf32>, vector<8x512xf32> -> vector<8x512xf32>
    %161 = arith.addf %158, %160 : vector<8x512xf32>
    %162 = vector.extract_strided_slice %161 {offsets = [0, 0], sizes = [8, 128], strides = [1, 1]} : vector<8x512xf32> to vector<8x128xf32>
    %163 = arith.negf %162 : vector<8x128xf32>
    %164 = math.exp %163 : vector<8x128xf32>
    %cst_44 = arith.constant 1.000000e+00 : f32
    %165 = vector.broadcast %cst_44 : f32 to vector<8x128xf32>
    %166 = arith.addf %165, %164 : vector<8x128xf32>
    %167 = arith.divf %165, %166 : vector<8x128xf32>
    %168 = vector.extract_strided_slice %161 {offsets = [0, 128], sizes = [8, 128], strides = [1, 1]} : vector<8x512xf32> to vector<8x128xf32>
    %169 = arith.negf %168 : vector<8x128xf32>
    %170 = math.exp %169 : vector<8x128xf32>
    %cst_45 = arith.constant 1.000000e+00 : f32
    %171 = vector.broadcast %cst_45 : f32 to vector<8x128xf32>
    %172 = arith.addf %171, %170 : vector<8x128xf32>
    %173 = arith.divf %171, %172 : vector<8x128xf32>
    %174 = vector.extract_strided_slice %161 {offsets = [0, 256], sizes = [8, 128], strides = [1, 1]} : vector<8x512xf32> to vector<8x128xf32>
    %175 = math.tanh %174 : vector<8x128xf32>
    %176 = vector.extract_strided_slice %161 {offsets = [0, 384], sizes = [8, 128], strides = [1, 1]} : vector<8x512xf32> to vector<8x128xf32>
    %177 = arith.negf %176 : vector<8x128xf32>
    %178 = math.exp %177 : vector<8x128xf32>
    %cst_46 = arith.constant 1.000000e+00 : f32
    %179 = vector.broadcast %cst_46 : f32 to vector<8x128xf32>
    %180 = arith.addf %179, %178 : vector<8x128xf32>
    %181 = arith.divf %179, %180 : vector<8x128xf32>
    %182 = arith.mulf %173, %153 : vector<8x128xf32>
    %183 = arith.mulf %167, %175 : vector<8x128xf32>
    %184 = arith.addf %182, %183 : vector<8x128xf32>
    %185 = math.tanh %184 : vector<8x128xf32>
    %186 = arith.mulf %181, %185 : vector<8x128xf32>
    %c6_i32 = arith.constant 6 : i32
    %187 = arith.index_cast %c6_i32 : i32 to index
    %c0_47 = arith.constant 0 : index
    %c0_48 = arith.constant 0 : index
    %188 = vector.load %arg2[%187, %c0_47, %c0_48] : memref<8x8x512xf32, #tpu.memory_space<vmem>>, vector<1x8x512xf32>
    %189 = vector.shape_cast %188 : vector<1x8x512xf32> to vector<8x512xf32>
    %c0_49 = arith.constant 0 : index
    %c0_50 = arith.constant 0 : index
    %190 = vector.load %arg3[%c0_49, %c0_50] : memref<128x512xf32, #tpu.memory_space<vmem>>, vector<128x512xf32>
    %cst_51 = arith.constant dense<0.000000e+00> : vector<8x512xf32>
    %191 = tpu.matmul %186, %190, %cst_51 {dimension_numbers = #tpu.dot_dimension_numbers<[1], [0], [0], [1], [0, 0, 1, 1], [], []>} : vector<8x128xf32>, vector<128x512xf32>, vector<8x512xf32> -> vector<8x512xf32>
    %192 = arith.addf %189, %191 : vector<8x512xf32>
    %193 = vector.extract_strided_slice %192 {offsets = [0, 0], sizes = [8, 128], strides = [1, 1]} : vector<8x512xf32> to vector<8x128xf32>
    %194 = arith.negf %193 : vector<8x128xf32>
    %195 = math.exp %194 : vector<8x128xf32>
    %cst_52 = arith.constant 1.000000e+00 : f32
    %196 = vector.broadcast %cst_52 : f32 to vector<8x128xf32>
    %197 = arith.addf %196, %195 : vector<8x128xf32>
    %198 = arith.divf %196, %197 : vector<8x128xf32>
    %199 = vector.extract_strided_slice %192 {offsets = [0, 128], sizes = [8, 128], strides = [1, 1]} : vector<8x512xf32> to vector<8x128xf32>
    %200 = arith.negf %199 : vector<8x128xf32>
    %201 = math.exp %200 : vector<8x128xf32>
    %cst_53 = arith.constant 1.000000e+00 : f32
    %202 = vector.broadcast %cst_53 : f32 to vector<8x128xf32>
    %203 = arith.addf %202, %201 : vector<8x128xf32>
    %204 = arith.divf %202, %203 : vector<8x128xf32>
    %205 = vector.extract_strided_slice %192 {offsets = [0, 256], sizes = [8, 128], strides = [1, 1]} : vector<8x512xf32> to vector<8x128xf32>
    %206 = math.tanh %205 : vector<8x128xf32>
    %207 = vector.extract_strided_slice %192 {offsets = [0, 384], sizes = [8, 128], strides = [1, 1]} : vector<8x512xf32> to vector<8x128xf32>
    %208 = arith.negf %207 : vector<8x128xf32>
    %209 = math.exp %208 : vector<8x128xf32>
    %cst_54 = arith.constant 1.000000e+00 : f32
    %210 = vector.broadcast %cst_54 : f32 to vector<8x128xf32>
    %211 = arith.addf %210, %209 : vector<8x128xf32>
    %212 = arith.divf %210, %211 : vector<8x128xf32>
    %213 = arith.mulf %204, %184 : vector<8x128xf32>
    %214 = arith.mulf %198, %206 : vector<8x128xf32>
    %215 = arith.addf %213, %214 : vector<8x128xf32>
    %216 = math.tanh %215 : vector<8x128xf32>
    %217 = arith.mulf %212, %216 : vector<8x128xf32>
    %c7_i32 = arith.constant 7 : i32
    %218 = arith.index_cast %c7_i32 : i32 to index
    %c0_55 = arith.constant 0 : index
    %c0_56 = arith.constant 0 : index
    %219 = vector.load %arg2[%218, %c0_55, %c0_56] : memref<8x8x512xf32, #tpu.memory_space<vmem>>, vector<1x8x512xf32>
    %220 = vector.shape_cast %219 : vector<1x8x512xf32> to vector<8x512xf32>
    %c0_57 = arith.constant 0 : index
    %c0_58 = arith.constant 0 : index
    %221 = vector.load %arg3[%c0_57, %c0_58] : memref<128x512xf32, #tpu.memory_space<vmem>>, vector<128x512xf32>
    %cst_59 = arith.constant dense<0.000000e+00> : vector<8x512xf32>
    %222 = tpu.matmul %217, %221, %cst_59 {dimension_numbers = #tpu.dot_dimension_numbers<[1], [0], [0], [1], [0, 0, 1, 1], [], []>} : vector<8x128xf32>, vector<128x512xf32>, vector<8x512xf32> -> vector<8x512xf32>
    %223 = arith.addf %220, %222 : vector<8x512xf32>
    %224 = vector.extract_strided_slice %223 {offsets = [0, 0], sizes = [8, 128], strides = [1, 1]} : vector<8x512xf32> to vector<8x128xf32>
    %225 = arith.negf %224 : vector<8x128xf32>
    %226 = math.exp %225 : vector<8x128xf32>
    %cst_60 = arith.constant 1.000000e+00 : f32
    %227 = vector.broadcast %cst_60 : f32 to vector<8x128xf32>
    %228 = arith.addf %227, %226 : vector<8x128xf32>
    %229 = arith.divf %227, %228 : vector<8x128xf32>
    %230 = vector.extract_strided_slice %223 {offsets = [0, 128], sizes = [8, 128], strides = [1, 1]} : vector<8x512xf32> to vector<8x128xf32>
    %231 = arith.negf %230 : vector<8x128xf32>
    %232 = math.exp %231 : vector<8x128xf32>
    %cst_61 = arith.constant 1.000000e+00 : f32
    %233 = vector.broadcast %cst_61 : f32 to vector<8x128xf32>
    %234 = arith.addf %233, %232 : vector<8x128xf32>
    %235 = arith.divf %233, %234 : vector<8x128xf32>
    %236 = vector.extract_strided_slice %223 {offsets = [0, 256], sizes = [8, 128], strides = [1, 1]} : vector<8x512xf32> to vector<8x128xf32>
    %237 = math.tanh %236 : vector<8x128xf32>
    %238 = vector.extract_strided_slice %223 {offsets = [0, 384], sizes = [8, 128], strides = [1, 1]} : vector<8x512xf32> to vector<8x128xf32>
    %239 = arith.negf %238 : vector<8x128xf32>
    %240 = math.exp %239 : vector<8x128xf32>
    %cst_62 = arith.constant 1.000000e+00 : f32
    %241 = vector.broadcast %cst_62 : f32 to vector<8x128xf32>
    %242 = arith.addf %241, %240 : vector<8x128xf32>
    %243 = arith.divf %241, %242 : vector<8x128xf32>
    %244 = arith.mulf %235, %215 : vector<8x128xf32>
    %245 = arith.mulf %229, %237 : vector<8x128xf32>
    %246 = arith.addf %244, %245 : vector<8x128xf32>
    %247 = math.tanh %246 : vector<8x128xf32>
    %248 = arith.mulf %243, %247 : vector<8x128xf32>
    %c8_i32 = arith.constant 8 : i32
    %cst_63 = arith.constant 0.000000e+00 : f32
    %249 = vector.broadcast %cst_63 : f32 to vector<8x128xf32>
    %c0_64 = arith.constant 0 : index
    %c0_65 = arith.constant 0 : index
    %c0_66 = arith.constant 0 : index
    %250 = vector.load %arg9[%c0_64, %c0_65, %c0_66] : memref<8x8x128xf32, #tpu.memory_space<vmem>>, vector<1x8x128xf32>
    %251 = vector.shape_cast %250 : vector<1x8x128xf32> to vector<8x128xf32>
    %252 = vector.shape_cast %249 : vector<8x128xf32> to vector<1x8x128xf32>
    tpu.vector_store %arg9[%c0_64, %c0_65, %c0_66], %252 {strides = array<i32>} : memref<8x8x128xf32, #tpu.memory_space<vmem>>, vector<1x8x128xf32>,
    %253 = tpu.iota {dimensions = array<i32: 1>} : vector<8x128xi32>
    %254 = arith.sitofp %253 : vector<8x128xi32> to vector<8x128xf32>
    %c32_i32 = arith.constant 32 : i32
    %255 = vector.broadcast %c32_i32 : i32 to vector<8x128xi32>
    %256 = arith.cmpi slt, %253, %255 : vector<8x128xi32>
    %cst_67 = arith.constant 0.000000e+00 : f32
    %257 = vector.broadcast %cst_67 : f32 to vector<8x512xf32>
    %c0_i32_68 = arith.constant 0 : i32
    %258 = arith.index_cast %c0_i32_68 : i32 to index
    %259 = memref.load %arg1[%258] : memref<7xi32, #tpu.memory_space<smem>>
    %c0_i32_69 = arith.constant 0 : i32
    %260 = arith.cmpi ne, %259, %c0_i32_69 : i32
    %261 = arith.extui %260 : i1 to i32
    %262 = arith.sitofp %261 : i32 to f32
    %263 = arith.index_cast %c0_i32_68 : i32 to index
    %c0_70 = arith.constant 0 : index
    %c0_71 = arith.constant 0 : index
    %264 = vector.load %arg4[%263, %c0_70, %c0_71] : memref<7x8x512xf32, #tpu.memory_space<vmem>>, vector<1x8x512xf32>
    %265 = vector.shape_cast %264 : vector<1x8x512xf32> to vector<8x512xf32>
    %266 = vector.broadcast %262 : f32 to vector<8x512xf32>
    %267 = arith.mulf %265, %266 : vector<8x512xf32>
    %cst_72 = arith.constant 1.000000e+00 : f32
    %268 = arith.subf %cst_72, %262 : f32
    %269 = vector.broadcast %268 : f32 to vector<8x512xf32>
    %270 = arith.mulf %257, %269 : vector<8x512xf32>
    %271 = arith.addf %267, %270 : vector<8x512xf32>
    %c0_73 = arith.constant 0 : index
    %c0_74 = arith.constant 0 : index
    %272 = vector.load %arg5[%c0_73, %c0_74] : memref<128x512xf32, #tpu.memory_space<vmem>>, vector<128x512xf32>
    %cst_75 = arith.constant dense<0.000000e+00> : vector<8x512xf32>
    %273 = tpu.matmul %248, %272, %cst_75 {dimension_numbers = #tpu.dot_dimension_numbers<[1], [0], [0], [1], [0, 0, 1, 1], [], []>} : vector<8x128xf32>, vector<128x512xf32>, vector<8x512xf32> -> vector<8x512xf32>
    %274 = arith.addf %271, %273 : vector<8x512xf32>
    %275 = vector.extract_strided_slice %274 {offsets = [0, 0], sizes = [8, 128], strides = [1, 1]} : vector<8x512xf32> to vector<8x128xf32>
    %276 = arith.negf %275 : vector<8x128xf32>
    %277 = math.exp %276 : vector<8x128xf32>
    %cst_76 = arith.constant 1.000000e+00 : f32
    %278 = vector.broadcast %cst_76 : f32 to vector<8x128xf32>
    %279 = arith.addf %278, %277 : vector<8x128xf32>
    %280 = arith.divf %278, %279 : vector<8x128xf32>
    %281 = vector.extract_strided_slice %274 {offsets = [0, 128], sizes = [8, 128], strides = [1, 1]} : vector<8x512xf32> to vector<8x128xf32>
    %282 = arith.negf %281 : vector<8x128xf32>
    %283 = math.exp %282 : vector<8x128xf32>
    %cst_77 = arith.constant 1.000000e+00 : f32
    %284 = vector.broadcast %cst_77 : f32 to vector<8x128xf32>
    %285 = arith.addf %284, %283 : vector<8x128xf32>
    %286 = arith.divf %284, %285 : vector<8x128xf32>
    %287 = vector.extract_strided_slice %274 {offsets = [0, 256], sizes = [8, 128], strides = [1, 1]} : vector<8x512xf32> to vector<8x128xf32>
    %288 = math.tanh %287 : vector<8x128xf32>
    %289 = vector.extract_strided_slice %274 {offsets = [0, 384], sizes = [8, 128], strides = [1, 1]} : vector<8x512xf32> to vector<8x128xf32>
    %290 = arith.negf %289 : vector<8x128xf32>
    %291 = math.exp %290 : vector<8x128xf32>
    %cst_78 = arith.constant 1.000000e+00 : f32
    %292 = vector.broadcast %cst_78 : f32 to vector<8x128xf32>
    %293 = arith.addf %292, %291 : vector<8x128xf32>
    %294 = arith.divf %292, %293 : vector<8x128xf32>
    %295 = arith.mulf %286, %246 : vector<8x128xf32>
    %296 = arith.mulf %280, %288 : vector<8x128xf32>
    %297 = arith.addf %295, %296 : vector<8x128xf32>
    %298 = math.tanh %297 : vector<8x128xf32>
    %299 = arith.mulf %294, %298 : vector<8x128xf32>
    %c0_79 = arith.constant 0 : index
    %c0_80 = arith.constant 0 : index
    %300 = vector.load %arg7[%c0_79, %c0_80] : memref<128x128xf32, #tpu.memory_space<vmem>>, vector<128x128xf32>
    %cst_81 = arith.constant dense<0.000000e+00> : vector<8x128xf32>
    %301 = tpu.matmul %299, %300, %cst_81 {dimension_numbers = #tpu.dot_dimension_numbers<[1], [0], [0], [1], [0, 0, 1, 1], [], []>} : vector<8x128xf32>, vector<128x128xf32>, vector<8x128xf32> -> vector<8x128xf32>
    %c0_82 = arith.constant 0 : index
    %c0_83 = arith.constant 0 : index
    %302 = vector.load %arg8[%c0_82, %c0_83] : memref<1x128xf32, #tpu.memory_space<vmem>>, vector<1x128xf32>
    %303 = vector.broadcast %302 : vector<1x128xf32> to vector<8x128xf32>
    %304 = arith.addf %301, %303 : vector<8x128xf32>
    %c1_i32_84 = arith.constant 1 : i32
    %305 = arith.addi %c0_i32_68, %c1_i32_84 : i32
    %306 = arith.index_cast %305 : i32 to index
    %c0_85 = arith.constant 0 : index
    %c0_86 = arith.constant 0 : index
    %307 = vector.load %arg9[%306, %c0_85, %c0_86] : memref<8x8x128xf32, #tpu.memory_space<vmem>>, vector<1x8x128xf32>
    %308 = vector.shape_cast %307 : vector<1x8x128xf32> to vector<8x128xf32>
    %309 = vector.shape_cast %304 : vector<8x128xf32> to vector<1x8x128xf32>
    tpu.vector_store %arg9[%306, %c0_85, %c0_86], %309 {strides = array<i32>} : memref<8x8x128xf32, #tpu.memory_space<vmem>>, vector<1x8x128xf32>,
    %cst_87 = arith.constant -1.000000e+30 : f32
    %310 = vector.broadcast %cst_87 : f32 to vector<8x128xf32>
    %311 = arith.select %256, %304, %310 : vector<8x128xi1>, vector<8x128xf32>
    %cst_88 = arith.constant dense<0xFF800000> : vector<8xf32>
    %312 = vector.multi_reduction <maximumf>, %311, %cst_88 [1] : vector<8x128xf32> to vector<8xf32>
    %313 = vector.shape_cast %312 : vector<8xf32> to vector<8x1xf32>
    %314 = vector.broadcast %313 : vector<8x1xf32> to vector<8x128xf32>
    %315 = arith.cmpf oge, %311, %314 : vector<8x128xf32>
    %316 = arith.andi %315, %256 : vector<8x128xi1>
    %cst_89 = arith.constant 1.280000e+02 : f32
    %317 = vector.broadcast %cst_89 : f32 to vector<8x128xf32>
    %318 = arith.select %316, %254, %317 : vector<8x128xi1>, vector<8x128xf32>
    %cst_90 = arith.constant dense<0x7F800000> : vector<8xf32>
    %319 = vector.multi_reduction <minimumf>, %318, %cst_90 [1] : vector<8x128xf32> to vector<8xf32>
    %320 = vector.shape_cast %319 : vector<8xf32> to vector<8x1xf32>
    %321 = vector.broadcast %320 : vector<8x1xf32> to vector<8x128xf32>
    %322 = arith.cmpf oeq, %254, %321 : vector<8x128xf32>
    %323 = arith.extui %322 : vector<8x128xi1> to vector<8x128xi32>
    %324 = arith.sitofp %323 : vector<8x128xi32> to vector<8x128xf32>
    %c0_91 = arith.constant 0 : index
    %c0_92 = arith.constant 0 : index
    %325 = vector.load %arg6[%c0_91, %c0_92] : memref<128x512xf32, #tpu.memory_space<vmem>>, vector<128x512xf32>
    %cst_93 = arith.constant dense<0.000000e+00> : vector<8x512xf32>
    %326 = tpu.matmul %324, %325, %cst_93 {dimension_numbers = #tpu.dot_dimension_numbers<[1], [0], [0], [1], [0, 0, 1, 1], [], []>} : vector<8x128xf32>, vector<128x512xf32>, vector<8x512xf32> -> vector<8x512xf32>
    %c1_i32_94 = arith.constant 1 : i32
    %327 = arith.index_cast %c1_i32_94 : i32 to index
    %328 = memref.load %arg1[%327] : memref<7xi32, #tpu.memory_space<smem>>
    %c0_i32_95 = arith.constant 0 : i32
    %329 = arith.cmpi ne, %328, %c0_i32_95 : i32
    %330 = arith.extui %329 : i1 to i32
    %331 = arith.sitofp %330 : i32 to f32
    %332 = arith.index_cast %c1_i32_94 : i32 to index
    %c0_96 = arith.constant 0 : index
    %c0_97 = arith.constant 0 : index
    %333 = vector.load %arg4[%332, %c0_96, %c0_97] : memref<7x8x512xf32, #tpu.memory_space<vmem>>, vector<1x8x512xf32>
    %334 = vector.shape_cast %333 : vector<1x8x512xf32> to vector<8x512xf32>
    %335 = vector.broadcast %331 : f32 to vector<8x512xf32>
    %336 = arith.mulf %334, %335 : vector<8x512xf32>
    %cst_98 = arith.constant 1.000000e+00 : f32
    %337 = arith.subf %cst_98, %331 : f32
    %338 = vector.broadcast %337 : f32 to vector<8x512xf32>
    %339 = arith.mulf %326, %338 : vector<8x512xf32>
    %340 = arith.addf %336, %339 : vector<8x512xf32>
    %c0_99 = arith.constant 0 : index
    %c0_100 = arith.constant 0 : index
    %341 = vector.load %arg5[%c0_99, %c0_100] : memref<128x512xf32, #tpu.memory_space<vmem>>, vector<128x512xf32>
    %cst_101 = arith.constant dense<0.000000e+00> : vector<8x512xf32>
    %342 = tpu.matmul %299, %341, %cst_101 {dimension_numbers = #tpu.dot_dimension_numbers<[1], [0], [0], [1], [0, 0, 1, 1], [], []>} : vector<8x128xf32>, vector<128x512xf32>, vector<8x512xf32> -> vector<8x512xf32>
    %343 = arith.addf %340, %342 : vector<8x512xf32>
    %344 = vector.extract_strided_slice %343 {offsets = [0, 0], sizes = [8, 128], strides = [1, 1]} : vector<8x512xf32> to vector<8x128xf32>
    %345 = arith.negf %344 : vector<8x128xf32>
    %346 = math.exp %345 : vector<8x128xf32>
    %cst_102 = arith.constant 1.000000e+00 : f32
    %347 = vector.broadcast %cst_102 : f32 to vector<8x128xf32>
    %348 = arith.addf %347, %346 : vector<8x128xf32>
    %349 = arith.divf %347, %348 : vector<8x128xf32>
    %350 = vector.extract_strided_slice %343 {offsets = [0, 128], sizes = [8, 128], strides = [1, 1]} : vector<8x512xf32> to vector<8x128xf32>
    %351 = arith.negf %350 : vector<8x128xf32>
    %352 = math.exp %351 : vector<8x128xf32>
    %cst_103 = arith.constant 1.000000e+00 : f32
    %353 = vector.broadcast %cst_103 : f32 to vector<8x128xf32>
    %354 = arith.addf %353, %352 : vector<8x128xf32>
    %355 = arith.divf %353, %354 : vector<8x128xf32>
    %356 = vector.extract_strided_slice %343 {offsets = [0, 256], sizes = [8, 128], strides = [1, 1]} : vector<8x512xf32> to vector<8x128xf32>
    %357 = math.tanh %356 : vector<8x128xf32>
    %358 = vector.extract_strided_slice %343 {offsets = [0, 384], sizes = [8, 128], strides = [1, 1]} : vector<8x512xf32> to vector<8x128xf32>
    %359 = arith.negf %358 : vector<8x128xf32>
    %360 = math.exp %359 : vector<8x128xf32>
    %cst_104 = arith.constant 1.000000e+00 : f32
    %361 = vector.broadcast %cst_104 : f32 to vector<8x128xf32>
    %362 = arith.addf %361, %360 : vector<8x128xf32>
    %363 = arith.divf %361, %362 : vector<8x128xf32>
    %364 = arith.mulf %355, %297 : vector<8x128xf32>
    %365 = arith.mulf %349, %357 : vector<8x128xf32>
    %366 = arith.addf %364, %365 : vector<8x128xf32>
    %367 = math.tanh %366 : vector<8x128xf32>
    %368 = arith.mulf %363, %367 : vector<8x128xf32>
    %c0_105 = arith.constant 0 : index
    %c0_106 = arith.constant 0 : index
    %369 = vector.load %arg7[%c0_105, %c0_106] : memref<128x128xf32, #tpu.memory_space<vmem>>, vector<128x128xf32>
    %cst_107 = arith.constant dense<0.000000e+00> : vector<8x128xf32>
    %370 = tpu.matmul %368, %369, %cst_107 {dimension_numbers = #tpu.dot_dimension_numbers<[1], [0], [0], [1], [0, 0, 1, 1], [], []>} : vector<8x128xf32>, vector<128x128xf32>, vector<8x128xf32> -> vector<8x128xf32>
    %c0_108 = arith.constant 0 : index
    %c0_109 = arith.constant 0 : index
    %371 = vector.load %arg8[%c0_108, %c0_109] : memref<1x128xf32, #tpu.memory_space<vmem>>, vector<1x128xf32>
    %372 = vector.broadcast %371 : vector<1x128xf32> to vector<8x128xf32>
    %373 = arith.addf %370, %372 : vector<8x128xf32>
    %c1_i32_110 = arith.constant 1 : i32
    %374 = arith.addi %c1_i32_94, %c1_i32_110 : i32
    %375 = arith.index_cast %374 : i32 to index
    %c0_111 = arith.constant 0 : index
    %c0_112 = arith.constant 0 : index
    %376 = vector.load %arg9[%375, %c0_111, %c0_112] : memref<8x8x128xf32, #tpu.memory_space<vmem>>, vector<1x8x128xf32>
    %377 = vector.shape_cast %376 : vector<1x8x128xf32> to vector<8x128xf32>
    %378 = vector.shape_cast %373 : vector<8x128xf32> to vector<1x8x128xf32>
    tpu.vector_store %arg9[%375, %c0_111, %c0_112], %378 {strides = array<i32>} : memref<8x8x128xf32, #tpu.memory_space<vmem>>, vector<1x8x128xf32>,
    %cst_113 = arith.constant -1.000000e+30 : f32
    %379 = vector.broadcast %cst_113 : f32 to vector<8x128xf32>
    %380 = arith.select %256, %373, %379 : vector<8x128xi1>, vector<8x128xf32>
    %cst_114 = arith.constant dense<0xFF800000> : vector<8xf32>
    %381 = vector.multi_reduction <maximumf>, %380, %cst_114 [1] : vector<8x128xf32> to vector<8xf32>
    %382 = vector.shape_cast %381 : vector<8xf32> to vector<8x1xf32>
    %383 = vector.broadcast %382 : vector<8x1xf32> to vector<8x128xf32>
    %384 = arith.cmpf oge, %380, %383 : vector<8x128xf32>
    %385 = arith.andi %384, %256 : vector<8x128xi1>
    %cst_115 = arith.constant 1.280000e+02 : f32
    %386 = vector.broadcast %cst_115 : f32 to vector<8x128xf32>
    %387 = arith.select %385, %254, %386 : vector<8x128xi1>, vector<8x128xf32>
    %cst_116 = arith.constant dense<0x7F800000> : vector<8xf32>
    %388 = vector.multi_reduction <minimumf>, %387, %cst_116 [1] : vector<8x128xf32> to vector<8xf32>
    %389 = vector.shape_cast %388 : vector<8xf32> to vector<8x1xf32>
    %390 = vector.broadcast %389 : vector<8x1xf32> to vector<8x128xf32>
    %391 = arith.cmpf oeq, %254, %390 : vector<8x128xf32>
    %392 = arith.extui %391 : vector<8x128xi1> to vector<8x128xi32>
    %393 = arith.sitofp %392 : vector<8x128xi32> to vector<8x128xf32>
    %c0_117 = arith.constant 0 : index
    %c0_118 = arith.constant 0 : index
    %394 = vector.load %arg6[%c0_117, %c0_118] : memref<128x512xf32, #tpu.memory_space<vmem>>, vector<128x512xf32>
    %cst_119 = arith.constant dense<0.000000e+00> : vector<8x512xf32>
    %395 = tpu.matmul %393, %394, %cst_119 {dimension_numbers = #tpu.dot_dimension_numbers<[1], [0], [0], [1], [0, 0, 1, 1], [], []>} : vector<8x128xf32>, vector<128x512xf32>, vector<8x512xf32> -> vector<8x512xf32>
    %c2_i32_120 = arith.constant 2 : i32
    %396 = arith.index_cast %c2_i32_120 : i32 to index
    %397 = memref.load %arg1[%396] : memref<7xi32, #tpu.memory_space<smem>>
    %c0_i32_121 = arith.constant 0 : i32
    %398 = arith.cmpi ne, %397, %c0_i32_121 : i32
    %399 = arith.extui %398 : i1 to i32
    %400 = arith.sitofp %399 : i32 to f32
    %401 = arith.index_cast %c2_i32_120 : i32 to index
    %c0_122 = arith.constant 0 : index
    %c0_123 = arith.constant 0 : index
    %402 = vector.load %arg4[%401, %c0_122, %c0_123] : memref<7x8x512xf32, #tpu.memory_space<vmem>>, vector<1x8x512xf32>
    %403 = vector.shape_cast %402 : vector<1x8x512xf32> to vector<8x512xf32>
    %404 = vector.broadcast %400 : f32 to vector<8x512xf32>
    %405 = arith.mulf %403, %404 : vector<8x512xf32>
    %cst_124 = arith.constant 1.000000e+00 : f32
    %406 = arith.subf %cst_124, %400 : f32
    %407 = vector.broadcast %406 : f32 to vector<8x512xf32>
    %408 = arith.mulf %395, %407 : vector<8x512xf32>
    %409 = arith.addf %405, %408 : vector<8x512xf32>
    %c0_125 = arith.constant 0 : index
    %c0_126 = arith.constant 0 : index
    %410 = vector.load %arg5[%c0_125, %c0_126] : memref<128x512xf32, #tpu.memory_space<vmem>>, vector<128x512xf32>
    %cst_127 = arith.constant dense<0.000000e+00> : vector<8x512xf32>
    %411 = tpu.matmul %368, %410, %cst_127 {dimension_numbers = #tpu.dot_dimension_numbers<[1], [0], [0], [1], [0, 0, 1, 1], [], []>} : vector<8x128xf32>, vector<128x512xf32>, vector<8x512xf32> -> vector<8x512xf32>
    %412 = arith.addf %409, %411 : vector<8x512xf32>
    %413 = vector.extract_strided_slice %412 {offsets = [0, 0], sizes = [8, 128], strides = [1, 1]} : vector<8x512xf32> to vector<8x128xf32>
    %414 = arith.negf %413 : vector<8x128xf32>
    %415 = math.exp %414 : vector<8x128xf32>
    %cst_128 = arith.constant 1.000000e+00 : f32
    %416 = vector.broadcast %cst_128 : f32 to vector<8x128xf32>
    %417 = arith.addf %416, %415 : vector<8x128xf32>
    %418 = arith.divf %416, %417 : vector<8x128xf32>
    %419 = vector.extract_strided_slice %412 {offsets = [0, 128], sizes = [8, 128], strides = [1, 1]} : vector<8x512xf32> to vector<8x128xf32>
    %420 = arith.negf %419 : vector<8x128xf32>
    %421 = math.exp %420 : vector<8x128xf32>
    %cst_129 = arith.constant 1.000000e+00 : f32
    %422 = vector.broadcast %cst_129 : f32 to vector<8x128xf32>
    %423 = arith.addf %422, %421 : vector<8x128xf32>
    %424 = arith.divf %422, %423 : vector<8x128xf32>
    %425 = vector.extract_strided_slice %412 {offsets = [0, 256], sizes = [8, 128], strides = [1, 1]} : vector<8x512xf32> to vector<8x128xf32>
    %426 = math.tanh %425 : vector<8x128xf32>
    %427 = vector.extract_strided_slice %412 {offsets = [0, 384], sizes = [8, 128], strides = [1, 1]} : vector<8x512xf32> to vector<8x128xf32>
    %428 = arith.negf %427 : vector<8x128xf32>
    %429 = math.exp %428 : vector<8x128xf32>
    %cst_130 = arith.constant 1.000000e+00 : f32
    %430 = vector.broadcast %cst_130 : f32 to vector<8x128xf32>
    %431 = arith.addf %430, %429 : vector<8x128xf32>
    %432 = arith.divf %430, %431 : vector<8x128xf32>
    %433 = arith.mulf %424, %366 : vector<8x128xf32>
    %434 = arith.mulf %418, %426 : vector<8x128xf32>
    %435 = arith.addf %433, %434 : vector<8x128xf32>
    %436 = math.tanh %435 : vector<8x128xf32>
    %437 = arith.mulf %432, %436 : vector<8x128xf32>
    %c0_131 = arith.constant 0 : index
    %c0_132 = arith.constant 0 : index
    %438 = vector.load %arg7[%c0_131, %c0_132] : memref<128x128xf32, #tpu.memory_space<vmem>>, vector<128x128xf32>
    %cst_133 = arith.constant dense<0.000000e+00> : vector<8x128xf32>
    %439 = tpu.matmul %437, %438, %cst_133 {dimension_numbers = #tpu.dot_dimension_numbers<[1], [0], [0], [1], [0, 0, 1, 1], [], []>} : vector<8x128xf32>, vector<128x128xf32>, vector<8x128xf32> -> vector<8x128xf32>
    %c0_134 = arith.constant 0 : index
    %c0_135 = arith.constant 0 : index
    %440 = vector.load %arg8[%c0_134, %c0_135] : memref<1x128xf32, #tpu.memory_space<vmem>>, vector<1x128xf32>
    %441 = vector.broadcast %440 : vector<1x128xf32> to vector<8x128xf32>
    %442 = arith.addf %439, %441 : vector<8x128xf32>
    %c1_i32_136 = arith.constant 1 : i32
    %443 = arith.addi %c2_i32_120, %c1_i32_136 : i32
    %444 = arith.index_cast %443 : i32 to index
    %c0_137 = arith.constant 0 : index
    %c0_138 = arith.constant 0 : index
    %445 = vector.load %arg9[%444, %c0_137, %c0_138] : memref<8x8x128xf32, #tpu.memory_space<vmem>>, vector<1x8x128xf32>
    %446 = vector.shape_cast %445 : vector<1x8x128xf32> to vector<8x128xf32>
    %447 = vector.shape_cast %442 : vector<8x128xf32> to vector<1x8x128xf32>
    tpu.vector_store %arg9[%444, %c0_137, %c0_138], %447 {strides = array<i32>} : memref<8x8x128xf32, #tpu.memory_space<vmem>>, vector<1x8x128xf32>,
    %cst_139 = arith.constant -1.000000e+30 : f32
    %448 = vector.broadcast %cst_139 : f32 to vector<8x128xf32>
    %449 = arith.select %256, %442, %448 : vector<8x128xi1>, vector<8x128xf32>
    %cst_140 = arith.constant dense<0xFF800000> : vector<8xf32>
    %450 = vector.multi_reduction <maximumf>, %449, %cst_140 [1] : vector<8x128xf32> to vector<8xf32>
    %451 = vector.shape_cast %450 : vector<8xf32> to vector<8x1xf32>
    %452 = vector.broadcast %451 : vector<8x1xf32> to vector<8x128xf32>
    %453 = arith.cmpf oge, %449, %452 : vector<8x128xf32>
    %454 = arith.andi %453, %256 : vector<8x128xi1>
    %cst_141 = arith.constant 1.280000e+02 : f32
    %455 = vector.broadcast %cst_141 : f32 to vector<8x128xf32>
    %456 = arith.select %454, %254, %455 : vector<8x128xi1>, vector<8x128xf32>
    %cst_142 = arith.constant dense<0x7F800000> : vector<8xf32>
    %457 = vector.multi_reduction <minimumf>, %456, %cst_142 [1] : vector<8x128xf32> to vector<8xf32>
    %458 = vector.shape_cast %457 : vector<8xf32> to vector<8x1xf32>
    %459 = vector.broadcast %458 : vector<8x1xf32> to vector<8x128xf32>
    %460 = arith.cmpf oeq, %254, %459 : vector<8x128xf32>
    %461 = arith.extui %460 : vector<8x128xi1> to vector<8x128xi32>
    %462 = arith.sitofp %461 : vector<8x128xi32> to vector<8x128xf32>
    %c0_143 = arith.constant 0 : index
    %c0_144 = arith.constant 0 : index
    %463 = vector.load %arg6[%c0_143, %c0_144] : memref<128x512xf32, #tpu.memory_space<vmem>>, vector<128x512xf32>
    %cst_145 = arith.constant dense<0.000000e+00> : vector<8x512xf32>
    %464 = tpu.matmul %462, %463, %cst_145 {dimension_numbers = #tpu.dot_dimension_numbers<[1], [0], [0], [1], [0, 0, 1, 1], [], []>} : vector<8x128xf32>, vector<128x512xf32>, vector<8x512xf32> -> vector<8x512xf32>
    %c3_i32_146 = arith.constant 3 : i32
    %465 = arith.index_cast %c3_i32_146 : i32 to index
    %466 = memref.load %arg1[%465] : memref<7xi32, #tpu.memory_space<smem>>
    %c0_i32_147 = arith.constant 0 : i32
    %467 = arith.cmpi ne, %466, %c0_i32_147 : i32
    %468 = arith.extui %467 : i1 to i32
    %469 = arith.sitofp %468 : i32 to f32
    %470 = arith.index_cast %c3_i32_146 : i32 to index
    %c0_148 = arith.constant 0 : index
    %c0_149 = arith.constant 0 : index
    %471 = vector.load %arg4[%470, %c0_148, %c0_149] : memref<7x8x512xf32, #tpu.memory_space<vmem>>, vector<1x8x512xf32>
    %472 = vector.shape_cast %471 : vector<1x8x512xf32> to vector<8x512xf32>
    %473 = vector.broadcast %469 : f32 to vector<8x512xf32>
    %474 = arith.mulf %472, %473 : vector<8x512xf32>
    %cst_150 = arith.constant 1.000000e+00 : f32
    %475 = arith.subf %cst_150, %469 : f32
    %476 = vector.broadcast %475 : f32 to vector<8x512xf32>
    %477 = arith.mulf %464, %476 : vector<8x512xf32>
    %478 = arith.addf %474, %477 : vector<8x512xf32>
    %c0_151 = arith.constant 0 : index
    %c0_152 = arith.constant 0 : index
    %479 = vector.load %arg5[%c0_151, %c0_152] : memref<128x512xf32, #tpu.memory_space<vmem>>, vector<128x512xf32>
    %cst_153 = arith.constant dense<0.000000e+00> : vector<8x512xf32>
    %480 = tpu.matmul %437, %479, %cst_153 {dimension_numbers = #tpu.dot_dimension_numbers<[1], [0], [0], [1], [0, 0, 1, 1], [], []>} : vector<8x128xf32>, vector<128x512xf32>, vector<8x512xf32> -> vector<8x512xf32>
    %481 = arith.addf %478, %480 : vector<8x512xf32>
    %482 = vector.extract_strided_slice %481 {offsets = [0, 0], sizes = [8, 128], strides = [1, 1]} : vector<8x512xf32> to vector<8x128xf32>
    %483 = arith.negf %482 : vector<8x128xf32>
    %484 = math.exp %483 : vector<8x128xf32>
    %cst_154 = arith.constant 1.000000e+00 : f32
    %485 = vector.broadcast %cst_154 : f32 to vector<8x128xf32>
    %486 = arith.addf %485, %484 : vector<8x128xf32>
    %487 = arith.divf %485, %486 : vector<8x128xf32>
    %488 = vector.extract_strided_slice %481 {offsets = [0, 128], sizes = [8, 128], strides = [1, 1]} : vector<8x512xf32> to vector<8x128xf32>
    %489 = arith.negf %488 : vector<8x128xf32>
    %490 = math.exp %489 : vector<8x128xf32>
    %cst_155 = arith.constant 1.000000e+00 : f32
    %491 = vector.broadcast %cst_155 : f32 to vector<8x128xf32>
    %492 = arith.addf %491, %490 : vector<8x128xf32>
    %493 = arith.divf %491, %492 : vector<8x128xf32>
    %494 = vector.extract_strided_slice %481 {offsets = [0, 256], sizes = [8, 128], strides = [1, 1]} : vector<8x512xf32> to vector<8x128xf32>
    %495 = math.tanh %494 : vector<8x128xf32>
    %496 = vector.extract_strided_slice %481 {offsets = [0, 384], sizes = [8, 128], strides = [1, 1]} : vector<8x512xf32> to vector<8x128xf32>
    %497 = arith.negf %496 : vector<8x128xf32>
    %498 = math.exp %497 : vector<8x128xf32>
    %cst_156 = arith.constant 1.000000e+00 : f32
    %499 = vector.broadcast %cst_156 : f32 to vector<8x128xf32>
    %500 = arith.addf %499, %498 : vector<8x128xf32>
    %501 = arith.divf %499, %500 : vector<8x128xf32>
    %502 = arith.mulf %493, %435 : vector<8x128xf32>
    %503 = arith.mulf %487, %495 : vector<8x128xf32>
    %504 = arith.addf %502, %503 : vector<8x128xf32>
    %505 = math.tanh %504 : vector<8x128xf32>
    %506 = arith.mulf %501, %505 : vector<8x128xf32>
    %c0_157 = arith.constant 0 : index
    %c0_158 = arith.constant 0 : index
    %507 = vector.load %arg7[%c0_157, %c0_158] : memref<128x128xf32, #tpu.memory_space<vmem>>, vector<128x128xf32>
    %cst_159 = arith.constant dense<0.000000e+00> : vector<8x128xf32>
    %508 = tpu.matmul %506, %507, %cst_159 {dimension_numbers = #tpu.dot_dimension_numbers<[1], [0], [0], [1], [0, 0, 1, 1], [], []>} : vector<8x128xf32>, vector<128x128xf32>, vector<8x128xf32> -> vector<8x128xf32>
    %c0_160 = arith.constant 0 : index
    %c0_161 = arith.constant 0 : index
    %509 = vector.load %arg8[%c0_160, %c0_161] : memref<1x128xf32, #tpu.memory_space<vmem>>, vector<1x128xf32>
    %510 = vector.broadcast %509 : vector<1x128xf32> to vector<8x128xf32>
    %511 = arith.addf %508, %510 : vector<8x128xf32>
    %c1_i32_162 = arith.constant 1 : i32
    %512 = arith.addi %c3_i32_146, %c1_i32_162 : i32
    %513 = arith.index_cast %512 : i32 to index
    %c0_163 = arith.constant 0 : index
    %c0_164 = arith.constant 0 : index
    %514 = vector.load %arg9[%513, %c0_163, %c0_164] : memref<8x8x128xf32, #tpu.memory_space<vmem>>, vector<1x8x128xf32>
    %515 = vector.shape_cast %514 : vector<1x8x128xf32> to vector<8x128xf32>
    %516 = vector.shape_cast %511 : vector<8x128xf32> to vector<1x8x128xf32>
    tpu.vector_store %arg9[%513, %c0_163, %c0_164], %516 {strides = array<i32>} : memref<8x8x128xf32, #tpu.memory_space<vmem>>, vector<1x8x128xf32>,
    %cst_165 = arith.constant -1.000000e+30 : f32
    %517 = vector.broadcast %cst_165 : f32 to vector<8x128xf32>
    %518 = arith.select %256, %511, %517 : vector<8x128xi1>, vector<8x128xf32>
    %cst_166 = arith.constant dense<0xFF800000> : vector<8xf32>
    %519 = vector.multi_reduction <maximumf>, %518, %cst_166 [1] : vector<8x128xf32> to vector<8xf32>
    %520 = vector.shape_cast %519 : vector<8xf32> to vector<8x1xf32>
    %521 = vector.broadcast %520 : vector<8x1xf32> to vector<8x128xf32>
    %522 = arith.cmpf oge, %518, %521 : vector<8x128xf32>
    %523 = arith.andi %522, %256 : vector<8x128xi1>
    %cst_167 = arith.constant 1.280000e+02 : f32
    %524 = vector.broadcast %cst_167 : f32 to vector<8x128xf32>
    %525 = arith.select %523, %254, %524 : vector<8x128xi1>, vector<8x128xf32>
    %cst_168 = arith.constant dense<0x7F800000> : vector<8xf32>
    %526 = vector.multi_reduction <minimumf>, %525, %cst_168 [1] : vector<8x128xf32> to vector<8xf32>
    %527 = vector.shape_cast %526 : vector<8xf32> to vector<8x1xf32>
    %528 = vector.broadcast %527 : vector<8x1xf32> to vector<8x128xf32>
    %529 = arith.cmpf oeq, %254, %528 : vector<8x128xf32>
    %530 = arith.extui %529 : vector<8x128xi1> to vector<8x128xi32>
    %531 = arith.sitofp %530 : vector<8x128xi32> to vector<8x128xf32>
    %c0_169 = arith.constant 0 : index
    %c0_170 = arith.constant 0 : index
    %532 = vector.load %arg6[%c0_169, %c0_170] : memref<128x512xf32, #tpu.memory_space<vmem>>, vector<128x512xf32>
    %cst_171 = arith.constant dense<0.000000e+00> : vector<8x512xf32>
    %533 = tpu.matmul %531, %532, %cst_171 {dimension_numbers = #tpu.dot_dimension_numbers<[1], [0], [0], [1], [0, 0, 1, 1], [], []>} : vector<8x128xf32>, vector<128x512xf32>, vector<8x512xf32> -> vector<8x512xf32>
    %c4_i32_172 = arith.constant 4 : i32
    %534 = arith.index_cast %c4_i32_172 : i32 to index
    %535 = memref.load %arg1[%534] : memref<7xi32, #tpu.memory_space<smem>>
    %c0_i32_173 = arith.constant 0 : i32
    %536 = arith.cmpi ne, %535, %c0_i32_173 : i32
    %537 = arith.extui %536 : i1 to i32
    %538 = arith.sitofp %537 : i32 to f32
    %539 = arith.index_cast %c4_i32_172 : i32 to index
    %c0_174 = arith.constant 0 : index
    %c0_175 = arith.constant 0 : index
    %540 = vector.load %arg4[%539, %c0_174, %c0_175] : memref<7x8x512xf32, #tpu.memory_space<vmem>>, vector<1x8x512xf32>
    %541 = vector.shape_cast %540 : vector<1x8x512xf32> to vector<8x512xf32>
    %542 = vector.broadcast %538 : f32 to vector<8x512xf32>
    %543 = arith.mulf %541, %542 : vector<8x512xf32>
    %cst_176 = arith.constant 1.000000e+00 : f32
    %544 = arith.subf %cst_176, %538 : f32
    %545 = vector.broadcast %544 : f32 to vector<8x512xf32>
    %546 = arith.mulf %533, %545 : vector<8x512xf32>
    %547 = arith.addf %543, %546 : vector<8x512xf32>
    %c0_177 = arith.constant 0 : index
    %c0_178 = arith.constant 0 : index
    %548 = vector.load %arg5[%c0_177, %c0_178] : memref<128x512xf32, #tpu.memory_space<vmem>>, vector<128x512xf32>
    %cst_179 = arith.constant dense<0.000000e+00> : vector<8x512xf32>
    %549 = tpu.matmul %506, %548, %cst_179 {dimension_numbers = #tpu.dot_dimension_numbers<[1], [0], [0], [1], [0, 0, 1, 1], [], []>} : vector<8x128xf32>, vector<128x512xf32>, vector<8x512xf32> -> vector<8x512xf32>
    %550 = arith.addf %547, %549 : vector<8x512xf32>
    %551 = vector.extract_strided_slice %550 {offsets = [0, 0], sizes = [8, 128], strides = [1, 1]} : vector<8x512xf32> to vector<8x128xf32>
    %552 = arith.negf %551 : vector<8x128xf32>
    %553 = math.exp %552 : vector<8x128xf32>
    %cst_180 = arith.constant 1.000000e+00 : f32
    %554 = vector.broadcast %cst_180 : f32 to vector<8x128xf32>
    %555 = arith.addf %554, %553 : vector<8x128xf32>
    %556 = arith.divf %554, %555 : vector<8x128xf32>
    %557 = vector.extract_strided_slice %550 {offsets = [0, 128], sizes = [8, 128], strides = [1, 1]} : vector<8x512xf32> to vector<8x128xf32>
    %558 = arith.negf %557 : vector<8x128xf32>
    %559 = math.exp %558 : vector<8x128xf32>
    %cst_181 = arith.constant 1.000000e+00 : f32
    %560 = vector.broadcast %cst_181 : f32 to vector<8x128xf32>
    %561 = arith.addf %560, %559 : vector<8x128xf32>
    %562 = arith.divf %560, %561 : vector<8x128xf32>
    %563 = vector.extract_strided_slice %550 {offsets = [0, 256], sizes = [8, 128], strides = [1, 1]} : vector<8x512xf32> to vector<8x128xf32>
    %564 = math.tanh %563 : vector<8x128xf32>
    %565 = vector.extract_strided_slice %550 {offsets = [0, 384], sizes = [8, 128], strides = [1, 1]} : vector<8x512xf32> to vector<8x128xf32>
    %566 = arith.negf %565 : vector<8x128xf32>
    %567 = math.exp %566 : vector<8x128xf32>
    %cst_182 = arith.constant 1.000000e+00 : f32
    %568 = vector.broadcast %cst_182 : f32 to vector<8x128xf32>
    %569 = arith.addf %568, %567 : vector<8x128xf32>
    %570 = arith.divf %568, %569 : vector<8x128xf32>
    %571 = arith.mulf %562, %504 : vector<8x128xf32>
    %572 = arith.mulf %556, %564 : vector<8x128xf32>
    %573 = arith.addf %571, %572 : vector<8x128xf32>
    %574 = math.tanh %573 : vector<8x128xf32>
    %575 = arith.mulf %570, %574 : vector<8x128xf32>
    %c0_183 = arith.constant 0 : index
    %c0_184 = arith.constant 0 : index
    %576 = vector.load %arg7[%c0_183, %c0_184] : memref<128x128xf32, #tpu.memory_space<vmem>>, vector<128x128xf32>
    %cst_185 = arith.constant dense<0.000000e+00> : vector<8x128xf32>
    %577 = tpu.matmul %575, %576, %cst_185 {dimension_numbers = #tpu.dot_dimension_numbers<[1], [0], [0], [1], [0, 0, 1, 1], [], []>} : vector<8x128xf32>, vector<128x128xf32>, vector<8x128xf32> -> vector<8x128xf32>
    %c0_186 = arith.constant 0 : index
    %c0_187 = arith.constant 0 : index
    %578 = vector.load %arg8[%c0_186, %c0_187] : memref<1x128xf32, #tpu.memory_space<vmem>>, vector<1x128xf32>
    %579 = vector.broadcast %578 : vector<1x128xf32> to vector<8x128xf32>
    %580 = arith.addf %577, %579 : vector<8x128xf32>
    %c1_i32_188 = arith.constant 1 : i32
    %581 = arith.addi %c4_i32_172, %c1_i32_188 : i32
    %582 = arith.index_cast %581 : i32 to index
    %c0_189 = arith.constant 0 : index
    %c0_190 = arith.constant 0 : index
    %583 = vector.load %arg9[%582, %c0_189, %c0_190] : memref<8x8x128xf32, #tpu.memory_space<vmem>>, vector<1x8x128xf32>
    %584 = vector.shape_cast %583 : vector<1x8x128xf32> to vector<8x128xf32>
    %585 = vector.shape_cast %580 : vector<8x128xf32> to vector<1x8x128xf32>
    tpu.vector_store %arg9[%582, %c0_189, %c0_190], %585 {strides = array<i32>} : memref<8x8x128xf32, #tpu.memory_space<vmem>>, vector<1x8x128xf32>,
    %cst_191 = arith.constant -1.000000e+30 : f32
    %586 = vector.broadcast %cst_191 : f32 to vector<8x128xf32>
    %587 = arith.select %256, %580, %586 : vector<8x128xi1>, vector<8x128xf32>
    %cst_192 = arith.constant dense<0xFF800000> : vector<8xf32>
    %588 = vector.multi_reduction <maximumf>, %587, %cst_192 [1] : vector<8x128xf32> to vector<8xf32>
    %589 = vector.shape_cast %588 : vector<8xf32> to vector<8x1xf32>
    %590 = vector.broadcast %589 : vector<8x1xf32> to vector<8x128xf32>
    %591 = arith.cmpf oge, %587, %590 : vector<8x128xf32>
    %592 = arith.andi %591, %256 : vector<8x128xi1>
    %cst_193 = arith.constant 1.280000e+02 : f32
    %593 = vector.broadcast %cst_193 : f32 to vector<8x128xf32>
    %594 = arith.select %592, %254, %593 : vector<8x128xi1>, vector<8x128xf32>
    %cst_194 = arith.constant dense<0x7F800000> : vector<8xf32>
    %595 = vector.multi_reduction <minimumf>, %594, %cst_194 [1] : vector<8x128xf32> to vector<8xf32>
    %596 = vector.shape_cast %595 : vector<8xf32> to vector<8x1xf32>
    %597 = vector.broadcast %596 : vector<8x1xf32> to vector<8x128xf32>
    %598 = arith.cmpf oeq, %254, %597 : vector<8x128xf32>
    %599 = arith.extui %598 : vector<8x128xi1> to vector<8x128xi32>
    %600 = arith.sitofp %599 : vector<8x128xi32> to vector<8x128xf32>
    %c0_195 = arith.constant 0 : index
    %c0_196 = arith.constant 0 : index
    %601 = vector.load %arg6[%c0_195, %c0_196] : memref<128x512xf32, #tpu.memory_space<vmem>>, vector<128x512xf32>
    %cst_197 = arith.constant dense<0.000000e+00> : vector<8x512xf32>
    %602 = tpu.matmul %600, %601, %cst_197 {dimension_numbers = #tpu.dot_dimension_numbers<[1], [0], [0], [1], [0, 0, 1, 1], [], []>} : vector<8x128xf32>, vector<128x512xf32>, vector<8x512xf32> -> vector<8x512xf32>
    %c5_i32_198 = arith.constant 5 : i32
    %603 = arith.index_cast %c5_i32_198 : i32 to index
    %604 = memref.load %arg1[%603] : memref<7xi32, #tpu.memory_space<smem>>
    %c0_i32_199 = arith.constant 0 : i32
    %605 = arith.cmpi ne, %604, %c0_i32_199 : i32
    %606 = arith.extui %605 : i1 to i32
    %607 = arith.sitofp %606 : i32 to f32
    %608 = arith.index_cast %c5_i32_198 : i32 to index
    %c0_200 = arith.constant 0 : index
    %c0_201 = arith.constant 0 : index
    %609 = vector.load %arg4[%608, %c0_200, %c0_201] : memref<7x8x512xf32, #tpu.memory_space<vmem>>, vector<1x8x512xf32>
    %610 = vector.shape_cast %609 : vector<1x8x512xf32> to vector<8x512xf32>
    %611 = vector.broadcast %607 : f32 to vector<8x512xf32>
    %612 = arith.mulf %610, %611 : vector<8x512xf32>
    %cst_202 = arith.constant 1.000000e+00 : f32
    %613 = arith.subf %cst_202, %607 : f32
    %614 = vector.broadcast %613 : f32 to vector<8x512xf32>
    %615 = arith.mulf %602, %614 : vector<8x512xf32>
    %616 = arith.addf %612, %615 : vector<8x512xf32>
    %c0_203 = arith.constant 0 : index
    %c0_204 = arith.constant 0 : index
    %617 = vector.load %arg5[%c0_203, %c0_204] : memref<128x512xf32, #tpu.memory_space<vmem>>, vector<128x512xf32>
    %cst_205 = arith.constant dense<0.000000e+00> : vector<8x512xf32>
    %618 = tpu.matmul %575, %617, %cst_205 {dimension_numbers = #tpu.dot_dimension_numbers<[1], [0], [0], [1], [0, 0, 1, 1], [], []>} : vector<8x128xf32>, vector<128x512xf32>, vector<8x512xf32> -> vector<8x512xf32>
    %619 = arith.addf %616, %618 : vector<8x512xf32>
    %620 = vector.extract_strided_slice %619 {offsets = [0, 0], sizes = [8, 128], strides = [1, 1]} : vector<8x512xf32> to vector<8x128xf32>
    %621 = arith.negf %620 : vector<8x128xf32>
    %622 = math.exp %621 : vector<8x128xf32>
    %cst_206 = arith.constant 1.000000e+00 : f32
    %623 = vector.broadcast %cst_206 : f32 to vector<8x128xf32>
    %624 = arith.addf %623, %622 : vector<8x128xf32>
    %625 = arith.divf %623, %624 : vector<8x128xf32>
    %626 = vector.extract_strided_slice %619 {offsets = [0, 128], sizes = [8, 128], strides = [1, 1]} : vector<8x512xf32> to vector<8x128xf32>
    %627 = arith.negf %626 : vector<8x128xf32>
    %628 = math.exp %627 : vector<8x128xf32>
    %cst_207 = arith.constant 1.000000e+00 : f32
    %629 = vector.broadcast %cst_207 : f32 to vector<8x128xf32>
    %630 = arith.addf %629, %628 : vector<8x128xf32>
    %631 = arith.divf %629, %630 : vector<8x128xf32>
    %632 = vector.extract_strided_slice %619 {offsets = [0, 256], sizes = [8, 128], strides = [1, 1]} : vector<8x512xf32> to vector<8x128xf32>
    %633 = math.tanh %632 : vector<8x128xf32>
    %634 = vector.extract_strided_slice %619 {offsets = [0, 384], sizes = [8, 128], strides = [1, 1]} : vector<8x512xf32> to vector<8x128xf32>
    %635 = arith.negf %634 : vector<8x128xf32>
    %636 = math.exp %635 : vector<8x128xf32>
    %cst_208 = arith.constant 1.000000e+00 : f32
    %637 = vector.broadcast %cst_208 : f32 to vector<8x128xf32>
    %638 = arith.addf %637, %636 : vector<8x128xf32>
    %639 = arith.divf %637, %638 : vector<8x128xf32>
    %640 = arith.mulf %631, %573 : vector<8x128xf32>
    %641 = arith.mulf %625, %633 : vector<8x128xf32>
    %642 = arith.addf %640, %641 : vector<8x128xf32>
    %643 = math.tanh %642 : vector<8x128xf32>
    %644 = arith.mulf %639, %643 : vector<8x128xf32>
    %c0_209 = arith.constant 0 : index
    %c0_210 = arith.constant 0 : index
    %645 = vector.load %arg7[%c0_209, %c0_210] : memref<128x128xf32, #tpu.memory_space<vmem>>, vector<128x128xf32>
    %cst_211 = arith.constant dense<0.000000e+00> : vector<8x128xf32>
    %646 = tpu.matmul %644, %645, %cst_211 {dimension_numbers = #tpu.dot_dimension_numbers<[1], [0], [0], [1], [0, 0, 1, 1], [], []>} : vector<8x128xf32>, vector<128x128xf32>, vector<8x128xf32> -> vector<8x128xf32>
    %c0_212 = arith.constant 0 : index
    %c0_213 = arith.constant 0 : index
    %647 = vector.load %arg8[%c0_212, %c0_213] : memref<1x128xf32, #tpu.memory_space<vmem>>, vector<1x128xf32>
    %648 = vector.broadcast %647 : vector<1x128xf32> to vector<8x128xf32>
    %649 = arith.addf %646, %648 : vector<8x128xf32>
    %c1_i32_214 = arith.constant 1 : i32
    %650 = arith.addi %c5_i32_198, %c1_i32_214 : i32
    %651 = arith.index_cast %650 : i32 to index
    %c0_215 = arith.constant 0 : index
    %c0_216 = arith.constant 0 : index
    %652 = vector.load %arg9[%651, %c0_215, %c0_216] : memref<8x8x128xf32, #tpu.memory_space<vmem>>, vector<1x8x128xf32>
    %653 = vector.shape_cast %652 : vector<1x8x128xf32> to vector<8x128xf32>
    %654 = vector.shape_cast %649 : vector<8x128xf32> to vector<1x8x128xf32>
    tpu.vector_store %arg9[%651, %c0_215, %c0_216], %654 {strides = array<i32>} : memref<8x8x128xf32, #tpu.memory_space<vmem>>, vector<1x8x128xf32>,
    %cst_217 = arith.constant -1.000000e+30 : f32
    %655 = vector.broadcast %cst_217 : f32 to vector<8x128xf32>
    %656 = arith.select %256, %649, %655 : vector<8x128xi1>, vector<8x128xf32>
    %cst_218 = arith.constant dense<0xFF800000> : vector<8xf32>
    %657 = vector.multi_reduction <maximumf>, %656, %cst_218 [1] : vector<8x128xf32> to vector<8xf32>
    %658 = vector.shape_cast %657 : vector<8xf32> to vector<8x1xf32>
    %659 = vector.broadcast %658 : vector<8x1xf32> to vector<8x128xf32>
    %660 = arith.cmpf oge, %656, %659 : vector<8x128xf32>
    %661 = arith.andi %660, %256 : vector<8x128xi1>
    %cst_219 = arith.constant 1.280000e+02 : f32
    %662 = vector.broadcast %cst_219 : f32 to vector<8x128xf32>
    %663 = arith.select %661, %254, %662 : vector<8x128xi1>, vector<8x128xf32>
    %cst_220 = arith.constant dense<0x7F800000> : vector<8xf32>
    %664 = vector.multi_reduction <minimumf>, %663, %cst_220 [1] : vector<8x128xf32> to vector<8xf32>
    %665 = vector.shape_cast %664 : vector<8xf32> to vector<8x1xf32>
    %666 = vector.broadcast %665 : vector<8x1xf32> to vector<8x128xf32>
    %667 = arith.cmpf oeq, %254, %666 : vector<8x128xf32>
    %668 = arith.extui %667 : vector<8x128xi1> to vector<8x128xi32>
    %669 = arith.sitofp %668 : vector<8x128xi32> to vector<8x128xf32>
    %c0_221 = arith.constant 0 : index
    %c0_222 = arith.constant 0 : index
    %670 = vector.load %arg6[%c0_221, %c0_222] : memref<128x512xf32, #tpu.memory_space<vmem>>, vector<128x512xf32>
    %cst_223 = arith.constant dense<0.000000e+00> : vector<8x512xf32>
    %671 = tpu.matmul %669, %670, %cst_223 {dimension_numbers = #tpu.dot_dimension_numbers<[1], [0], [0], [1], [0, 0, 1, 1], [], []>} : vector<8x128xf32>, vector<128x512xf32>, vector<8x512xf32> -> vector<8x512xf32>
    %c6_i32_224 = arith.constant 6 : i32
    %672 = arith.index_cast %c6_i32_224 : i32 to index
    %673 = memref.load %arg1[%672] : memref<7xi32, #tpu.memory_space<smem>>
    %c0_i32_225 = arith.constant 0 : i32
    %674 = arith.cmpi ne, %673, %c0_i32_225 : i32
    %675 = arith.extui %674 : i1 to i32
    %676 = arith.sitofp %675 : i32 to f32
    %677 = arith.index_cast %c6_i32_224 : i32 to index
    %c0_226 = arith.constant 0 : index
    %c0_227 = arith.constant 0 : index
    %678 = vector.load %arg4[%677, %c0_226, %c0_227] : memref<7x8x512xf32, #tpu.memory_space<vmem>>, vector<1x8x512xf32>
    %679 = vector.shape_cast %678 : vector<1x8x512xf32> to vector<8x512xf32>
    %680 = vector.broadcast %676 : f32 to vector<8x512xf32>
    %681 = arith.mulf %679, %680 : vector<8x512xf32>
    %cst_228 = arith.constant 1.000000e+00 : f32
    %682 = arith.subf %cst_228, %676 : f32
    %683 = vector.broadcast %682 : f32 to vector<8x512xf32>
    %684 = arith.mulf %671, %683 : vector<8x512xf32>
    %685 = arith.addf %681, %684 : vector<8x512xf32>
    %c0_229 = arith.constant 0 : index
    %c0_230 = arith.constant 0 : index
    %686 = vector.load %arg5[%c0_229, %c0_230] : memref<128x512xf32, #tpu.memory_space<vmem>>, vector<128x512xf32>
    %cst_231 = arith.constant dense<0.000000e+00> : vector<8x512xf32>
    %687 = tpu.matmul %644, %686, %cst_231 {dimension_numbers = #tpu.dot_dimension_numbers<[1], [0], [0], [1], [0, 0, 1, 1], [], []>} : vector<8x128xf32>, vector<128x512xf32>, vector<8x512xf32> -> vector<8x512xf32>
    %688 = arith.addf %685, %687 : vector<8x512xf32>
    %689 = vector.extract_strided_slice %688 {offsets = [0, 0], sizes = [8, 128], strides = [1, 1]} : vector<8x512xf32> to vector<8x128xf32>
    %690 = arith.negf %689 : vector<8x128xf32>
    %691 = math.exp %690 : vector<8x128xf32>
    %cst_232 = arith.constant 1.000000e+00 : f32
    %692 = vector.broadcast %cst_232 : f32 to vector<8x128xf32>
    %693 = arith.addf %692, %691 : vector<8x128xf32>
    %694 = arith.divf %692, %693 : vector<8x128xf32>
    %695 = vector.extract_strided_slice %688 {offsets = [0, 128], sizes = [8, 128], strides = [1, 1]} : vector<8x512xf32> to vector<8x128xf32>
    %696 = arith.negf %695 : vector<8x128xf32>
    %697 = math.exp %696 : vector<8x128xf32>
    %cst_233 = arith.constant 1.000000e+00 : f32
    %698 = vector.broadcast %cst_233 : f32 to vector<8x128xf32>
    %699 = arith.addf %698, %697 : vector<8x128xf32>
    %700 = arith.divf %698, %699 : vector<8x128xf32>
    %701 = vector.extract_strided_slice %688 {offsets = [0, 256], sizes = [8, 128], strides = [1, 1]} : vector<8x512xf32> to vector<8x128xf32>
    %702 = math.tanh %701 : vector<8x128xf32>
    %703 = vector.extract_strided_slice %688 {offsets = [0, 384], sizes = [8, 128], strides = [1, 1]} : vector<8x512xf32> to vector<8x128xf32>
    %704 = arith.negf %703 : vector<8x128xf32>
    %705 = math.exp %704 : vector<8x128xf32>
    %cst_234 = arith.constant 1.000000e+00 : f32
    %706 = vector.broadcast %cst_234 : f32 to vector<8x128xf32>
    %707 = arith.addf %706, %705 : vector<8x128xf32>
    %708 = arith.divf %706, %707 : vector<8x128xf32>
    %709 = arith.mulf %700, %642 : vector<8x128xf32>
    %710 = arith.mulf %694, %702 : vector<8x128xf32>
    %711 = arith.addf %709, %710 : vector<8x128xf32>
    %712 = math.tanh %711 : vector<8x128xf32>
    %713 = arith.mulf %708, %712 : vector<8x128xf32>
    %c0_235 = arith.constant 0 : index
    %c0_236 = arith.constant 0 : index
    %714 = vector.load %arg7[%c0_235, %c0_236] : memref<128x128xf32, #tpu.memory_space<vmem>>, vector<128x128xf32>
    %cst_237 = arith.constant dense<0.000000e+00> : vector<8x128xf32>
    %715 = tpu.matmul %713, %714, %cst_237 {dimension_numbers = #tpu.dot_dimension_numbers<[1], [0], [0], [1], [0, 0, 1, 1], [], []>} : vector<8x128xf32>, vector<128x128xf32>, vector<8x128xf32> -> vector<8x128xf32>
    %c0_238 = arith.constant 0 : index
    %c0_239 = arith.constant 0 : index
    %716 = vector.load %arg8[%c0_238, %c0_239] : memref<1x128xf32, #tpu.memory_space<vmem>>, vector<1x128xf32>
    %717 = vector.broadcast %716 : vector<1x128xf32> to vector<8x128xf32>
    %718 = arith.addf %715, %717 : vector<8x128xf32>
    %c1_i32_240 = arith.constant 1 : i32
    %719 = arith.addi %c6_i32_224, %c1_i32_240 : i32
    %720 = arith.index_cast %719 : i32 to index
    %c0_241 = arith.constant 0 : index
    %c0_242 = arith.constant 0 : index
    %721 = vector.load %arg9[%720, %c0_241, %c0_242] : memref<8x8x128xf32, #tpu.memory_space<vmem>>, vector<1x8x128xf32>
    %722 = vector.shape_cast %721 : vector<1x8x128xf32> to vector<8x128xf32>
    %723 = vector.shape_cast %718 : vector<8x128xf32> to vector<1x8x128xf32>
    tpu.vector_store %arg9[%720, %c0_241, %c0_242], %723 {strides = array<i32>} : memref<8x8x128xf32, #tpu.memory_space<vmem>>, vector<1x8x128xf32>,
    %cst_243 = arith.constant -1.000000e+30 : f32
    %724 = vector.broadcast %cst_243 : f32 to vector<8x128xf32>
    %725 = arith.select %256, %718, %724 : vector<8x128xi1>, vector<8x128xf32>
    %cst_244 = arith.constant dense<0xFF800000> : vector<8xf32>
    %726 = vector.multi_reduction <maximumf>, %725, %cst_244 [1] : vector<8x128xf32> to vector<8xf32>
    %727 = vector.shape_cast %726 : vector<8xf32> to vector<8x1xf32>
    %728 = vector.broadcast %727 : vector<8x1xf32> to vector<8x128xf32>
    %729 = arith.cmpf oge, %725, %728 : vector<8x128xf32>
    %730 = arith.andi %729, %256 : vector<8x128xi1>
    %cst_245 = arith.constant 1.280000e+02 : f32
    %731 = vector.broadcast %cst_245 : f32 to vector<8x128xf32>
    %732 = arith.select %730, %254, %731 : vector<8x128xi1>, vector<8x128xf32>
    %cst_246 = arith.constant dense<0x7F800000> : vector<8xf32>
    %733 = vector.multi_reduction <minimumf>, %732, %cst_246 [1] : vector<8x128xf32> to vector<8xf32>
    %734 = vector.shape_cast %733 : vector<8xf32> to vector<8x1xf32>
    %735 = vector.broadcast %734 : vector<8x1xf32> to vector<8x128xf32>
    %736 = arith.cmpf oeq, %254, %735 : vector<8x128xf32>
    %737 = arith.extui %736 : vector<8x128xi1> to vector<8x128xi32>
    %738 = arith.sitofp %737 : vector<8x128xi32> to vector<8x128xf32>
    %c0_247 = arith.constant 0 : index
    %c0_248 = arith.constant 0 : index
    %739 = vector.load %arg6[%c0_247, %c0_248] : memref<128x512xf32, #tpu.memory_space<vmem>>, vector<128x512xf32>
    %cst_249 = arith.constant dense<0.000000e+00> : vector<8x512xf32>
    %740 = tpu.matmul %738, %739, %cst_249 {dimension_numbers = #tpu.dot_dimension_numbers<[1], [0], [0], [1], [0, 0, 1, 1], [], []>} : vector<8x128xf32>, vector<128x512xf32>, vector<8x512xf32> -> vector<8x512xf32>
    %c7_i32_250 = arith.constant 7 : i32
    return
  }
  func.func @transform_0(%arg0: i32, %arg1: memref<7xi32, #tpu.memory_space<smem>>) -> (i32, i32, i32) {
    %c0_i32 = arith.constant 0 : i32
    %c0_i32_0 = arith.constant 0 : i32
    %c0_i32_1 = arith.constant 0 : i32
    %c0_i32_2 = arith.constant 0 : i32
    return %c0_i32, %c0_i32_0, %c0_i32_1 : i32, i32, i32
  }
  func.func @transform_1(%arg0: i32, %arg1: memref<7xi32, #tpu.memory_space<smem>>) -> (i32, i32) {
    %c0_i32 = arith.constant 0 : i32
    %c0_i32_0 = arith.constant 0 : i32
    %c0_i32_1 = arith.constant 0 : i32
    return %c0_i32, %c0_i32_0 : i32, i32
  }
  func.func @transform_2(%arg0: i32, %arg1: memref<7xi32, #tpu.memory_space<smem>>) -> (i32, i32, i32) {
    %c0_i32 = arith.constant 0 : i32
    %c0_i32_0 = arith.constant 0 : i32
    %c0_i32_1 = arith.constant 0 : i32
    %c0_i32_2 = arith.constant 0 : i32
    return %c0_i32, %c0_i32_0, %c0_i32_1 : i32, i32, i32
  }
  func.func @transform_3(%arg0: i32, %arg1: memref<7xi32, #tpu.memory_space<smem>>) -> (i32, i32) {
    %c0_i32 = arith.constant 0 : i32
    %c0_i32_0 = arith.constant 0 : i32
    %c0_i32_1 = arith.constant 0 : i32
    return %c0_i32, %c0_i32_0 : i32, i32
  }
  func.func @transform_4(%arg0: i32, %arg1: memref<7xi32, #tpu.memory_space<smem>>) -> (i32, i32) {
    %c0_i32 = arith.constant 0 : i32
    %c0_i32_0 = arith.constant 0 : i32
    %c0_i32_1 = arith.constant 0 : i32
    return %c0_i32, %c0_i32_0 : i32, i32
  }
  func.func @transform_5(%arg0: i32, %arg1: memref<7xi32, #tpu.memory_space<smem>>) -> (i32, i32) {
    %c0_i32 = arith.constant 0 : i32
    %c0_i32_0 = arith.constant 0 : i32
    %c0_i32_1 = arith.constant 0 : i32
    return %c0_i32, %c0_i32_0 : i32, i32
  }
  func.func @transform_6(%arg0: i32, %arg1: memref<7xi32, #tpu.memory_space<smem>>) -> (i32, i32) {
    %c0_i32 = arith.constant 0 : i32
    %c0_i32_0 = arith.constant 0 : i32
    %c0_i32_1 = arith.constant 0 : i32
    return %c0_i32, %c0_i32_0 : i32, i32
  }
  func.func @transform_7(%arg0: i32, %arg1: memref<7xi32, #tpu.memory_space<smem>>) -> (i32, i32, i32) {
    %c0_i32 = arith.constant 0 : i32
    %c0_i32_0 = arith.constant 0 : i32
    %c0_i32_1 = arith.constant 0 : i32
    %c0_i32_2 = arith.constant 0 : i32
    return %c0_i32, %c0_i32_0, %c0_i32_1 : i32, i32, i32
  }
}

</mosaic_0001>

<llo_original>
// kernel: _seq2seq_forward.1
$region0: #{_seq2seq_forward.1}
  #allocation0 [shape = 'u32[]', space=smem, size = 0x4, offset = 0x4, fixed_abs, tag = 'smem constant byte address 0x4 - core index']
  #allocation1 [shape = 'u32[72,128]{1,0:T(1,128)}', space=vmem, size = 0x9000, scoped, tag = 'internal scratch']
  #allocation2 [shape = 's32[1]{0}', space=sflag, size = 0x4, scoped, tag = 'scoped memory for _seq2seq_forward.1']
  #allocation3 [shape = 'u8[512]{0}', space=smem, size = 0x200, scoped, tag = 'prefetched SMEM operand 0']
  %s0 = inlined_call_operand.vmem [shape: s32[7], index: 0, kind: input, shape index: {}]
  %s1 = inlined_call_operand.vmem [shape: f32[8,8,512], index: 1, kind: input, shape index: {}]
  %s2 = inlined_call_operand.vmem [shape: f32[128,512], index: 2, kind: input, shape index: {}]
  %s3 = inlined_call_operand.vmem [shape: f32[7,8,512], index: 3, kind: input, shape index: {}]
  %s4 = inlined_call_operand.hbm [shape: f32[128,512], index: 4, kind: input, shape index: {}]
  %s5 = inlined_call_operand.hbm [shape: f32[128,512], index: 5, kind: input, shape index: {}]
  %s6 = inlined_call_operand.vmem [shape: f32[128,128], index: 6, kind: input, shape index: {}]
  %s7 = inlined_call_operand.vmem [shape: f32[1,128], index: 7, kind: input, shape index: {}]
  %s8 = inlined_call_operand.hbm [shape: f32[8,8,128], index: 8, kind: output, shape index: {}]
  %s9 = sld [smem:[#allocation0]]
  $region46: #{_seq2seq_forward.1} parent=0
    _
  %s11 = ssub.s32 1, %s9
  %s12 = scalar_select 0, %s11, %s9
  %s14 = sshll.u32 %s0, 4
  %s15 = int_to_ptr.vmem [resolvable:$true] %s14
  %17 = dma.vmem_to_smem %s15, 16, [#allocation3], [#allocation2]
  %19 = dma.done [#allocation2], 16
  %20 = sfence
  $region1: #{_seq2seq_forward.1} parent=0
    #allocation4 [shape = 'u8[262144]{0}', space=vmem, size = 0x40000, scoped, tag = 'input window, operand 4, single buffered']
    #allocation5 [shape = 's32[1]{0}', space=sflag, size = 0x4, scoped, tag = 'scoped memory for _seq2seq_forward.1']
    #allocation6 [shape = 's32[1]{0}', space=sflag, size = 0x4, scoped, tag = 'scoped memory for _seq2seq_forward.1']
    #allocation7 [shape = 'u8[262144]{0}', space=vmem, size = 0x40000, scoped, tag = 'input window, operand 5, single buffered']
    #allocation8 [shape = 's32[1]{0}', space=sflag, size = 0x4, scoped, tag = 'scoped memory for _seq2seq_forward.1']
    #allocation9 [shape = 'u8[32768]{0}', space=vmem, size = 0x8000, scoped, tag = 'output window, operand 0, single buffered']
    %21 = vsyncpa [#allocation5], 0
    %22 = vsyncpa [#allocation8], 0
    %23 = vsyncpa [#allocation6], 0
    // Predicated region
    $region2: #{_seq2seq_forward.1} parent=1 // pred_check
      _
    $region3: #{_seq2seq_forward.1} parent=1 // pred_check_branch
      %25 = sbr.rel (0) target = $region5
    $region4: #{_seq2seq_forward.1} parent=1 // pred_region
      _
    $region5: #{_seq2seq_forward.1} parent=1 // pred_fallthru
      _
    // Predicated region
    $region6: #{_seq2seq_forward.1} parent=1 // pred_check
      _
    $region7: #{_seq2seq_forward.1} parent=1 // pred_check_branch
      %27 = sbr.rel (0) target = $region9
    $region8: #{_seq2seq_forward.1} parent=1 // pred_region
      _
    $region9: #{_seq2seq_forward.1} parent=1 // pred_fallthru
      _
    // Predicated region
    $region10: #{_seq2seq_forward.1} parent=1 // pred_check
      _
    $region11: #{_seq2seq_forward.1} parent=1 // pred_check_branch
      %29 = sbr.rel (0) target = $region13
    $region12: #{_seq2seq_forward.1} parent=1 // pred_region
      _
    $region13: #{_seq2seq_forward.1} parent=1 // pred_fallthru
      _
    // Predicated region
    $region14: #{_seq2seq_forward.1} parent=1 // pred_check
      _
    $region15: #{_seq2seq_forward.1} parent=1 // pred_check_branch
      %31 = sbr.rel (0) target = $region17
    $region16: #{_seq2seq_forward.1} parent=1 // pred_region
      %33 = vsyncadd [#allocation5], 0
      %s34 = sshll.u32 %s4, 4
      %s35 = int_to_ptr.hbm [resolvable:$true] %s34
      %s36 = sshll.u32 [#allocation4], 4
      %s37 = int_to_ptr.vmem [resolvable:$true] %s36
      %42 = dma.hbm_to_vmem [thread:$0]  %s35, 8192, %s37, [#allocation5], 512, 512, 32
    $region17: #{_seq2seq_forward.1} parent=1 // pred_fallthru
      _
    // Predicated region
    $region18: #{_seq2seq_forward.1} parent=1 // pred_check
      _
    $region19: #{_seq2seq_forward.1} parent=1 // pred_check_branch
      %44 = sbr.rel (0) target = $region21
    $region20: #{_seq2seq_forward.1} parent=1 // pred_region
      %46 = vsyncadd [#allocation8], 0
      %s47 = sshll.u32 %s5, 4
      %s48 = int_to_ptr.hbm [resolvable:$true] %s47
      %s49 = sshll.u32 [#allocation7], 4
      %s50 = int_to_ptr.vmem [resolvable:$true] %s49
      %55 = dma.hbm_to_vmem [thread:$0]  %s48, 8192, %s50, [#allocation8], 512, 512, 32
    $region21: #{_seq2seq_forward.1} parent=1 // pred_fallthru
      _
    // Predicated region
    $region22: #{_seq2seq_forward.1} parent=1 // pred_check
      _
    $region23: #{_seq2seq_forward.1} parent=1 // pred_check_branch
      %57 = sbr.rel (0) target = $region25
    $region24: #{_seq2seq_forward.1} parent=1 // pred_region
      _
    $region25: #{_seq2seq_forward.1} parent=1 // pred_fallthru
      _
    // Predicated region
    $region26: #{_seq2seq_forward.1} parent=1 // pred_check
      _
    $region27: #{_seq2seq_forward.1} parent=1 // pred_check_branch
      %59 = sbr.rel (0) target = $region29
    $region28: #{_seq2seq_forward.1} parent=1 // pred_region
      _
    $region29: #{_seq2seq_forward.1} parent=1 // pred_fallthru
      _
    // Predicated region
    $region30: #{_seq2seq_forward.1} parent=1 // pred_check
      _
    $region31: #{_seq2seq_forward.1} parent=1 // pred_check_branch
      %61 = sbr.rel (0) target = $region33
    $region32: #{_seq2seq_forward.1} parent=1 // pred_region
      %63 = dma.done [#allocation5], 8192
    $region33: #{_seq2seq_forward.1} parent=1 // pred_fallthru
      _
    // Predicated region
    $region34: #{_seq2seq_forward.1} parent=1 // pred_check
      _
    $region35: #{_seq2seq_forward.1} parent=1 // pred_check_branch
      %65 = sbr.rel (0) target = $region37
    $region36: #{_seq2seq_forward.1} parent=1 // pred_region
      %67 = dma.done [#allocation8], 8192
    $region37: #{_seq2seq_forward.1} parent=1 // pred_fallthru
      _
    %v68 = vld [vmem:[%s1] sm:$0xff]
    %v69 = vld [vmem:[%s1 + $0x8] sm:$0xff]
    %v70 = vld [vmem:[%s1 + $0x10] sm:$0xff]
    %v71 = vld [vmem:[%s1 + $0x18] sm:$0xff]
    %v72 = vld [vmem:[%s2] sm:$0xff]
    %v73 = vld [vmem:[%s2 + $0x8] sm:$0xff]
    %v74 = vld [vmem:[%s2 + $0x10] sm:$0xff]
    %v75 = vld [vmem:[%s2 + $0x18] sm:$0xff]
    %v76 = vld [vmem:[%s2 + $0x20] sm:$0xff]
    %v77 = vld [vmem:[%s2 + $0x28] sm:$0xff]
    %v78 = vld [vmem:[%s2 + $0x30] sm:$0xff]
    %v79 = vld [vmem:[%s2 + $0x38] sm:$0xff]
    %v80 = vld [vmem:[%s2 + $0x40] sm:$0xff]
    %v81 = vld [vmem:[%s2 + $0x48] sm:$0xff]
    %v82 = vld [vmem:[%s2 + $0x50] sm:$0xff]
    %v83 = vld [vmem:[%s2 + $0x58] sm:$0xff]
    %v84 = vld [vmem:[%s2 + $0x60] sm:$0xff]
    %v85 = vld [vmem:[%s2 + $0x68] sm:$0xff]
    %v86 = vld [vmem:[%s2 + $0x70] sm:$0xff]
    %v87 = vld [vmem:[%s2 + $0x78] sm:$0xff]
    %v88 = vld [vmem:[%s2 + $0x80] sm:$0xff]
    %v89 = vld [vmem:[%s2 + $0x88] sm:$0xff]
    %v90 = vld [vmem:[%s2 + $0x90] sm:$0xff]
    %v91 = vld [vmem:[%s2 + $0x98] sm:$0xff]
    %v92 = vld [vmem:[%s2 + $0xa0] sm:$0xff]
    %v93 = vld [vmem:[%s2 + $0xa8] sm:$0xff]
    %v94 = vld [vmem:[%s2 + $0xb0] sm:$0xff]
    %v95 = vld [vmem:[%s2 + $0xb8] sm:$0xff]
    %v96 = vld [vmem:[%s2 + $0xc0] sm:$0xff]
    %v97 = vld [vmem:[%s2 + $0xc8] sm:$0xff]
    %v98 = vld [vmem:[%s2 + $0xd0] sm:$0xff]
    %v99 = vld [vmem:[%s2 + $0xd8] sm:$0xff]
    %v100 = vld [vmem:[%s2 + $0xe0] sm:$0xff]
    %v101 = vld [vmem:[%s2 + $0xe8] sm:$0xff]
    %v102 = vld [vmem:[%s2 + $0xf0] sm:$0xff]
    %v103 = vld [vmem:[%s2 + $0xf8] sm:$0xff]
    %v104 = vld [vmem:[%s2 + $0x100] sm:$0xff]
    %v105 = vld [vmem:[%s2 + $0x108] sm:$0xff]
    %v106 = vld [vmem:[%s2 + $0x110] sm:$0xff]
    %v107 = vld [vmem:[%s2 + $0x118] sm:$0xff]
    %v108 = vld [vmem:[%s2 + $0x120] sm:$0xff]
    %v109 = vld [vmem:[%s2 + $0x128] sm:$0xff]
    %v110 = vld [vmem:[%s2 + $0x130] sm:$0xff]
    %v111 = vld [vmem:[%s2 + $0x138] sm:$0xff]
    %v112 = vld [vmem:[%s2 + $0x140] sm:$0xff]
    %v113 = vld [vmem:[%s2 + $0x148] sm:$0xff]
    %v114 = vld [vmem:[%s2 + $0x150] sm:$0xff]
    %v115 = vld [vmem:[%s2 + $0x158] sm:$0xff]
    %v116 = vld [vmem:[%s2 + $0x160] sm:$0xff]
    %v117 = vld [vmem:[%s2 + $0x168] sm:$0xff]
    %v118 = vld [vmem:[%s2 + $0x170] sm:$0xff]
    %v119 = vld [vmem:[%s2 + $0x178] sm:$0xff]
    %v120 = vld [vmem:[%s2 + $0x180] sm:$0xff]
    %v121 = vld [vmem:[%s2 + $0x188] sm:$0xff]
    %v122 = vld [vmem:[%s2 + $0x190] sm:$0xff]
    %v123 = vld [vmem:[%s2 + $0x198] sm:$0xff]
    %v124 = vld [vmem:[%s2 + $0x1a0] sm:$0xff]
    %v125 = vld [vmem:[%s2 + $0x1a8] sm:$0xff]
    %v126 = vld [vmem:[%s2 + $0x1b0] sm:$0xff]
    %v127 = vld [vmem:[%s2 + $0x1b8] sm:$0xff]
    %v128 = vld [vmem:[%s2 + $0x1c0] sm:$0xff]
    %v129 = vld [vmem:[%s2 + $0x1c8] sm:$0xff]
    %v130 = vld [vmem:[%s2 + $0x1d0] sm:$0xff]
    %v131 = vld [vmem:[%s2 + $0x1d8] sm:$0xff]
    %v132 = vld [vmem:[%s2 + $0x1e0] sm:$0xff]
    %v133 = vld [vmem:[%s2 + $0x1e8] sm:$0xff]
    %v134 = vld [vmem:[%s2 + $0x1f0] sm:$0xff]
    %v135 = vld [vmem:[%s2 + $0x1f8] sm:$0xff]
    %136 = vmatpush.msra.mxu0 %v132
    %137 = vmatpush.msra.mxu0 %v128
    %138 = vmatpush.msra.mxu0 %v124
    %139 = vmatpush.msra.mxu0 %v120
    %140 = vmatpush.msra.mxu0 %v116
    %141 = vmatpush.msra.mxu0 %v112
    %142 = vmatpush.msra.mxu0 %v108
    %143 = vmatpush.msra.mxu0 %v104
    %144 = vmatpush.msra.mxu0 %v100
    %145 = vmatpush.msra.mxu0 %v96
    %146 = vmatpush.msra.mxu0 %v92
    %147 = vmatpush.msra.mxu0 %v88
    %148 = vmatpush.msra.mxu0 %v84
    %149 = vmatpush.msra.mxu0 %v80
    %150 = vmatpush.msra.mxu0 %v76
    %151 = vmatpush.msra.mxu0 %v72
    %152 = vmatmul.f32.gmra.mxu0 0.0
    %v153 = vpop.f32.mrf.mxu0
    %v154 = vadd.f32 0.0, %v153
    %155 = vdwg.mxu0
    %156 = vmatpush.msra.mxu0 %v133
    %157 = vmatpush.msra.mxu0 %v129
    %158 = vmatpush.msra.mxu0 %v125
    %159 = vmatpush.msra.mxu0 %v121
    %160 = vmatpush.msra.mxu0 %v117
    %161 = vmatpush.msra.mxu0 %v113
    %162 = vmatpush.msra.mxu0 %v109
    %163 = vmatpush.msra.mxu0 %v105
    %164 = vmatpush.msra.mxu0 %v101
    %165 = vmatpush.msra.mxu0 %v97
    %166 = vmatpush.msra.mxu0 %v93
    %167 = vmatpush.msra.mxu0 %v89
    %168 = vmatpush.msra.mxu0 %v85
    %169 = vmatpush.msra.mxu0 %v81
    %170 = vmatpush.msra.mxu0 %v77
    %171 = vmatpush.msra.mxu0 %v73
    %172 = vmatmul.f32.gmra.mxu0 0.0
    %v173 = vpop.f32.mrf.mxu0
    %v174 = vadd.f32 0.0, %v173
    %175 = vdwg.mxu0
    %176 = vmatpush.msra.mxu0 %v134
    %177 = vmatpush.msra.mxu0 %v130
    %178 = vmatpush.msra.mxu0 %v126
    %179 = vmatpush.msra.mxu0 %v122
    %180 = vmatpush.msra.mxu0 %v118
    %181 = vmatpush.msra.mxu0 %v114
    %182 = vmatpush.msra.mxu0 %v110
    %183 = vmatpush.msra.mxu0 %v106
    %184 = vmatpush.msra.mxu0 %v102
    %185 = vmatpush.msra.mxu0 %v98
    %186 = vmatpush.msra.mxu0 %v94
    %187 = vmatpush.msra.mxu0 %v90
    %188 = vmatpush.msra.mxu0 %v86
    %189 = vmatpush.msra.mxu0 %v82
    %190 = vmatpush.msra.mxu0 %v78
    %191 = vmatpush.msra.mxu0 %v74
    %192 = vmatmul.f32.gmra.mxu0 0.0
    %v193 = vpop.f32.mrf.mxu0
    %v194 = vadd.f32 0.0, %v193
    %195 = vdwg.mxu0
    %196 = vmatpush.msra.mxu0 %v135
    %197 = vmatpush.msra.mxu0 %v131
    %198 = vmatpush.msra.mxu0 %v127
    %199 = vmatpush.msra.mxu0 %v123
    %200 = vmatpush.msra.mxu0 %v119
    %201 = vmatpush.msra.mxu0 %v115
    %202 = vmatpush.msra.mxu0 %v111
    %203 = vmatpush.msra.mxu0 %v107
    %204 = vmatpush.msra.mxu0 %v103
    %205 = vmatpush.msra.mxu0 %v99
    %206 = vmatpush.msra.mxu0 %v95
    %207 = vmatpush.msra.mxu0 %v91
    %208 = vmatpush.msra.mxu0 %v87
    %209 = vmatpush.msra.mxu0 %v83
    %210 = vmatpush.msra.mxu0 %v79
    %211 = vmatpush.msra.mxu0 %v75
    %212 = vmatmul.f32.gmra.mxu0 0.0
    %v213 = vpop.f32.mrf.mxu0
    %v214 = vadd.f32 0.0, %v213
    %215 = vdwg.mxu0
    %v216 = vadd.f32 %v68, %v154
    %v217 = vadd.f32 %v69, %v174
    %v218 = vadd.f32 %v70, %v194
    %v219 = vadd.f32 %v71, %v214
    %v220 = vxor.u32 %v216, 2147483648
    %v221 = vmul.f32 %v220, 1.442695
    %v222 = vpow.pop %v221
    %v223 = vadd.f32 %v222, 1.0
    %v224 = vrcp.pop %v223
    %v225 = vmul.f32 %v223, %v224
    %v226 = vsub.f32 1.0, %v225
    %v227 = vmul.f32 %v224, %v226
    %v228 = vadd.f32 %v224, %v227
    %vm229 = vweird.f32 %v223
    %vm230 = vweird.f32 %v224
    %vm231 = vmor %vm229, %vm230
    %v232 = vsel %vm231, %v224, %v228
    %v233 = vand.u32 2147483647, %v223
    %vm234 = vcmp.eq.f32.partialorder %v233, 8.507059e+37
    %v235 = vand.u32 %v223, 2147483648
    %v236 = vor.u32 1.1754944e-38, %v235
    %v237 = vsel %vm234, %v236, %v232
    %v238 = vmul.f32 1.0, %v237
    %v239 = vxor.u32 %v217, 2147483648
    %v240 = vmul.f32 %v239, 1.442695
    %v241 = vpow.pop %v240
    %v242 = vadd.f32 %v241, 1.0
    %v243 = vrcp.pop %v242
    %v244 = vmul.f32 %v242, %v243
    %v245 = vsub.f32 1.0, %v244
    %v246 = vmul.f32 %v243, %v245
    %v247 = vadd.f32 %v243, %v246
    %vm248 = vweird.f32 %v242
    %vm249 = vweird.f32 %v243
    %vm250 = vmor %vm248, %vm249
    %v251 = vsel %vm250, %v243, %v247
    %v252 = vand.u32 2147483647, %v242
    %vm253 = vcmp.eq.f32.partialorder %v252, 8.507059e+37
    %v254 = vand.u32 %v242, 2147483648
    %v255 = vor.u32 1.1754944e-38, %v254
    %v256 = vsel %vm253, %v255, %v251
    %v257 = vmul.f32 1.0, %v256
    %v258 = vtanh.pop %v218
    %v259 = vxor.u32 %v219, 2147483648
    %v260 = vmul.f32 %v259, 1.442695
    %v261 = vpow.pop %v260
    %v262 = vadd.f32 %v261, 1.0
    %v263 = vrcp.pop %v262
    %v264 = vmul.f32 %v262, %v263
    %v265 = vsub.f32 1.0, %v264
    %v266 = vmul.f32 %v263, %v265
    %v267 = vadd.f32 %v263, %v266
    %vm268 = vweird.f32 %v262
    %vm269 = vweird.f32 %v263
    %vm270 = vmor %vm268, %vm269
    %v271 = vsel %vm270, %v263, %v267
    %v272 = vand.u32 2147483647, %v262
    %vm273 = vcmp.eq.f32.partialorder %v272, 8.507059e+37
    %v274 = vand.u32 %v262, 2147483648
    %v275 = vor.u32 1.1754944e-38, %v274
    %v276 = vsel %vm273, %v275, %v271
    %v277 = vmul.f32 1.0, %v276
    %v278 = vmul.f32 %v257, 0.0
    %v279 = vmul.f32 %v238, %v258
    %v280 = vadd.f32 %v278, %v279
    %v281 = vtanh.pop %v280
    %v282 = vmul.f32 %v277, %v281
    %s283 = scalar_lea.vmem %s1, 32
    %v284 = vld [vmem:[%s283] sm:$0xff]
    %v285 = vld [vmem:[%s283 + $0x8] sm:$0xff]
    %v286 = vld [vmem:[%s283 + $0x10] sm:$0xff]
    %v287 = vld [vmem:[%s283 + $0x18] sm:$0xff]
    %288 = vmatpush.msra.mxu0 %v132
    %289 = vmatpush.msra.mxu0 %v128
    %290 = vmatpush.msra.mxu0 %v124
    %291 = vmatpush.msra.mxu0 %v120
    %292 = vmatpush.msra.mxu0 %v116
    %293 = vmatpush.msra.mxu0 %v112
    %294 = vmatpush.msra.mxu0 %v108
    %295 = vmatpush.msra.mxu0 %v104
    %296 = vmatpush.msra.mxu0 %v100
    %297 = vmatpush.msra.mxu0 %v96
    %298 = vmatpush.msra.mxu0 %v92
    %299 = vmatpush.msra.mxu0 %v88
    %300 = vmatpush.msra.mxu0 %v84
    %301 = vmatpush.msra.mxu0 %v80
    %302 = vmatpush.msra.mxu0 %v76
    %303 = vmatpush.msra.mxu0 %v72
    %304 = vmatmul.f32.gmra.mxu0 %v282
    %v305 = vpop.f32.mrf.mxu0
    %v306 = vadd.f32 0.0, %v305
    %307 = vdwg.mxu0
    %308 = vmatpush.msra.mxu0 %v133
    %309 = vmatpush.msra.mxu0 %v129
    %310 = vmatpush.msra.mxu0 %v125
    %311 = vmatpush.msra.mxu0 %v121
    %312 = vmatpush.msra.mxu0 %v117
    %313 = vmatpush.msra.mxu0 %v113
    %314 = vmatpush.msra.mxu0 %v109
    %315 = vmatpush.msra.mxu0 %v105
    %316 = vmatpush.msra.mxu0 %v101
    %317 = vmatpush.msra.mxu0 %v97
    %318 = vmatpush.msra.mxu0 %v93
    %319 = vmatpush.msra.mxu0 %v89
    %320 = vmatpush.msra.mxu0 %v85
    %321 = vmatpush.msra.mxu0 %v81
    %322 = vmatpush.msra.mxu0 %v77
    %323 = vmatpush.msra.mxu0 %v73
    %324 = vmatmul.f32.gmra.mxu0 %v282
    %v325 = vpop.f32.mrf.mxu0
    %v326 = vadd.f32 0.0, %v325
    %327 = vdwg.mxu0
    %328 = vmatpush.msra.mxu0 %v134
    %329 = vmatpush.msra.mxu0 %v130
    %330 = vmatpush.msra.mxu0 %v126
    %331 = vmatpush.msra.mxu0 %v122
    %332 = vmatpush.msra.mxu0 %v118
    %333 = vmatpush.msra.mxu0 %v114
    %334 = vmatpush.msra.mxu0 %v110
    %335 = vmatpush.msra.mxu0 %v106
    %336 = vmatpush.msra.mxu0 %v102
    %337 = vmatpush.msra.mxu0 %v98
    %338 = vmatpush.msra.mxu0 %v94
    %339 = vmatpush.msra.mxu0 %v90
    %340 = vmatpush.msra.mxu0 %v86
    %341 = vmatpush.msra.mxu0 %v82
    %342 = vmatpush.msra.mxu0 %v78
    %343 = vmatpush.msra.mxu0 %v74
    %344 = vmatmul.f32.gmra.mxu0 %v282
    %v345 = vpop.f32.mrf.mxu0
    %v346 = vadd.f32 0.0, %v345
    %347 = vdwg.mxu0
    %348 = vmatpush.msra.mxu0 %v135
    %349 = vmatpush.msra.mxu0 %v131
    %350 = vmatpush.msra.mxu0 %v127
    %351 = vmatpush.msra.mxu0 %v123
    %352 = vmatpush.msra.mxu0 %v119
    %353 = vmatpush.msra.mxu0 %v115
    %354 = vmatpush.msra.mxu0 %v111
    %355 = vmatpush.msra.mxu0 %v107
    %356 = vmatpush.msra.mxu0 %v103
    %357 = vmatpush.msra.mxu0 %v99
    %358 = vmatpush.msra.mxu0 %v95
    %359 = vmatpush.msra.mxu0 %v91
    %360 = vmatpush.msra.mxu0 %v87
    %361 = vmatpush.msra.mxu0 %v83
    %362 = vmatpush.msra.mxu0 %v79
    %363 = vmatpush.msra.mxu0 %v75
    %364 = vmatmul.f32.gmra.mxu0 %v282
    %v365 = vpop.f32.mrf.mxu0
    %v366 = vadd.f32 0.0, %v365
    %367 = vdwg.mxu0
    %v368 = vadd.f32 %v284, %v306
    %v369 = vadd.f32 %v285, %v326
    %v370 = vadd.f32 %v286, %v346
    %v371 = vadd.f32 %v287, %v366
    %v372 = vxor.u32 %v368, 2147483648
    %v373 = vmul.f32 %v372, 1.442695
    %v374 = vpow.pop %v373
    %v375 = vadd.f32 %v374, 1.0
    %v376 = vrcp.pop %v375
    %v377 = vmul.f32 %v375, %v376
    %v378 = vsub.f32 1.0, %v377
    %v379 = vmul.f32 %v376, %v378
    %v380 = vadd.f32 %v376, %v379
    %vm381 = vweird.f32 %v375
    %vm382 = vweird.f32 %v376
    %vm383 = vmor %vm381, %vm382
    %v384 = vsel %vm383, %v376, %v380
    %v385 = vand.u32 2147483647, %v375
    %vm386 = vcmp.eq.f32.partialorder %v385, 8.507059e+37
    %v387 = vand.u32 %v375, 2147483648
    %v388 = vor.u32 1.1754944e-38, %v387
    %v389 = vsel %vm386, %v388, %v384
    %v390 = vmul.f32 1.0, %v389
    %v391 = vxor.u32 %v369, 2147483648
    %v392 = vmul.f32 %v391, 1.442695
    %v393 = vpow.pop %v392
    %v394 = vadd.f32 %v393, 1.0
    %v395 = vrcp.pop %v394
    %v396 = vmul.f32 %v394, %v395
    %v397 = vsub.f32 1.0, %v396
    %v398 = vmul.f32 %v395, %v397
    %v399 = vadd.f32 %v395, %v398
    %vm400 = vweird.f32 %v394
    %vm401 = vweird.f32 %v395
    %vm402 = vmor %vm400, %vm401
    %v403 = vsel %vm402, %v395, %v399
    %v404 = vand.u32 2147483647, %v394
    %vm405 = vcmp.eq.f32.partialorder %v404, 8.507059e+37
    %v406 = vand.u32 %v394, 2147483648
    %v407 = vor.u32 1.1754944e-38, %v406
    %v408 = vsel %vm405, %v407, %v403
    %v409 = vmul.f32 1.0, %v408
    %v410 = vtanh.pop %v370
    %v411 = vxor.u32 %v371, 2147483648
    %v412 = vmul.f32 %v411, 1.442695
    %v413 = vpow.pop %v412
    %v414 = vadd.f32 %v413, 1.0
    %v415 = vrcp.pop %v414
    %v416 = vmul.f32 %v414, %v415
    %v417 = vsub.f32 1.0, %v416
    %v418 = vmul.f32 %v415, %v417
    %v419 = vadd.f32 %v415, %v418
    %vm420 = vweird.f32 %v414
    %vm421 = vweird.f32 %v415
    %vm422 = vmor %vm420, %vm421
    %v423 = vsel %vm422, %v415, %v419
    %v424 = vand.u32 2147483647, %v414
    %vm425 = vcmp.eq.f32.partialorder %v424, 8.507059e+37
    %v426 = vand.u32 %v414, 2147483648
    %v427 = vor.u32 1.1754944e-38, %v426
    %v428 = vsel %vm425, %v427, %v423
    %v429 = vmul.f32 1.0, %v428
    %v430 = vmul.f32 %v409, %v280
    %v431 = vmul.f32 %v390, %v410
    %v432 = vadd.f32 %v430, %v431
    %v433 = vtanh.pop %v432
    %v434 = vmul.f32 %v429, %v433
    %s435 = scalar_lea.vmem %s1, 64
    %v436 = vld [vmem:[%s435] sm:$0xff]
    %v437 = vld [vmem:[%s435 + $0x8] sm:$0xff]
    %v438 = vld [vmem:[%s435 + $0x10] sm:$0xff]
    %v439 = vld [vmem:[%s435 + $0x18] sm:$0xff]
    %440 = vmatpush.msra.mxu0 %v132
    %441 = vmatpush.msra.mxu0 %v128
    %442 = vmatpush.msra.mxu0 %v124
    %443 = vmatpush.msra.mxu0 %v120
    %444 = vmatpush.msra.mxu0 %v116
    %445 = vmatpush.msra.mxu0 %v112
    %446 = vmatpush.msra.mxu0 %v108
    %447 = vmatpush.msra.mxu0 %v104
    %448 = vmatpush.msra.mxu0 %v100
    %449 = vmatpush.msra.mxu0 %v96
    %450 = vmatpush.msra.mxu0 %v92
    %451 = vmatpush.msra.mxu0 %v88
    %452 = vmatpush.msra.mxu0 %v84
    %453 = vmatpush.msra.mxu0 %v80
    %454 = vmatpush.msra.mxu0 %v76
    %455 = vmatpush.msra.mxu0 %v72
    %456 = vmatmul.f32.gmra.mxu0 %v434
    %v457 = vpop.f32.mrf.mxu0
    %v458 = vadd.f32 0.0, %v457
    %459 = vdwg.mxu0
    %460 = vmatpush.msra.mxu0 %v133
    %461 = vmatpush.msra.mxu0 %v129
    %462 = vmatpush.msra.mxu0 %v125
    %463 = vmatpush.msra.mxu0 %v121
    %464 = vmatpush.msra.mxu0 %v117
    %465 = vmatpush.msra.mxu0 %v113
    %466 = vmatpush.msra.mxu0 %v109
    %467 = vmatpush.msra.mxu0 %v105
    %468 = vmatpush.msra.mxu0 %v101
    %469 = vmatpush.msra.mxu0 %v97
    %470 = vmatpush.msra.mxu0 %v93
    %471 = vmatpush.msra.mxu0 %v89
    %472 = vmatpush.msra.mxu0 %v85
    %473 = vmatpush.msra.mxu0 %v81
    %474 = vmatpush.msra.mxu0 %v77
    %475 = vmatpush.msra.mxu0 %v73
    %476 = vmatmul.f32.gmra.mxu0 %v434
    %v477 = vpop.f32.mrf.mxu0
    %v478 = vadd.f32 0.0, %v477
    %479 = vdwg.mxu0
    %480 = vmatpush.msra.mxu0 %v134
    %481 = vmatpush.msra.mxu0 %v130
    %482 = vmatpush.msra.mxu0 %v126
    %483 = vmatpush.msra.mxu0 %v122
    %484 = vmatpush.msra.mxu0 %v118
    %485 = vmatpush.msra.mxu0 %v114
    %486 = vmatpush.msra.mxu0 %v110
    %487 = vmatpush.msra.mxu0 %v106
    %488 = vmatpush.msra.mxu0 %v102
    %489 = vmatpush.msra.mxu0 %v98
    %490 = vmatpush.msra.mxu0 %v94
    %491 = vmatpush.msra.mxu0 %v90
    %492 = vmatpush.msra.mxu0 %v86
    %493 = vmatpush.msra.mxu0 %v82
    %494 = vmatpush.msra.mxu0 %v78
    %495 = vmatpush.msra.mxu0 %v74
    %496 = vmatmul.f32.gmra.mxu0 %v434
    %v497 = vpop.f32.mrf.mxu0
    %v498 = vadd.f32 0.0, %v497
    %499 = vdwg.mxu0
    %500 = vmatpush.msra.mxu0 %v135
    %501 = vmatpush.msra.mxu0 %v131
    %502 = vmatpush.msra.mxu0 %v127
    %503 = vmatpush.msra.mxu0 %v123
    %504 = vmatpush.msra.mxu0 %v119
    %505 = vmatpush.msra.mxu0 %v115
    %506 = vmatpush.msra.mxu0 %v111
    %507 = vmatpush.msra.mxu0 %v107
    %508 = vmatpush.msra.mxu0 %v103
    %509 = vmatpush.msra.mxu0 %v99
    %510 = vmatpush.msra.mxu0 %v95
    %511 = vmatpush.msra.mxu0 %v91
    %512 = vmatpush.msra.mxu0 %v87
    %513 = vmatpush.msra.mxu0 %v83
    %514 = vmatpush.msra.mxu0 %v79
    %515 = vmatpush.msra.mxu0 %v75
    %516 = vmatmul.f32.gmra.mxu0 %v434
    %v517 = vpop.f32.mrf.mxu0
    %v518 = vadd.f32 0.0, %v517
    %519 = vdwg.mxu0
    %v520 = vadd.f32 %v436, %v458
    %v521 = vadd.f32 %v437, %v478
    %v522 = vadd.f32 %v438, %v498
    %v523 = vadd.f32 %v439, %v518
    %v524 = vxor.u32 %v520, 2147483648
    %v525 = vmul.f32 %v524, 1.442695
    %v526 = vpow.pop %v525
    %v527 = vadd.f32 %v526, 1.0
    %v528 = vrcp.pop %v527
    %v529 = vmul.f32 %v527, %v528
    %v530 = vsub.f32 1.0, %v529
    %v531 = vmul.f32 %v528, %v530
    %v532 = vadd.f32 %v528, %v531
    %vm533 = vweird.f32 %v527
    %vm534 = vweird.f32 %v528
    %vm535 = vmor %vm533, %vm534
    %v536 = vsel %vm535, %v528, %v532
    %v537 = vand.u32 2147483647, %v527
    %vm538 = vcmp.eq.f32.partialorder %v537, 8.507059e+37
    %v539 = vand.u32 %v527, 2147483648
    %v540 = vor.u32 1.1754944e-38, %v539
    %v541 = vsel %vm538, %v540, %v536
    %v542 = vmul.f32 1.0, %v541
    %v543 = vxor.u32 %v521, 2147483648
    %v544 = vmul.f32 %v543, 1.442695
    %v545 = vpow.pop %v544
    %v546 = vadd.f32 %v545, 1.0
    %v547 = vrcp.pop %v546
    %v548 = vmul.f32 %v546, %v547
    %v549 = vsub.f32 1.0, %v548
    %v550 = vmul.f32 %v547, %v549
    %v551 = vadd.f32 %v547, %v550
    %vm552 = vweird.f32 %v546
    %vm553 = vweird.f32 %v547
    %vm554 = vmor %vm552, %vm553
    %v555 = vsel %vm554, %v547, %v551
    %v556 = vand.u32 2147483647, %v546
    %vm557 = vcmp.eq.f32.partialorder %v556, 8.507059e+37
    %v558 = vand.u32 %v546, 2147483648
    %v559 = vor.u32 1.1754944e-38, %v558
    %v560 = vsel %vm557, %v559, %v555
    %v561 = vmul.f32 1.0, %v560
    %v562 = vtanh.pop %v522
    %v563 = vxor.u32 %v523, 2147483648
    %v564 = vmul.f32 %v563, 1.442695
    %v565 = vpow.pop %v564
    %v566 = vadd.f32 %v565, 1.0
    %v567 = vrcp.pop %v566
    %v568 = vmul.f32 %v566, %v567
    %v569 = vsub.f32 1.0, %v568
    %v570 = vmul.f32 %v567, %v569
    %v571 = vadd.f32 %v567, %v570
    %vm572 = vweird.f32 %v566
    %vm573 = vweird.f32 %v567
    %vm574 = vmor %vm572, %vm573
    %v575 = vsel %vm574, %v567, %v571
    %v576 = vand.u32 2147483647, %v566
    %vm577 = vcmp.eq.f32.partialorder %v576, 8.507059e+37
    %v578 = vand.u32 %v566, 2147483648
    %v579 = vor.u32 1.1754944e-38, %v578
    %v580 = vsel %vm577, %v579, %v575
    %v581 = vmul.f32 1.0, %v580
    %v582 = vmul.f32 %v561, %v432
    %v583 = vmul.f32 %v542, %v562
    %v584 = vadd.f32 %v582, %v583
    %v585 = vtanh.pop %v584
    %v586 = vmul.f32 %v581, %v585
    %s587 = scalar_lea.vmem %s1, 96
    %v588 = vld [vmem:[%s587] sm:$0xff]
    %v589 = vld [vmem:[%s587 + $0x8] sm:$0xff]
    %v590 = vld [vmem:[%s587 + $0x10] sm:$0xff]
    %v591 = vld [vmem:[%s587 + $0x18] sm:$0xff]
    %592 = vmatpush.msra.mxu0 %v132
    %593 = vmatpush.msra.mxu0 %v128
    %594 = vmatpush.msra.mxu0 %v124
    %595 = vmatpush.msra.mxu0 %v120
    %596 = vmatpush.msra.mxu0 %v116
    %597 = vmatpush.msra.mxu0 %v112
    %598 = vmatpush.msra.mxu0 %v108
    %599 = vmatpush.msra.mxu0 %v104
    %600 = vmatpush.msra.mxu0 %v100
    %601 = vmatpush.msra.mxu0 %v96
    %602 = vmatpush.msra.mxu0 %v92
    %603 = vmatpush.msra.mxu0 %v88
    %604 = vmatpush.msra.mxu0 %v84
    %605 = vmatpush.msra.mxu0 %v80
    %606 = vmatpush.msra.mxu0 %v76
    %607 = vmatpush.msra.mxu0 %v72
    %608 = vmatmul.f32.gmra.mxu0 %v586
    %v609 = vpop.f32.mrf.mxu0
    %v610 = vadd.f32 0.0, %v609
    %611 = vdwg.mxu0
    %612 = vmatpush.msra.mxu0 %v133
    %613 = vmatpush.msra.mxu0 %v129
    %614 = vmatpush.msra.mxu0 %v125
    %615 = vmatpush.msra.mxu0 %v121
    %616 = vmatpush.msra.mxu0 %v117
    %617 = vmatpush.msra.mxu0 %v113
    %618 = vmatpush.msra.mxu0 %v109
    %619 = vmatpush.msra.mxu0 %v105
    %620 = vmatpush.msra.mxu0 %v101
    %621 = vmatpush.msra.mxu0 %v97
    %622 = vmatpush.msra.mxu0 %v93
    %623 = vmatpush.msra.mxu0 %v89
    %624 = vmatpush.msra.mxu0 %v85
    %625 = vmatpush.msra.mxu0 %v81
    %626 = vmatpush.msra.mxu0 %v77
    %627 = vmatpush.msra.mxu0 %v73
    %628 = vmatmul.f32.gmra.mxu0 %v586
    %v629 = vpop.f32.mrf.mxu0
    %v630 = vadd.f32 0.0, %v629
    %631 = vdwg.mxu0
    %632 = vmatpush.msra.mxu0 %v134
    %633 = vmatpush.msra.mxu0 %v130
    %634 = vmatpush.msra.mxu0 %v126
    %635 = vmatpush.msra.mxu0 %v122
    %636 = vmatpush.msra.mxu0 %v118
    %637 = vmatpush.msra.mxu0 %v114
    %638 = vmatpush.msra.mxu0 %v110
    %639 = vmatpush.msra.mxu0 %v106
    %640 = vmatpush.msra.mxu0 %v102
    %641 = vmatpush.msra.mxu0 %v98
    %642 = vmatpush.msra.mxu0 %v94
    %643 = vmatpush.msra.mxu0 %v90
    %644 = vmatpush.msra.mxu0 %v86
    %645 = vmatpush.msra.mxu0 %v82
    %646 = vmatpush.msra.mxu0 %v78
    %647 = vmatpush.msra.mxu0 %v74
    %648 = vmatmul.f32.gmra.mxu0 %v586
    %v649 = vpop.f32.mrf.mxu0
    %v650 = vadd.f32 0.0, %v649
    %651 = vdwg.mxu0
    %652 = vmatpush.msra.mxu0 %v135
    %653 = vmatpush.msra.mxu0 %v131
    %654 = vmatpush.msra.mxu0 %v127
    %655 = vmatpush.msra.mxu0 %v123
    %656 = vmatpush.msra.mxu0 %v119
    %657 = vmatpush.msra.mxu0 %v115
    %658 = vmatpush.msra.mxu0 %v111
    %659 = vmatpush.msra.mxu0 %v107
    %660 = vmatpush.msra.mxu0 %v103
    %661 = vmatpush.msra.mxu0 %v99
    %662 = vmatpush.msra.mxu0 %v95
    %663 = vmatpush.msra.mxu0 %v91
    %664 = vmatpush.msra.mxu0 %v87
    %665 = vmatpush.msra.mxu0 %v83
    %666 = vmatpush.msra.mxu0 %v79
    %667 = vmatpush.msra.mxu0 %v75
    %668 = vmatmul.f32.gmra.mxu0 %v586
    %v669 = vpop.f32.mrf.mxu0
    %v670 = vadd.f32 0.0, %v669
    %671 = vdwg.mxu0
    %v672 = vadd.f32 %v588, %v610
    %v673 = vadd.f32 %v589, %v630
    %v674 = vadd.f32 %v590, %v650
    %v675 = vadd.f32 %v591, %v670
    %v676 = vxor.u32 %v672, 2147483648
    %v677 = vmul.f32 %v676, 1.442695
    %v678 = vpow.pop %v677
    %v679 = vadd.f32 %v678, 1.0
    %v680 = vrcp.pop %v679
    %v681 = vmul.f32 %v679, %v680
    %v682 = vsub.f32 1.0, %v681
    %v683 = vmul.f32 %v680, %v682
    %v684 = vadd.f32 %v680, %v683
    %vm685 = vweird.f32 %v679
    %vm686 = vweird.f32 %v680
    %vm687 = vmor %vm685, %vm686
    %v688 = vsel %vm687, %v680, %v684
    %v689 = vand.u32 2147483647, %v679
    %vm690 = vcmp.eq.f32.partialorder %v689, 8.507059e+37
    %v691 = vand.u32 %v679, 2147483648
    %v692 = vor.u32 1.1754944e-38, %v691
    %v693 = vsel %vm690, %v692, %v688
    %v694 = vmul.f32 1.0, %v693
    %v695 = vxor.u32 %v673, 2147483648
    %v696 = vmul.f32 %v695, 1.442695
    %v697 = vpow.pop %v696
    %v698 = vadd.f32 %v697, 1.0
    %v699 = vrcp.pop %v698
    %v700 = vmul.f32 %v698, %v699
    %v701 = vsub.f32 1.0, %v700
    %v702 = vmul.f32 %v699, %v701
    %v703 = vadd.f32 %v699, %v702
    %vm704 = vweird.f32 %v698
    %vm705 = vweird.f32 %v699
    %vm706 = vmor %vm704, %vm705
    %v707 = vsel %vm706, %v699, %v703
    %v708 = vand.u32 2147483647, %v698
    %vm709 = vcmp.eq.f32.partialorder %v708, 8.507059e+37
    %v710 = vand.u32 %v698, 2147483648
    %v711 = vor.u32 1.1754944e-38, %v710
    %v712 = vsel %vm709, %v711, %v707
    %v713 = vmul.f32 1.0, %v712
    %v714 = vtanh.pop %v674
    %v715 = vxor.u32 %v675, 2147483648
    %v716 = vmul.f32 %v715, 1.442695
    %v717 = vpow.pop %v716
    %v718 = vadd.f32 %v717, 1.0
    %v719 = vrcp.pop %v718
    %v720 = vmul.f32 %v718, %v719
    %v721 = vsub.f32 1.0, %v720
    %v722 = vmul.f32 %v719, %v721
    %v723 = vadd.f32 %v719, %v722
    %vm724 = vweird.f32 %v718
    %vm725 = vweird.f32 %v719
    %vm726 = vmor %vm724, %vm725
    %v727 = vsel %vm726, %v719, %v723
    %v728 = vand.u32 2147483647, %v718
    %vm729 = vcmp.eq.f32.partialorder %v728, 8.507059e+37
    %v730 = vand.u32 %v718, 2147483648
    %v731 = vor.u32 1.1754944e-38, %v730
    %v732 = vsel %vm729, %v731, %v727
    %v733 = vmul.f32 1.0, %v732
    %v734 = vmul.f32 %v713, %v584
    %v735 = vmul.f32 %v694, %v714
    %v736 = vadd.f32 %v734, %v735
    %v737 = vtanh.pop %v736
    %v738 = vmul.f32 %v733, %v737
    %s739 = scalar_lea.vmem %s1, 128
    %v740 = vld [vmem:[%s739] sm:$0xff]
    %v741 = vld [vmem:[%s739 + $0x8] sm:$0xff]
    %v742 = vld [vmem:[%s739 + $0x10] sm:$0xff]
    %v743 = vld [vmem:[%s739 + $0x18] sm:$0xff]
    %744 = vmatpush.msra.mxu0 %v132
    %745 = vmatpush.msra.mxu0 %v128
    %746 = vmatpush.msra.mxu0 %v124
    %747 = vmatpush.msra.mxu0 %v120
    %748 = vmatpush.msra.mxu0 %v116
    %749 = vmatpush.msra.mxu0 %v112
    %750 = vmatpush.msra.mxu0 %v108
    %751 = vmatpush.msra.mxu0 %v104
    %752 = vmatpush.msra.mxu0 %v100
    %753 = vmatpush.msra.mxu0 %v96
    %754 = vmatpush.msra.mxu0 %v92
    %755 = vmatpush.msra.mxu0 %v88
    %756 = vmatpush.msra.mxu0 %v84
    %757 = vmatpush.msra.mxu0 %v80
    %758 = vmatpush.msra.mxu0 %v76
    %759 = vmatpush.msra.mxu0 %v72
    %760 = vmatmul.f32.gmra.mxu0 %v738
    %v761 = vpop.f32.mrf.mxu0
    %v762 = vadd.f32 0.0, %v761
    %763 = vdwg.mxu0
    %764 = vmatpush.msra.mxu0 %v133
    %765 = vmatpush.msra.mxu0 %v129
    %766 = vmatpush.msra.mxu0 %v125
    %767 = vmatpush.msra.mxu0 %v121
    %768 = vmatpush.msra.mxu0 %v117
    %769 = vmatpush.msra.mxu0 %v113
    %770 = vmatpush.msra.mxu0 %v109
    %771 = vmatpush.msra.mxu0 %v105
    %772 = vmatpush.msra.mxu0 %v101
    %773 = vmatpush.msra.mxu0 %v97
    %774 = vmatpush.msra.mxu0 %v93
    %775 = vmatpush.msra.mxu0 %v89
    %776 = vmatpush.msra.mxu0 %v85
    %777 = vmatpush.msra.mxu0 %v81
    %778 = vmatpush.msra.mxu0 %v77
    %779 = vmatpush.msra.mxu0 %v73
    %780 = vmatmul.f32.gmra.mxu0 %v738
    %v781 = vpop.f32.mrf.mxu0
    %v782 = vadd.f32 0.0, %v781
    %783 = vdwg.mxu0
    %784 = vmatpush.msra.mxu0 %v134
    %785 = vmatpush.msra.mxu0 %v130
    %786 = vmatpush.msra.mxu0 %v126
    %787 = vmatpush.msra.mxu0 %v122
    %788 = vmatpush.msra.mxu0 %v118
    %789 = vmatpush.msra.mxu0 %v114
    %790 = vmatpush.msra.mxu0 %v110
    %791 = vmatpush.msra.mxu0 %v106
    %792 = vmatpush.msra.mxu0 %v102
    %793 = vmatpush.msra.mxu0 %v98
    %794 = vmatpush.msra.mxu0 %v94
    %795 = vmatpush.msra.mxu0 %v90
    %796 = vmatpush.msra.mxu0 %v86
    %797 = vmatpush.msra.mxu0 %v82
    %798 = vmatpush.msra.mxu0 %v78
    %799 = vmatpush.msra.mxu0 %v74
    %800 = vmatmul.f32.gmra.mxu0 %v738
    %v801 = vpop.f32.mrf.mxu0
    %v802 = vadd.f32 0.0, %v801
    %803 = vdwg.mxu0
    %804 = vmatpush.msra.mxu0 %v135
    %805 = vmatpush.msra.mxu0 %v131
    %806 = vmatpush.msra.mxu0 %v127
    %807 = vmatpush.msra.mxu0 %v123
    %808 = vmatpush.msra.mxu0 %v119
    %809 = vmatpush.msra.mxu0 %v115
    %810 = vmatpush.msra.mxu0 %v111
    %811 = vmatpush.msra.mxu0 %v107
    %812 = vmatpush.msra.mxu0 %v103
    %813 = vmatpush.msra.mxu0 %v99
    %814 = vmatpush.msra.mxu0 %v95
    %815 = vmatpush.msra.mxu0 %v91
    %816 = vmatpush.msra.mxu0 %v87
    %817 = vmatpush.msra.mxu0 %v83
    %818 = vmatpush.msra.mxu0 %v79
    %819 = vmatpush.msra.mxu0 %v75
    %820 = vmatmul.f32.gmra.mxu0 %v738
    %v821 = vpop.f32.mrf.mxu0
    %v822 = vadd.f32 0.0, %v821
    %823 = vdwg.mxu0
    %v824 = vadd.f32 %v740, %v762
    %v825 = vadd.f32 %v741, %v782
    %v826 = vadd.f32 %v742, %v802
    %v827 = vadd.f32 %v743, %v822
    %v828 = vxor.u32 %v824, 2147483648
    %v829 = vmul.f32 %v828, 1.442695
    %v830 = vpow.pop %v829
    %v831 = vadd.f32 %v830, 1.0
    %v832 = vrcp.pop %v831
    %v833 = vmul.f32 %v831, %v832
    %v834 = vsub.f32 1.0, %v833
    %v835 = vmul.f32 %v832, %v834
    %v836 = vadd.f32 %v832, %v835
    %vm837 = vweird.f32 %v831
    %vm838 = vweird.f32 %v832
    %vm839 = vmor %vm837, %vm838
    %v840 = vsel %vm839, %v832, %v836
    %v841 = vand.u32 2147483647, %v831
    %vm842 = vcmp.eq.f32.partialorder %v841, 8.507059e+37
    %v843 = vand.u32 %v831, 2147483648
    %v844 = vor.u32 1.1754944e-38, %v843
    %v845 = vsel %vm842, %v844, %v840
    %v846 = vmul.f32 1.0, %v845
    %v847 = vxor.u32 %v825, 2147483648
    %v848 = vmul.f32 %v847, 1.442695
    %v849 = vpow.pop %v848
    %v850 = vadd.f32 %v849, 1.0
    %v851 = vrcp.pop %v850
    %v852 = vmul.f32 %v850, %v851
    %v853 = vsub.f32 1.0, %v852
    %v854 = vmul.f32 %v851, %v853
    %v855 = vadd.f32 %v851, %v854
    %vm856 = vweird.f32 %v850
    %vm857 = vweird.f32 %v851
    %vm858 = vmor %vm856, %vm857
    %v859 = vsel %vm858, %v851, %v855
    %v860 = vand.u32 2147483647, %v850
    %vm861 = vcmp.eq.f32.partialorder %v860, 8.507059e+37
    %v862 = vand.u32 %v850, 2147483648
    %v863 = vor.u32 1.1754944e-38, %v862
    %v864 = vsel %vm861, %v863, %v859
    %v865 = vmul.f32 1.0, %v864
    %v866 = vtanh.pop %v826
    %v867 = vxor.u32 %v827, 2147483648
    %v868 = vmul.f32 %v867, 1.442695
    %v869 = vpow.pop %v868
    %v870 = vadd.f32 %v869, 1.0
    %v871 = vrcp.pop %v870
    %v872 = vmul.f32 %v870, %v871
    %v873 = vsub.f32 1.0, %v872
    %v874 = vmul.f32 %v871, %v873
    %v875 = vadd.f32 %v871, %v874
    %vm876 = vweird.f32 %v870
    %vm877 = vweird.f32 %v871
    %vm878 = vmor %vm876, %vm877
    %v879 = vsel %vm878, %v871, %v875
    %v880 = vand.u32 2147483647, %v870
    %vm881 = vcmp.eq.f32.partialorder %v880, 8.507059e+37
    %v882 = vand.u32 %v870, 2147483648
    %v883 = vor.u32 1.1754944e-38, %v882
    %v884 = vsel %vm881, %v883, %v879
    %v885 = vmul.f32 1.0, %v884
    %v886 = vmul.f32 %v865, %v736
    %v887 = vmul.f32 %v846, %v866
    %v888 = vadd.f32 %v886, %v887
    %v889 = vtanh.pop %v888
    %v890 = vmul.f32 %v885, %v889
    %s891 = scalar_lea.vmem %s1, 160
    %v892 = vld [vmem:[%s891] sm:$0xff]
    %v893 = vld [vmem:[%s891 + $0x8] sm:$0xff]
    %v894 = vld [vmem:[%s891 + $0x10] sm:$0xff]
    %v895 = vld [vmem:[%s891 + $0x18] sm:$0xff]
    %896 = vmatpush.msra.mxu0 %v132
    %897 = vmatpush.msra.mxu0 %v128
    %898 = vmatpush.msra.mxu0 %v124
    %899 = vmatpush.msra.mxu0 %v120
    %900 = vmatpush.msra.mxu0 %v116
    %901 = vmatpush.msra.mxu0 %v112
    %902 = vmatpush.msra.mxu0 %v108
    %903 = vmatpush.msra.mxu0 %v104
    %904 = vmatpush.msra.mxu0 %v100
    %905 = vmatpush.msra.mxu0 %v96
    %906 = vmatpush.msra.mxu0 %v92
    %907 = vmatpush.msra.mxu0 %v88
    %908 = vmatpush.msra.mxu0 %v84
    %909 = vmatpush.msra.mxu0 %v80
    %910 = vmatpush.msra.mxu0 %v76
    %911 = vmatpush.msra.mxu0 %v72
    %912 = vmatmul.f32.gmra.mxu0 %v890
    %v913 = vpop.f32.mrf.mxu0
    %v914 = vadd.f32 0.0, %v913
    %915 = vdwg.mxu0
    %916 = vmatpush.msra.mxu0 %v133
    %917 = vmatpush.msra.mxu0 %v129
    %918 = vmatpush.msra.mxu0 %v125
    %919 = vmatpush.msra.mxu0 %v121
    %920 = vmatpush.msra.mxu0 %v117
    %921 = vmatpush.msra.mxu0 %v113
    %922 = vmatpush.msra.mxu0 %v109
    %923 = vmatpush.msra.mxu0 %v105
    %924 = vmatpush.msra.mxu0 %v101
    %925 = vmatpush.msra.mxu0 %v97
    %926 = vmatpush.msra.mxu0 %v93
    %927 = vmatpush.msra.mxu0 %v89
    %928 = vmatpush.msra.mxu0 %v85
    %929 = vmatpush.msra.mxu0 %v81
    %930 = vmatpush.msra.mxu0 %v77
    %931 = vmatpush.msra.mxu0 %v73
    %932 = vmatmul.f32.gmra.mxu0 %v890
    %v933 = vpop.f32.mrf.mxu0
    %v934 = vadd.f32 0.0, %v933
    %935 = vdwg.mxu0
    %936 = vmatpush.msra.mxu0 %v134
    %937 = vmatpush.msra.mxu0 %v130
    %938 = vmatpush.msra.mxu0 %v126
    %939 = vmatpush.msra.mxu0 %v122
    %940 = vmatpush.msra.mxu0 %v118
    %941 = vmatpush.msra.mxu0 %v114
    %942 = vmatpush.msra.mxu0 %v110
    %943 = vmatpush.msra.mxu0 %v106
    %944 = vmatpush.msra.mxu0 %v102
    %945 = vmatpush.msra.mxu0 %v98
    %946 = vmatpush.msra.mxu0 %v94
    %947 = vmatpush.msra.mxu0 %v90
    %948 = vmatpush.msra.mxu0 %v86
    %949 = vmatpush.msra.mxu0 %v82
    %950 = vmatpush.msra.mxu0 %v78
    %951 = vmatpush.msra.mxu0 %v74
    %952 = vmatmul.f32.gmra.mxu0 %v890
    %v953 = vpop.f32.mrf.mxu0
    %v954 = vadd.f32 0.0, %v953
    %955 = vdwg.mxu0
    %956 = vmatpush.msra.mxu0 %v135
    %957 = vmatpush.msra.mxu0 %v131
    %958 = vmatpush.msra.mxu0 %v127
    %959 = vmatpush.msra.mxu0 %v123
    %960 = vmatpush.msra.mxu0 %v119
    %961 = vmatpush.msra.mxu0 %v115
    %962 = vmatpush.msra.mxu0 %v111
    %963 = vmatpush.msra.mxu0 %v107
    %964 = vmatpush.msra.mxu0 %v103
    %965 = vmatpush.msra.mxu0 %v99
    %966 = vmatpush.msra.mxu0 %v95
    %967 = vmatpush.msra.mxu0 %v91
    %968 = vmatpush.msra.mxu0 %v87
    %969 = vmatpush.msra.mxu0 %v83
    %970 = vmatpush.msra.mxu0 %v79
    %971 = vmatpush.msra.mxu0 %v75
    %972 = vmatmul.f32.gmra.mxu0 %v890
    %v973 = vpop.f32.mrf.mxu0
    %v974 = vadd.f32 0.0, %v973
    %975 = vdwg.mxu0
    %v976 = vadd.f32 %v892, %v914
    %v977 = vadd.f32 %v893, %v934
    %v978 = vadd.f32 %v894, %v954
    %v979 = vadd.f32 %v895, %v974
    %v980 = vxor.u32 %v976, 2147483648
    %v981 = vmul.f32 %v980, 1.442695
    %v982 = vpow.pop %v981
    %v983 = vadd.f32 %v982, 1.0
    %v984 = vrcp.pop %v983
    %v985 = vmul.f32 %v983, %v984
    %v986 = vsub.f32 1.0, %v985
    %v987 = vmul.f32 %v984, %v986
    %v988 = vadd.f32 %v984, %v987
    %vm989 = vweird.f32 %v983
    %vm990 = vweird.f32 %v984
    %vm991 = vmor %vm989, %vm990
    %v992 = vsel %vm991, %v984, %v988
    %v993 = vand.u32 2147483647, %v983
    %vm994 = vcmp.eq.f32.partialorder %v993, 8.507059e+37
    %v995 = vand.u32 %v983, 2147483648
    %v996 = vor.u32 1.1754944e-38, %v995
    %v997 = vsel %vm994, %v996, %v992
    %v998 = vmul.f32 1.0, %v997
    %v999 = vxor.u32 %v977, 2147483648
    %v1000 = vmul.f32 %v999, 1.442695
    %v1001 = vpow.pop %v1000
    %v1002 = vadd.f32 %v1001, 1.0
    %v1003 = vrcp.pop %v1002
    %v1004 = vmul.f32 %v1002, %v1003
    %v1005 = vsub.f32 1.0, %v1004
    %v1006 = vmul.f32 %v1003, %v1005
    %v1007 = vadd.f32 %v1003, %v1006
    %vm1008 = vweird.f32 %v1002
    %vm1009 = vweird.f32 %v1003
    %vm1010 = vmor %vm1008, %vm1009
    %v1011 = vsel %vm1010, %v1003, %v1007
    %v1012 = vand.u32 2147483647, %v1002
    %vm1013 = vcmp.eq.f32.partialorder %v1012, 8.507059e+37
    %v1014 = vand.u32 %v1002, 2147483648
    %v1015 = vor.u32 1.1754944e-38, %v1014
    %v1016 = vsel %vm1013, %v1015, %v1011
    %v1017 = vmul.f32 1.0, %v1016
    %v1018 = vtanh.pop %v978
    %v1019 = vxor.u32 %v979, 2147483648
    %v1020 = vmul.f32 %v1019, 1.442695
    %v1021 = vpow.pop %v1020
    %v1022 = vadd.f32 %v1021, 1.0
    %v1023 = vrcp.pop %v1022
    %v1024 = vmul.f32 %v1022, %v1023
    %v1025 = vsub.f32 1.0, %v1024
    %v1026 = vmul.f32 %v1023, %v1025
    %v1027 = vadd.f32 %v1023, %v1026
    %vm1028 = vweird.f32 %v1022
    %vm1029 = vweird.f32 %v1023
    %vm1030 = vmor %vm1028, %vm1029
    %v1031 = vsel %vm1030, %v1023, %v1027
    %v1032 = vand.u32 2147483647, %v1022
    %vm1033 = vcmp.eq.f32.partialorder %v1032, 8.507059e+37
    %v1034 = vand.u32 %v1022, 2147483648
    %v1035 = vor.u32 1.1754944e-38, %v1034
    %v1036 = vsel %vm1033, %v1035, %v1031
    %v1037 = vmul.f32 1.0, %v1036
    %v1038 = vmul.f32 %v1017, %v888
    %v1039 = vmul.f32 %v998, %v1018
    %v1040 = vadd.f32 %v1038, %v1039
    %v1041 = vtanh.pop %v1040
    %v1042 = vmul.f32 %v1037, %v1041
    %s1043 = scalar_lea.vmem %s1, 192
    %v1044 = vld [vmem:[%s1043] sm:$0xff]
    %v1045 = vld [vmem:[%s1043 + $0x8] sm:$0xff]
    %v1046 = vld [vmem:[%s1043 + $0x10] sm:$0xff]
    %v1047 = vld [vmem:[%s1043 + $0x18] sm:$0xff]
    %1048 = vmatpush.msra.mxu0 %v132
    %1049 = vmatpush.msra.mxu0 %v128
    %1050 = vmatpush.msra.mxu0 %v124
    %1051 = vmatpush.msra.mxu0 %v120
    %1052 = vmatpush.msra.mxu0 %v116
    %1053 = vmatpush.msra.mxu0 %v112
    %1054 = vmatpush.msra.mxu0 %v108
    %1055 = vmatpush.msra.mxu0 %v104
    %1056 = vmatpush.msra.mxu0 %v100
    %1057 = vmatpush.msra.mxu0 %v96
    %1058 = vmatpush.msra.mxu0 %v92
    %1059 = vmatpush.msra.mxu0 %v88
    %1060 = vmatpush.msra.mxu0 %v84
    %1061 = vmatpush.msra.mxu0 %v80
    %1062 = vmatpush.msra.mxu0 %v76
    %1063 = vmatpush.msra.mxu0 %v72
    %1064 = vmatmul.f32.gmra.mxu0 %v1042
    %v1065 = vpop.f32.mrf.mxu0
    %v1066 = vadd.f32 0.0, %v1065
    %1067 = vdwg.mxu0
    %1068 = vmatpush.msra.mxu0 %v133
    %1069 = vmatpush.msra.mxu0 %v129
    %1070 = vmatpush.msra.mxu0 %v125
    %1071 = vmatpush.msra.mxu0 %v121
    %1072 = vmatpush.msra.mxu0 %v117
    %1073 = vmatpush.msra.mxu0 %v113
    %1074 = vmatpush.msra.mxu0 %v109
    %1075 = vmatpush.msra.mxu0 %v105
    %1076 = vmatpush.msra.mxu0 %v101
    %1077 = vmatpush.msra.mxu0 %v97
    %1078 = vmatpush.msra.mxu0 %v93
    %1079 = vmatpush.msra.mxu0 %v89
    %1080 = vmatpush.msra.mxu0 %v85
    %1081 = vmatpush.msra.mxu0 %v81
    %1082 = vmatpush.msra.mxu0 %v77
    %1083 = vmatpush.msra.mxu0 %v73
    %1084 = vmatmul.f32.gmra.mxu0 %v1042
    %v1085 = vpop.f32.mrf.mxu0
    %v1086 = vadd.f32 0.0, %v1085
    %1087 = vdwg.mxu0
    %1088 = vmatpush.msra.mxu0 %v134
    %1089 = vmatpush.msra.mxu0 %v130
    %1090 = vmatpush.msra.mxu0 %v126
    %1091 = vmatpush.msra.mxu0 %v122
    %1092 = vmatpush.msra.mxu0 %v118
    %1093 = vmatpush.msra.mxu0 %v114
    %1094 = vmatpush.msra.mxu0 %v110
    %1095 = vmatpush.msra.mxu0 %v106
    %1096 = vmatpush.msra.mxu0 %v102
    %1097 = vmatpush.msra.mxu0 %v98
    %1098 = vmatpush.msra.mxu0 %v94
    %1099 = vmatpush.msra.mxu0 %v90
    %1100 = vmatpush.msra.mxu0 %v86
    %1101 = vmatpush.msra.mxu0 %v82
    %1102 = vmatpush.msra.mxu0 %v78
    %1103 = vmatpush.msra.mxu0 %v74
    %1104 = vmatmul.f32.gmra.mxu0 %v1042
    %v1105 = vpop.f32.mrf.mxu0
    %v1106 = vadd.f32 0.0, %v1105
    %1107 = vdwg.mxu0
    %1108 = vmatpush.msra.mxu0 %v135
    %1109 = vmatpush.msra.mxu0 %v131
    %1110 = vmatpush.msra.mxu0 %v127
    %1111 = vmatpush.msra.mxu0 %v123
    %1112 = vmatpush.msra.mxu0 %v119
    %1113 = vmatpush.msra.mxu0 %v115
    %1114 = vmatpush.msra.mxu0 %v111
    %1115 = vmatpush.msra.mxu0 %v107
    %1116 = vmatpush.msra.mxu0 %v103
    %1117 = vmatpush.msra.mxu0 %v99
    %1118 = vmatpush.msra.mxu0 %v95
    %1119 = vmatpush.msra.mxu0 %v91
    %1120 = vmatpush.msra.mxu0 %v87
    %1121 = vmatpush.msra.mxu0 %v83
    %1122 = vmatpush.msra.mxu0 %v79
    %1123 = vmatpush.msra.mxu0 %v75
    %1124 = vmatmul.f32.gmra.mxu0 %v1042
    %v1125 = vpop.f32.mrf.mxu0
    %v1126 = vadd.f32 0.0, %v1125
    %1127 = vdwg.mxu0
    %v1128 = vadd.f32 %v1044, %v1066
    %v1129 = vadd.f32 %v1045, %v1086
    %v1130 = vadd.f32 %v1046, %v1106
    %v1131 = vadd.f32 %v1047, %v1126
    %v1132 = vxor.u32 %v1128, 2147483648
    %v1133 = vmul.f32 %v1132, 1.442695
    %v1134 = vpow.pop %v1133
    %v1135 = vadd.f32 %v1134, 1.0
    %v1136 = vrcp.pop %v1135
    %v1137 = vmul.f32 %v1135, %v1136
    %v1138 = vsub.f32 1.0, %v1137
    %v1139 = vmul.f32 %v1136, %v1138
    %v1140 = vadd.f32 %v1136, %v1139
    %vm1141 = vweird.f32 %v1135
    %vm1142 = vweird.f32 %v1136
    %vm1143 = vmor %vm1141, %vm1142
    %v1144 = vsel %vm1143, %v1136, %v1140
    %v1145 = vand.u32 2147483647, %v1135
    %vm1146 = vcmp.eq.f32.partialorder %v1145, 8.507059e+37
    %v1147 = vand.u32 %v1135, 2147483648
    %v1148 = vor.u32 1.1754944e-38, %v1147
    %v1149 = vsel %vm1146, %v1148, %v1144
    %v1150 = vmul.f32 1.0, %v1149
    %v1151 = vxor.u32 %v1129, 2147483648
    %v1152 = vmul.f32 %v1151, 1.442695
    %v1153 = vpow.pop %v1152
    %v1154 = vadd.f32 %v1153, 1.0
    %v1155 = vrcp.pop %v1154
    %v1156 = vmul.f32 %v1154, %v1155
    %v1157 = vsub.f32 1.0, %v1156
    %v1158 = vmul.f32 %v1155, %v1157
    %v1159 = vadd.f32 %v1155, %v1158
    %vm1160 = vweird.f32 %v1154
    %vm1161 = vweird.f32 %v1155
    %vm1162 = vmor %vm1160, %vm1161
    %v1163 = vsel %vm1162, %v1155, %v1159
    %v1164 = vand.u32 2147483647, %v1154
    %vm1165 = vcmp.eq.f32.partialorder %v1164, 8.507059e+37
    %v1166 = vand.u32 %v1154, 2147483648
    %v1167 = vor.u32 1.1754944e-38, %v1166
    %v1168 = vsel %vm1165, %v1167, %v1163
    %v1169 = vmul.f32 1.0, %v1168
    %v1170 = vtanh.pop %v1130
    %v1171 = vxor.u32 %v1131, 2147483648
    %v1172 = vmul.f32 %v1171, 1.442695
    %v1173 = vpow.pop %v1172
    %v1174 = vadd.f32 %v1173, 1.0
    %v1175 = vrcp.pop %v1174
    %v1176 = vmul.f32 %v1174, %v1175
    %v1177 = vsub.f32 1.0, %v1176
    %v1178 = vmul.f32 %v1175, %v1177
    %v1179 = vadd.f32 %v1175, %v1178
    %vm1180 = vweird.f32 %v1174
    %vm1181 = vweird.f32 %v1175
    %vm1182 = vmor %vm1180, %vm1181
    %v1183 = vsel %vm1182, %v1175, %v1179
    %v1184 = vand.u32 2147483647, %v1174
    %vm1185 = vcmp.eq.f32.partialorder %v1184, 8.507059e+37
    %v1186 = vand.u32 %v1174, 2147483648
    %v1187 = vor.u32 1.1754944e-38, %v1186
    %v1188 = vsel %vm1185, %v1187, %v1183
    %v1189 = vmul.f32 1.0, %v1188
    %v1190 = vmul.f32 %v1169, %v1040
    %v1191 = vmul.f32 %v1150, %v1170
    %v1192 = vadd.f32 %v1190, %v1191
    %v1193 = vtanh.pop %v1192
    %v1194 = vmul.f32 %v1189, %v1193
    %s1195 = scalar_lea.vmem %s1, 224
    %v1196 = vld [vmem:[%s1195] sm:$0xff]
    %v1197 = vld [vmem:[%s1195 + $0x8] sm:$0xff]
    %v1198 = vld [vmem:[%s1195 + $0x10] sm:$0xff]
    %v1199 = vld [vmem:[%s1195 + $0x18] sm:$0xff]
    %1200 = vmatpush.msra.mxu0 %v132
    %1201 = vmatpush.msra.mxu0 %v128
    %1202 = vmatpush.msra.mxu0 %v124
    %1203 = vmatpush.msra.mxu0 %v120
    %1204 = vmatpush.msra.mxu0 %v116
    %1205 = vmatpush.msra.mxu0 %v112
    %1206 = vmatpush.msra.mxu0 %v108
    %1207 = vmatpush.msra.mxu0 %v104
    %1208 = vmatpush.msra.mxu0 %v100
    %1209 = vmatpush.msra.mxu0 %v96
    %1210 = vmatpush.msra.mxu0 %v92
    %1211 = vmatpush.msra.mxu0 %v88
    %1212 = vmatpush.msra.mxu0 %v84
    %1213 = vmatpush.msra.mxu0 %v80
    %1214 = vmatpush.msra.mxu0 %v76
    %1215 = vmatpush.msra.mxu0 %v72
    %1216 = vmatmul.f32.gmra.mxu0 %v1194
    %v1217 = vpop.f32.mrf.mxu0
    %v1218 = vadd.f32 0.0, %v1217
    %1219 = vdwg.mxu0
    %1220 = vmatpush.msra.mxu0 %v133
    %1221 = vmatpush.msra.mxu0 %v129
    %1222 = vmatpush.msra.mxu0 %v125
    %1223 = vmatpush.msra.mxu0 %v121
    %1224 = vmatpush.msra.mxu0 %v117
    %1225 = vmatpush.msra.mxu0 %v113
    %1226 = vmatpush.msra.mxu0 %v109
    %1227 = vmatpush.msra.mxu0 %v105
    %1228 = vmatpush.msra.mxu0 %v101
    %1229 = vmatpush.msra.mxu0 %v97
    %1230 = vmatpush.msra.mxu0 %v93
    %1231 = vmatpush.msra.mxu0 %v89
    %1232 = vmatpush.msra.mxu0 %v85
    %1233 = vmatpush.msra.mxu0 %v81
    %1234 = vmatpush.msra.mxu0 %v77
    %1235 = vmatpush.msra.mxu0 %v73
    %1236 = vmatmul.f32.gmra.mxu0 %v1194
    %v1237 = vpop.f32.mrf.mxu0
    %v1238 = vadd.f32 0.0, %v1237
    %1239 = vdwg.mxu0
    %1240 = vmatpush.msra.mxu0 %v134
    %1241 = vmatpush.msra.mxu0 %v130
    %1242 = vmatpush.msra.mxu0 %v126
    %1243 = vmatpush.msra.mxu0 %v122
    %1244 = vmatpush.msra.mxu0 %v118
    %1245 = vmatpush.msra.mxu0 %v114
    %1246 = vmatpush.msra.mxu0 %v110
    %1247 = vmatpush.msra.mxu0 %v106
    %1248 = vmatpush.msra.mxu0 %v102
    %1249 = vmatpush.msra.mxu0 %v98
    %1250 = vmatpush.msra.mxu0 %v94
    %1251 = vmatpush.msra.mxu0 %v90
    %1252 = vmatpush.msra.mxu0 %v86
    %1253 = vmatpush.msra.mxu0 %v82
    %1254 = vmatpush.msra.mxu0 %v78
    %1255 = vmatpush.msra.mxu0 %v74
    %1256 = vmatmul.f32.gmra.mxu0 %v1194
    %v1257 = vpop.f32.mrf.mxu0
    %v1258 = vadd.f32 0.0, %v1257
    %1259 = vdwg.mxu0
    %1260 = vmatpush.msra.mxu0 %v135
    %1261 = vmatpush.msra.mxu0 %v131
    %1262 = vmatpush.msra.mxu0 %v127
    %1263 = vmatpush.msra.mxu0 %v123
    %1264 = vmatpush.msra.mxu0 %v119
    %1265 = vmatpush.msra.mxu0 %v115
    %1266 = vmatpush.msra.mxu0 %v111
    %1267 = vmatpush.msra.mxu0 %v107
    %1268 = vmatpush.msra.mxu0 %v103
    %1269 = vmatpush.msra.mxu0 %v99
    %1270 = vmatpush.msra.mxu0 %v95
    %1271 = vmatpush.msra.mxu0 %v91
    %1272 = vmatpush.msra.mxu0 %v87
    %1273 = vmatpush.msra.mxu0 %v83
    %1274 = vmatpush.msra.mxu0 %v79
    %1275 = vmatpush.msra.mxu0 %v75
    %1276 = vmatmul.f32.gmra.mxu0 %v1194
    %v1277 = vpop.f32.mrf.mxu0
    %v1278 = vadd.f32 0.0, %v1277
    %1279 = vdwg.mxu0
    %v1280 = vadd.f32 %v1196, %v1218
    %v1281 = vadd.f32 %v1197, %v1238
    %v1282 = vadd.f32 %v1198, %v1258
    %v1283 = vadd.f32 %v1199, %v1278
    %v1284 = vxor.u32 %v1280, 2147483648
    %v1285 = vmul.f32 %v1284, 1.442695
    %v1286 = vpow.pop %v1285
    %v1287 = vadd.f32 %v1286, 1.0
    %v1288 = vrcp.pop %v1287
    %v1289 = vmul.f32 %v1287, %v1288
    %v1290 = vsub.f32 1.0, %v1289
    %v1291 = vmul.f32 %v1288, %v1290
    %v1292 = vadd.f32 %v1288, %v1291
    %vm1293 = vweird.f32 %v1287
    %vm1294 = vweird.f32 %v1288
    %vm1295 = vmor %vm1293, %vm1294
    %v1296 = vsel %vm1295, %v1288, %v1292
    %v1297 = vand.u32 2147483647, %v1287
    %vm1298 = vcmp.eq.f32.partialorder %v1297, 8.507059e+37
    %v1299 = vand.u32 %v1287, 2147483648
    %v1300 = vor.u32 1.1754944e-38, %v1299
    %v1301 = vsel %vm1298, %v1300, %v1296
    %v1302 = vmul.f32 1.0, %v1301
    %v1303 = vxor.u32 %v1281, 2147483648
    %v1304 = vmul.f32 %v1303, 1.442695
    %v1305 = vpow.pop %v1304
    %v1306 = vadd.f32 %v1305, 1.0
    %v1307 = vrcp.pop %v1306
    %v1308 = vmul.f32 %v1306, %v1307
    %v1309 = vsub.f32 1.0, %v1308
    %v1310 = vmul.f32 %v1307, %v1309
    %v1311 = vadd.f32 %v1307, %v1310
    %vm1312 = vweird.f32 %v1306
    %vm1313 = vweird.f32 %v1307
    %vm1314 = vmor %vm1312, %vm1313
    %v1315 = vsel %vm1314, %v1307, %v1311
    %v1316 = vand.u32 2147483647, %v1306
    %vm1317 = vcmp.eq.f32.partialorder %v1316, 8.507059e+37
    %v1318 = vand.u32 %v1306, 2147483648
    %v1319 = vor.u32 1.1754944e-38, %v1318
    %v1320 = vsel %vm1317, %v1319, %v1315
    %v1321 = vmul.f32 1.0, %v1320
    %v1322 = vtanh.pop %v1282
    %v1323 = vxor.u32 %v1283, 2147483648
    %v1324 = vmul.f32 %v1323, 1.442695
    %v1325 = vpow.pop %v1324
    %v1326 = vadd.f32 %v1325, 1.0
    %v1327 = vrcp.pop %v1326
    %v1328 = vmul.f32 %v1326, %v1327
    %v1329 = vsub.f32 1.0, %v1328
    %v1330 = vmul.f32 %v1327, %v1329
    %v1331 = vadd.f32 %v1327, %v1330
    %vm1332 = vweird.f32 %v1326
    %vm1333 = vweird.f32 %v1327
    %vm1334 = vmor %vm1332, %vm1333
    %v1335 = vsel %vm1334, %v1327, %v1331
    %v1336 = vand.u32 2147483647, %v1326
    %vm1337 = vcmp.eq.f32.partialorder %v1336, 8.507059e+37
    %v1338 = vand.u32 %v1326, 2147483648
    %v1339 = vor.u32 1.1754944e-38, %v1338
    %v1340 = vsel %vm1337, %v1339, %v1335
    %v1341 = vmul.f32 1.0, %v1340
    %v1342 = vmul.f32 %v1321, %v1192
    %v1343 = vmul.f32 %v1302, %v1322
    %v1344 = vadd.f32 %v1342, %v1343
    %v1345 = vtanh.pop %v1344
    %v1346 = vmul.f32 %v1341, %v1345
    %1347 = vst [vmem:[#allocation9] sm:$0xff] 0.0
    %v1348 = vlaneseq
    %v1349 = vand.u32 %v1348, 127
    %v1350 = vcvt.s32.f32 %v1349
    %vm1351 = vcmp.lt.s32.totalorder %v1349, 32
    %s1352 = sld [smem:[#allocation3]]
    %p1353 = scmp.ne.s32.totalorder %s1352, 0
    %s1354 = scalar_select %p1353, 1, 0
    %s1355 = scvt.s32.f32 %s1354
    %v1356 = vld [vmem:[%s3] sm:$0xff]
    %v1357 = vld [vmem:[%s3 + $0x8] sm:$0xff]
    %v1358 = vld [vmem:[%s3 + $0x10] sm:$0xff]
    %v1359 = vld [vmem:[%s3 + $0x18] sm:$0xff]
    %v1360 = vstv %s1355
    %v1361 = vmul.f32 %v1356, %v1360
    %v1362 = vmul.f32 %v1357, %v1360
    %v1363 = vmul.f32 %v1358, %v1360
    %v1364 = vmul.f32 %v1359, %v1360
    %s1365 = ssub.f32 1.0, %s1355
    %v1366 = vstv %s1365
    %v1367 = vmul.f32 %v1366, 0.0
    %v1368 = vadd.f32 %v1361, %v1367
    %v1369 = vadd.f32 %v1362, %v1367
    %v1370 = vadd.f32 %v1363, %v1367
    %v1371 = vadd.f32 %v1364, %v1367
    %v1372 = vld [vmem:[#allocation4] sm:$0xff]
    %v1373 = vld [vmem:[#allocation4 + $0x8] sm:$0xff]
    %v1374 = vld [vmem:[#allocation4 + $0x10] sm:$0xff]
    %v1375 = vld [vmem:[#allocation4 + $0x18] sm:$0xff]
    %v1376 = vld [vmem:[#allocation4 + $0x20] sm:$0xff]
    %v1377 = vld [vmem:[#allocation4 + $0x28] sm:$0xff]
    %v1378 = vld [vmem:[#allocation4 + $0x30] sm:$0xff]
    %v1379 = vld [vmem:[#allocation4 + $0x38] sm:$0xff]
    %v1380 = vld [vmem:[#allocation4 + $0x40] sm:$0xff]
    %v1381 = vld [vmem:[#allocation4 + $0x48] sm:$0xff]
    %v1382 = vld [vmem:[#allocation4 + $0x50] sm:$0xff]
    %v1383 = vld [vmem:[#allocation4 + $0x58] sm:$0xff]
    %v1384 = vld [vmem:[#allocation4 + $0x60] sm:$0xff]
    %v1385 = vld [vmem:[#allocation4 + $0x68] sm:$0xff]
    %v1386 = vld [vmem:[#allocation4 + $0x70] sm:$0xff]
    %v1387 = vld [vmem:[#allocation4 + $0x78] sm:$0xff]
    %v1388 = vld [vmem:[#allocation4 + $0x80] sm:$0xff]
    %v1389 = vld [vmem:[#allocation4 + $0x88] sm:$0xff]
    %v1390 = vld [vmem:[#allocation4 + $0x90] sm:$0xff]
    %v1391 = vld [vmem:[#allocation4 + $0x98] sm:$0xff]
    %v1392 = vld [vmem:[#allocation4 + $0xa0] sm:$0xff]
    %v1393 = vld [vmem:[#allocation4 + $0xa8] sm:$0xff]
    %v1394 = vld [vmem:[#allocation4 + $0xb0] sm:$0xff]
    %v1395 = vld [vmem:[#allocation4 + $0xb8] sm:$0xff]
    %v1396 = vld [vmem:[#allocation4 + $0xc0] sm:$0xff]
    %v1397 = vld [vmem:[#allocation4 + $0xc8] sm:$0xff]
    %v1398 = vld [vmem:[#allocation4 + $0xd0] sm:$0xff]
    %v1399 = vld [vmem:[#allocation4 + $0xd8] sm:$0xff]
    %v1400 = vld [vmem:[#allocation4 + $0xe0] sm:$0xff]
    %v1401 = vld [vmem:[#allocation4 + $0xe8] sm:$0xff]
    %v1402 = vld [vmem:[#allocation4 + $0xf0] sm:$0xff]
    %v1403 = vld [vmem:[#allocation4 + $0xf8] sm:$0xff]
    %v1404 = vld [vmem:[#allocation4 + $0x100] sm:$0xff]
    %v1405 = vld [vmem:[#allocation4 + $0x108] sm:$0xff]
    %v1406 = vld [vmem:[#allocation4 + $0x110] sm:$0xff]
    %v1407 = vld [vmem:[#allocation4 + $0x118] sm:$0xff]
    %v1408 = vld [vmem:[#allocation4 + $0x120] sm:$0xff]
    %v1409 = vld [vmem:[#allocation4 + $0x128] sm:$0xff]
    %v1410 = vld [vmem:[#allocation4 + $0x130] sm:$0xff]
    %v1411 = vld [vmem:[#allocation4 + $0x138] sm:$0xff]
    %v1412 = vld [vmem:[#allocation4 + $0x140] sm:$0xff]
    %v1413 = vld [vmem:[#allocation4 + $0x148] sm:$0xff]
    %v1414 = vld [vmem:[#allocation4 + $0x150] sm:$0xff]
    %v1415 = vld [vmem:[#allocation4 + $0x158] sm:$0xff]
    %v1416 = vld [vmem:[#allocation4 + $0x160] sm:$0xff]
    %v1417 = vld [vmem:[#allocation4 + $0x168] sm:$0xff]
    %v1418 = vld [vmem:[#allocation4 + $0x170] sm:$0xff]
    %v1419 = vld [vmem:[#allocation4 + $0x178] sm:$0xff]
    %v1420 = vld [vmem:[#allocation4 + $0x180] sm:$0xff]
    %v1421 = vld [vmem:[#allocation4 + $0x188] sm:$0xff]
    %v1422 = vld [vmem:[#allocation4 + $0x190] sm:$0xff]
    %v1423 = vld [vmem:[#allocation4 + $0x198] sm:$0xff]
    %v1424 = vld [vmem:[#allocation4 + $0x1a0] sm:$0xff]
    %v1425 = vld [vmem:[#allocation4 + $0x1a8] sm:$0xff]
    %v1426 = vld [vmem:[#allocation4 + $0x1b0] sm:$0xff]
    %v1427 = vld [vmem:[#allocation4 + $0x1b8] sm:$0xff]
    %v1428 = vld [vmem:[#allocation4 + $0x1c0] sm:$0xff]
    %v1429 = vld [vmem:[#allocation4 + $0x1c8] sm:$0xff]
    %v1430 = vld [vmem:[#allocation4 + $0x1d0] sm:$0xff]
    %v1431 = vld [vmem:[#allocation4 + $0x1d8] sm:$0xff]
    %v1432 = vld [vmem:[#allocation4 + $0x1e0] sm:$0xff]
    %v1433 = vld [vmem:[#allocation4 + $0x1e8] sm:$0xff]
    %v1434 = vld [vmem:[#allocation4 + $0x1f0] sm:$0xff]
    %v1435 = vld [vmem:[#allocation4 + $0x1f8] sm:$0xff]
    %1436 = vmatpush.msra.mxu0 %v1432
    %1437 = vmatpush.msra.mxu0 %v1428
    %1438 = vmatpush.msra.mxu0 %v1424
    %1439 = vmatpush.msra.mxu0 %v1420
    %1440 = vmatpush.msra.mxu0 %v1416
    %1441 = vmatpush.msra.mxu0 %v1412
    %1442 = vmatpush.msra.mxu0 %v1408
    %1443 = vmatpush.msra.mxu0 %v1404
    %1444 = vmatpush.msra.mxu0 %v1400
    %1445 = vmatpush.msra.mxu0 %v1396
    %1446 = vmatpush.msra.mxu0 %v1392
    %1447 = vmatpush.msra.mxu0 %v1388
    %1448 = vmatpush.msra.mxu0 %v1384
    %1449 = vmatpush.msra.mxu0 %v1380
    %1450 = vmatpush.msra.mxu0 %v1376
    %1451 = vmatpush.msra.mxu0 %v1372
    %1452 = vmatmul.f32.gmra.mxu0 %v1346
    %v1453 = vpop.f32.mrf.mxu0
    %v1454 = vadd.f32 0.0, %v1453
    %1455 = vdwg.mxu0
    %1456 = vmatpush.msra.mxu0 %v1433
    %1457 = vmatpush.msra.mxu0 %v1429
    %1458 = vmatpush.msra.mxu0 %v1425
    %1459 = vmatpush.msra.mxu0 %v1421
    %1460 = vmatpush.msra.mxu0 %v1417
    %1461 = vmatpush.msra.mxu0 %v1413
    %1462 = vmatpush.msra.mxu0 %v1409
    %1463 = vmatpush.msra.mxu0 %v1405
    %1464 = vmatpush.msra.mxu0 %v1401
    %1465 = vmatpush.msra.mxu0 %v1397
    %1466 = vmatpush.msra.mxu0 %v1393
    %1467 = vmatpush.msra.mxu0 %v1389
    %1468 = vmatpush.msra.mxu0 %v1385
    %1469 = vmatpush.msra.mxu0 %v1381
    %1470 = vmatpush.msra.mxu0 %v1377
    %1471 = vmatpush.msra.mxu0 %v1373
    %1472 = vmatmul.f32.gmra.mxu0 %v1346
    %v1473 = vpop.f32.mrf.mxu0
    %v1474 = vadd.f32 0.0, %v1473
    %1475 = vdwg.mxu0
    %1476 = vmatpush.msra.mxu0 %v1434
    %1477 = vmatpush.msra.mxu0 %v1430
    %1478 = vmatpush.msra.mxu0 %v1426
    %1479 = vmatpush.msra.mxu0 %v1422
    %1480 = vmatpush.msra.mxu0 %v1418
    %1481 = vmatpush.msra.mxu0 %v1414
    %1482 = vmatpush.msra.mxu0 %v1410
    %1483 = vmatpush.msra.mxu0 %v1406
    %1484 = vmatpush.msra.mxu0 %v1402
    %1485 = vmatpush.msra.mxu0 %v1398
    %1486 = vmatpush.msra.mxu0 %v1394
    %1487 = vmatpush.msra.mxu0 %v1390
    %1488 = vmatpush.msra.mxu0 %v1386
    %1489 = vmatpush.msra.mxu0 %v1382
    %1490 = vmatpush.msra.mxu0 %v1378
    %1491 = vmatpush.msra.mxu0 %v1374
    %1492 = vmatmul.f32.gmra.mxu0 %v1346
    %v1493 = vpop.f32.mrf.mxu0
    %v1494 = vadd.f32 0.0, %v1493
    %1495 = vdwg.mxu0
    %1496 = vmatpush.msra.mxu0 %v1435
    %1497 = vmatpush.msra.mxu0 %v1431
    %1498 = vmatpush.msra.mxu0 %v1427
    %1499 = vmatpush.msra.mxu0 %v1423
    %1500 = vmatpush.msra.mxu0 %v1419
    %1501 = vmatpush.msra.mxu0 %v1415
    %1502 = vmatpush.msra.mxu0 %v1411
    %1503 = vmatpush.msra.mxu0 %v1407
    %1504 = vmatpush.msra.mxu0 %v1403
    %1505 = vmatpush.msra.mxu0 %v1399
    %1506 = vmatpush.msra.mxu0 %v1395
    %1507 = vmatpush.msra.mxu0 %v1391
    %1508 = vmatpush.msra.mxu0 %v1387
    %1509 = vmatpush.msra.mxu0 %v1383
    %1510 = vmatpush.msra.mxu0 %v1379
    %1511 = vmatpush.msra.mxu0 %v1375
    %1512 = vmatmul.f32.gmra.mxu0 %v1346
    %v1513 = vpop.f32.mrf.mxu0
    %v1514 = vadd.f32 0.0, %v1513
    %1515 = vdwg.mxu0
    %v1516 = vadd.f32 %v1368, %v1454
    %v1517 = vadd.f32 %v1369, %v1474
    %v1518 = vadd.f32 %v1370, %v1494
    %v1519 = vadd.f32 %v1371, %v1514
    %v1520 = vxor.u32 %v1516, 2147483648
    %v1521 = vmul.f32 %v1520, 1.442695
    %v1522 = vpow.pop %v1521
    %v1523 = vadd.f32 %v1522, 1.0
    %v1524 = vrcp.pop %v1523
    %v1525 = vmul.f32 %v1523, %v1524
    %v1526 = vsub.f32 1.0, %v1525
    %v1527 = vmul.f32 %v1524, %v1526
    %v1528 = vadd.f32 %v1524, %v1527
    %vm1529 = vweird.f32 %v1523
    %vm1530 = vweird.f32 %v1524
    %vm1531 = vmor %vm1529, %vm1530
    %v1532 = vsel %vm1531, %v1524, %v1528
    %v1533 = vand.u32 2147483647, %v1523
    %vm1534 = vcmp.eq.f32.partialorder %v1533, 8.507059e+37
    %v1535 = vand.u32 %v1523, 2147483648
    %v1536 = vor.u32 1.1754944e-38, %v1535
    %v1537 = vsel %vm1534, %v1536, %v1532
    %v1538 = vmul.f32 1.0, %v1537
    %v1539 = vxor.u32 %v1517, 2147483648
    %v1540 = vmul.f32 %v1539, 1.442695
    %v1541 = vpow.pop %v1540
    %v1542 = vadd.f32 %v1541, 1.0
    %v1543 = vrcp.pop %v1542
    %v1544 = vmul.f32 %v1542, %v1543
    %v1545 = vsub.f32 1.0, %v1544
    %v1546 = vmul.f32 %v1543, %v1545
    %v1547 = vadd.f32 %v1543, %v1546
    %vm1548 = vweird.f32 %v1542
    %vm1549 = vweird.f32 %v1543
    %vm1550 = vmor %vm1548, %vm1549
    %v1551 = vsel %vm1550, %v1543, %v1547
    %v1552 = vand.u32 2147483647, %v1542
    %vm1553 = vcmp.eq.f32.partialorder %v1552, 8.507059e+37
    %v1554 = vand.u32 %v1542, 2147483648
    %v1555 = vor.u32 1.1754944e-38, %v1554
    %v1556 = vsel %vm1553, %v1555, %v1551
    %v1557 = vmul.f32 1.0, %v1556
    %v1558 = vtanh.pop %v1518
    %v1559 = vxor.u32 %v1519, 2147483648
    %v1560 = vmul.f32 %v1559, 1.442695
    %v1561 = vpow.pop %v1560
    %v1562 = vadd.f32 %v1561, 1.0
    %v1563 = vrcp.pop %v1562
    %v1564 = vmul.f32 %v1562, %v1563
    %v1565 = vsub.f32 1.0, %v1564
    %v1566 = vmul.f32 %v1563, %v1565
    %v1567 = vadd.f32 %v1563, %v1566
    %vm1568 = vweird.f32 %v1562
    %vm1569 = vweird.f32 %v1563
    %vm1570 = vmor %vm1568, %vm1569
    %v1571 = vsel %vm1570, %v1563, %v1567
    %v1572 = vand.u32 2147483647, %v1562
    %vm1573 = vcmp.eq.f32.partialorder %v1572, 8.507059e+37
    %v1574 = vand.u32 %v1562, 2147483648
    %v1575 = vor.u32 1.1754944e-38, %v1574
    %v1576 = vsel %vm1573, %v1575, %v1571
    %v1577 = vmul.f32 1.0, %v1576
    %v1578 = vmul.f32 %v1557, %v1344
    %v1579 = vmul.f32 %v1538, %v1558
    %v1580 = vadd.f32 %v1578, %v1579
    %v1581 = vtanh.pop %v1580
    %v1582 = vmul.f32 %v1577, %v1581
    %v1583 = vld [vmem:[%s6] sm:$0xff]
    %v1584 = vld [vmem:[%s6 + $0x8] sm:$0xff]
    %v1585 = vld [vmem:[%s6 + $0x10] sm:$0xff]
    %v1586 = vld [vmem:[%s6 + $0x18] sm:$0xff]
    %v1587 = vld [vmem:[%s6 + $0x20] sm:$0xff]
    %v1588 = vld [vmem:[%s6 + $0x28] sm:$0xff]
    %v1589 = vld [vmem:[%s6 + $0x30] sm:$0xff]
    %v1590 = vld [vmem:[%s6 + $0x38] sm:$0xff]
    %v1591 = vld [vmem:[%s6 + $0x40] sm:$0xff]
    %v1592 = vld [vmem:[%s6 + $0x48] sm:$0xff]
    %v1593 = vld [vmem:[%s6 + $0x50] sm:$0xff]
    %v1594 = vld [vmem:[%s6 + $0x58] sm:$0xff]
    %v1595 = vld [vmem:[%s6 + $0x60] sm:$0xff]
    %v1596 = vld [vmem:[%s6 + $0x68] sm:$0xff]
    %v1597 = vld [vmem:[%s6 + $0x70] sm:$0xff]
    %v1598 = vld [vmem:[%s6 + $0x78] sm:$0xff]
    %v1599 = vld [vmem:[%s7] sm:$0x1]
    %v1601 = vperm.slane %v1599, 0
    %1603 = vmatpush.msra.mxu0 %v1598
    %1604 = vmatpush.msra.mxu0 %v1597
    %1605 = vmatpush.msra.mxu0 %v1596
    %1606 = vmatpush.msra.mxu0 %v1595
    %1607 = vmatpush.msra.mxu0 %v1594
    %1608 = vmatpush.msra.mxu0 %v1593
    %1609 = vmatpush.msra.mxu0 %v1592
    %1610 = vmatpush.msra.mxu0 %v1591
    %1611 = vmatpush.msra.mxu0 %v1590
    %1612 = vmatpush.msra.mxu0 %v1589
    %1613 = vmatpush.msra.mxu0 %v1588
    %1614 = vmatpush.msra.mxu0 %v1587
    %1615 = vmatpush.msra.mxu0 %v1586
    %1616 = vmatpush.msra.mxu0 %v1585
    %1617 = vmatpush.msra.mxu0 %v1584
    %1618 = vmatpush.msra.mxu0 %v1583
    %1619 = vmatmul.f32.gmra.mxu0 %v1582
    %v1620 = vpop.f32.mrf.mxu0
    %v1621 = vadd.f32 %v1601, %v1620
    %1622 = vdwg.mxu0
    %s1623 = scalar_lea.vmem [#allocation9], 8
    %1624 = vst [vmem:[%s1623] sm:$0xff] %v1621
    %v1625 = vsel %vm1351, %v1621, -1e+30
    %1626 = vmax.xlane.f32.xlu0 %v1625
    %v1627 = vpop.xlane.xlu0 %1626
    %vm1628 = vcmp.ge.f32.partialorder %v1625, %v1627
    %vm1629 = vmand %vm1628, %vm1351
    %v1630 = vsel %vm1629, %v1350, 128.0
    %1631 = vmin.xlane.f32.xlu0 %v1630
    %v1632 = vpop.xlane.xlu0 %1631
    %vm1633 = vcmp.eq.f32.partialorder %v1350, %v1632
    %v1634 = vsel %vm1633, 1, 0
    %v1635 = vcvt.s32.f32 %v1634
    %v1636 = vld [vmem:[#allocation7] sm:$0xff]
    %v1637 = vld [vmem:[#allocation7 + $0x8] sm:$0xff]
    %v1638 = vld [vmem:[#allocation7 + $0x10] sm:$0xff]
    %v1639 = vld [vmem:[#allocation7 + $0x18] sm:$0xff]
    %v1640 = vld [vmem:[#allocation7 + $0x20] sm:$0xff]
    %v1641 = vld [vmem:[#allocation7 + $0x28] sm:$0xff]
    %v1642 = vld [vmem:[#allocation7 + $0x30] sm:$0xff]
    %v1643 = vld [vmem:[#allocation7 + $0x38] sm:$0xff]
    %v1644 = vld [vmem:[#allocation7 + $0x40] sm:$0xff]
    %v1645 = vld [vmem:[#allocation7 + $0x48] sm:$0xff]
    %v1646 = vld [vmem:[#allocation7 + $0x50] sm:$0xff]
    %v1647 = vld [vmem:[#allocation7 + $0x58] sm:$0xff]
    %v1648 = vld [vmem:[#allocation7 + $0x60] sm:$0xff]
    %v1649 = vld [vmem:[#allocation7 + $0x68] sm:$0xff]
    %v1650 = vld [vmem:[#allocation7 + $0x70] sm:$0xff]
    %v1651 = vld [vmem:[#allocation7 + $0x78] sm:$0xff]
    %v1652 = vld [vmem:[#allocation7 + $0x80] sm:$0xff]
    %v1653 = vld [vmem:[#allocation7 + $0x88] sm:$0xff]
    %v1654 = vld [vmem:[#allocation7 + $0x90] sm:$0xff]
    %v1655 = vld [vmem:[#allocation7 + $0x98] sm:$0xff]
    %v1656 = vld [vmem:[#allocation7 + $0xa0] sm:$0xff]
    %v1657 = vld [vmem:[#allocation7 + $0xa8] sm:$0xff]
    %v1658 = vld [vmem:[#allocation7 + $0xb0] sm:$0xff]
    %v1659 = vld [vmem:[#allocation7 + $0xb8] sm:$0xff]
    %v1660 = vld [vmem:[#allocation7 + $0xc0] sm:$0xff]
    %v1661 = vld [vmem:[#allocation7 + $0xc8] sm:$0xff]
    %v1662 = vld [vmem:[#allocation7 + $0xd0] sm:$0xff]
    %v1663 = vld [vmem:[#allocation7 + $0xd8] sm:$0xff]
    %v1664 = vld [vmem:[#allocation7 + $0xe0] sm:$0xff]
    %v1665 = vld [vmem:[#allocation7 + $0xe8] sm:$0xff]
    %v1666 = vld [vmem:[#allocation7 + $0xf0] sm:$0xff]
    %v1667 = vld [vmem:[#allocation7 + $0xf8] sm:$0xff]
    %v1668 = vld [vmem:[#allocation7 + $0x100] sm:$0xff]
    %v1669 = vld [vmem:[#allocation7 + $0x108] sm:$0xff]
    %v1670 = vld [vmem:[#allocation7 + $0x110] sm:$0xff]
    %v1671 = vld [vmem:[#allocation7 + $0x118] sm:$0xff]
    %v1672 = vld [vmem:[#allocation7 + $0x120] sm:$0xff]
    %v1673 = vld [vmem:[#allocation7 + $0x128] sm:$0xff]
    %v1674 = vld [vmem:[#allocation7 + $0x130] sm:$0xff]
    %v1675 = vld [vmem:[#allocation7 + $0x138] sm:$0xff]
    %v1676 = vld [vmem:[#allocation7 + $0x140] sm:$0xff]
    %v1677 = vld [vmem:[#allocation7 + $0x148] sm:$0xff]
    %v1678 = vld [vmem:[#allocation7 + $0x150] sm:$0xff]
    %v1679 = vld [vmem:[#allocation7 + $0x158] sm:$0xff]
    %v1680 = vld [vmem:[#allocation7 + $0x160] sm:$0xff]
    %v1681 = vld [vmem:[#allocation7 + $0x168] sm:$0xff]
    %v1682 = vld [vmem:[#allocation7 + $0x170] sm:$0xff]
    %v1683 = vld [vmem:[#allocation7 + $0x178] sm:$0xff]
    %v1684 = vld [vmem:[#allocation7 + $0x180] sm:$0xff]
    %v1685 = vld [vmem:[#allocation7 + $0x188] sm:$0xff]
    %v1686 = vld [vmem:[#allocation7 + $0x190] sm:$0xff]
    %v1687 = vld [vmem:[#allocation7 + $0x198] sm:$0xff]
    %v1688 = vld [vmem:[#allocation7 + $0x1a0] sm:$0xff]
    %v1689 = vld [vmem:[#allocation7 + $0x1a8] sm:$0xff]
    %v1690 = vld [vmem:[#allocation7 + $0x1b0] sm:$0xff]
    %v1691 = vld [vmem:[#allocation7 + $0x1b8] sm:$0xff]
    %v1692 = vld [vmem:[#allocation7 + $0x1c0] sm:$0xff]
    %v1693 = vld [vmem:[#allocation7 + $0x1c8] sm:$0xff]
    %v1694 = vld [vmem:[#allocation7 + $0x1d0] sm:$0xff]
    %v1695 = vld [vmem:[#allocation7 + $0x1d8] sm:$0xff]
    %v1696 = vld [vmem:[#allocation7 + $0x1e0] sm:$0xff]
    %v1697 = vld [vmem:[#allocation7 + $0x1e8] sm:$0xff]
    %v1698 = vld [vmem:[#allocation7 + $0x1f0] sm:$0xff]
    %v1699 = vld [vmem:[#allocation7 + $0x1f8] sm:$0xff]
    %1700 = vmatpush.msra.mxu0 %v1696
    %1701 = vmatpush.msra.mxu0 %v1692
    %1702 = vmatpush.msra.mxu0 %v1688
    %1703 = vmatpush.msra.mxu0 %v1684
    %1704 = vmatpush.msra.mxu0 %v1680
    %1705 = vmatpush.msra.mxu0 %v1676
    %1706 = vmatpush.msra.mxu0 %v1672
    %1707 = vmatpush.msra.mxu0 %v1668
    %1708 = vmatpush.msra.mxu0 %v1664
    %1709 = vmatpush.msra.mxu0 %v1660
    %1710 = vmatpush.msra.mxu0 %v1656
    %1711 = vmatpush.msra.mxu0 %v1652
    %1712 = vmatpush.msra.mxu0 %v1648
    %1713 = vmatpush.msra.mxu0 %v1644
    %1714 = vmatpush.msra.mxu0 %v1640
    %1715 = vmatpush.msra.mxu0 %v1636
    %1716 = vmatmul.f32.gmra.mxu0 %v1635
    %v1717 = vpop.f32.mrf.mxu0
    %v1718 = vadd.f32 0.0, %v1717
    %1719 = vdwg.mxu0
    %1720 = vmatpush.msra.mxu0 %v1697
    %1721 = vmatpush.msra.mxu0 %v1693
    %1722 = vmatpush.msra.mxu0 %v1689
    %1723 = vmatpush.msra.mxu0 %v1685
    %1724 = vmatpush.msra.mxu0 %v1681
    %1725 = vmatpush.msra.mxu0 %v1677
    %1726 = vmatpush.msra.mxu0 %v1673
    %1727 = vmatpush.msra.mxu0 %v1669
    %1728 = vmatpush.msra.mxu0 %v1665
    %1729 = vmatpush.msra.mxu0 %v1661
    %1730 = vmatpush.msra.mxu0 %v1657
    %1731 = vmatpush.msra.mxu0 %v1653
    %1732 = vmatpush.msra.mxu0 %v1649
    %1733 = vmatpush.msra.mxu0 %v1645
    %1734 = vmatpush.msra.mxu0 %v1641
    %1735 = vmatpush.msra.mxu0 %v1637
    %1736 = vmatmul.f32.gmra.mxu0 %v1635
    %v1737 = vpop.f32.mrf.mxu0
    %v1738 = vadd.f32 0.0, %v1737
    %1739 = vdwg.mxu0
    %1740 = vmatpush.msra.mxu0 %v1698
    %1741 = vmatpush.msra.mxu0 %v1694
    %1742 = vmatpush.msra.mxu0 %v1690
    %1743 = vmatpush.msra.mxu0 %v1686
    %1744 = vmatpush.msra.mxu0 %v1682
    %1745 = vmatpush.msra.mxu0 %v1678
    %1746 = vmatpush.msra.mxu0 %v1674
    %1747 = vmatpush.msra.mxu0 %v1670
    %1748 = vmatpush.msra.mxu0 %v1666
    %1749 = vmatpush.msra.mxu0 %v1662
    %1750 = vmatpush.msra.mxu0 %v1658
    %1751 = vmatpush.msra.mxu0 %v1654
    %1752 = vmatpush.msra.mxu0 %v1650
    %1753 = vmatpush.msra.mxu0 %v1646
    %1754 = vmatpush.msra.mxu0 %v1642
    %1755 = vmatpush.msra.mxu0 %v1638
    %1756 = vmatmul.f32.gmra.mxu0 %v1635
    %v1757 = vpop.f32.mrf.mxu0
    %v1758 = vadd.f32 0.0, %v1757
    %1759 = vdwg.mxu0
    %1760 = vmatpush.msra.mxu0 %v1699
    %1761 = vmatpush.msra.mxu0 %v1695
    %1762 = vmatpush.msra.mxu0 %v1691
    %1763 = vmatpush.msra.mxu0 %v1687
    %1764 = vmatpush.msra.mxu0 %v1683
    %1765 = vmatpush.msra.mxu0 %v1679
    %1766 = vmatpush.msra.mxu0 %v1675
    %1767 = vmatpush.msra.mxu0 %v1671
    %1768 = vmatpush.msra.mxu0 %v1667
    %1769 = vmatpush.msra.mxu0 %v1663
    %1770 = vmatpush.msra.mxu0 %v1659
    %1771 = vmatpush.msra.mxu0 %v1655
    %1772 = vmatpush.msra.mxu0 %v1651
    %1773 = vmatpush.msra.mxu0 %v1647
    %1774 = vmatpush.msra.mxu0 %v1643
    %1775 = vmatpush.msra.mxu0 %v1639
    %1776 = vmatmul.f32.gmra.mxu0 %v1635
    %v1777 = vpop.f32.mrf.mxu0
    %v1778 = vadd.f32 0.0, %v1777
    %1779 = vdwg.mxu0
    %s1780 = sld [smem:[#allocation3 + $0x1]]
    %p1781 = scmp.ne.s32.totalorder %s1780, 0
    %s1782 = scalar_select %p1781, 1, 0
    %s1783 = scvt.s32.f32 %s1782
    %s1784 = scalar_lea.vmem %s3, 32
    %v1785 = vld [vmem:[%s1784] sm:$0xff]
    %v1786 = vld [vmem:[%s1784 + $0x8] sm:$0xff]
    %v1787 = vld [vmem:[%s1784 + $0x10] sm:$0xff]
    %v1788 = vld [vmem:[%s1784 + $0x18] sm:$0xff]
    %v1789 = vstv %s1783
    %v1790 = vmul.f32 %v1785, %v1789
    %v1791 = vmul.f32 %v1786, %v1789
    %v1792 = vmul.f32 %v1787, %v1789
    %v1793 = vmul.f32 %v1788, %v1789
    %s1794 = ssub.f32 1.0, %s1783
    %v1795 = vstv %s1794
    %v1796 = vmul.f32 %v1718, %v1795
    %v1797 = vmul.f32 %v1738, %v1795
    %v1798 = vmul.f32 %v1758, %v1795
    %v1799 = vmul.f32 %v1778, %v1795
    %v1800 = vadd.f32 %v1790, %v1796
    %v1801 = vadd.f32 %v1791, %v1797
    %v1802 = vadd.f32 %v1792, %v1798
    %v1803 = vadd.f32 %v1793, %v1799
    %v1804 = vld [vmem:[#allocation4] sm:$0xff]
    %v1805 = vld [vmem:[#allocation4 + $0x8] sm:$0xff]
    %v1806 = vld [vmem:[#allocation4 + $0x10] sm:$0xff]
    %v1807 = vld [vmem:[#allocation4 + $0x18] sm:$0xff]
    %v1808 = vld [vmem:[#allocation4 + $0x20] sm:$0xff]
    %v1809 = vld [vmem:[#allocation4 + $0x28] sm:$0xff]
    %v1810 = vld [vmem:[#allocation4 + $0x30] sm:$0xff]
    %v1811 = vld [vmem:[#allocation4 + $0x38] sm:$0xff]
    %v1812 = vld [vmem:[#allocation4 + $0x40] sm:$0xff]
    %v1813 = vld [vmem:[#allocation4 + $0x48] sm:$0xff]
    %v1814 = vld [vmem:[#allocation4 + $0x50] sm:$0xff]
    %v1815 = vld [vmem:[#allocation4 + $0x58] sm:$0xff]
    %v1816 = vld [vmem:[#allocation4 + $0x60] sm:$0xff]
    %v1817 = vld [vmem:[#allocation4 + $0x68] sm:$0xff]
    %v1818 = vld [vmem:[#allocation4 + $0x70] sm:$0xff]
    %v1819 = vld [vmem:[#allocation4 + $0x78] sm:$0xff]
    %v1820 = vld [vmem:[#allocation4 + $0x80] sm:$0xff]
    %v1821 = vld [vmem:[#allocation4 + $0x88] sm:$0xff]
    %v1822 = vld [vmem:[#allocation4 + $0x90] sm:$0xff]
    %v1823 = vld [vmem:[#allocation4 + $0x98] sm:$0xff]
    %v1824 = vld [vmem:[#allocation4 + $0xa0] sm:$0xff]
    %v1825 = vld [vmem:[#allocation4 + $0xa8] sm:$0xff]
    %v1826 = vld [vmem:[#allocation4 + $0xb0] sm:$0xff]
    %v1827 = vld [vmem:[#allocation4 + $0xb8] sm:$0xff]
    %v1828 = vld [vmem:[#allocation4 + $0xc0] sm:$0xff]
    %v1829 = vld [vmem:[#allocation4 + $0xc8] sm:$0xff]
    %v1830 = vld [vmem:[#allocation4 + $0xd0] sm:$0xff]
    %v1831 = vld [vmem:[#allocation4 + $0xd8] sm:$0xff]
    %v1832 = vld [vmem:[#allocation4 + $0xe0] sm:$0xff]
    %v1833 = vld [vmem:[#allocation4 + $0xe8] sm:$0xff]
    %v1834 = vld [vmem:[#allocation4 + $0xf0] sm:$0xff]
    %v1835 = vld [vmem:[#allocation4 + $0xf8] sm:$0xff]
    %v1836 = vld [vmem:[#allocation4 + $0x100] sm:$0xff]
    %v1837 = vld [vmem:[#allocation4 + $0x108] sm:$0xff]
    %v1838 = vld [vmem:[#allocation4 + $0x110] sm:$0xff]
    %v1839 = vld [vmem:[#allocation4 + $0x118] sm:$0xff]
    %v1840 = vld [vmem:[#allocation4 + $0x120] sm:$0xff]
    %v1841 = vld [vmem:[#allocation4 + $0x128] sm:$0xff]
    %v1842 = vld [vmem:[#allocation4 + $0x130] sm:$0xff]
    %v1843 = vld [vmem:[#allocation4 + $0x138] sm:$0xff]
    %v1844 = vld [vmem:[#allocation4 + $0x140] sm:$0xff]
    %v1845 = vld [vmem:[#allocation4 + $0x148] sm:$0xff]
    %v1846 = vld [vmem:[#allocation4 + $0x150] sm:$0xff]
    %v1847 = vld [vmem:[#allocation4 + $0x158] sm:$0xff]
    %v1848 = vld [vmem:[#allocation4 + $0x160] sm:$0xff]
    %v1849 = vld [vmem:[#allocation4 + $0x168] sm:$0xff]
    %v1850 = vld [vmem:[#allocation4 + $0x170] sm:$0xff]
    %v1851 = vld [vmem:[#allocation4 + $0x178] sm:$0xff]
    %v1852 = vld [vmem:[#allocation4 + $0x180] sm:$0xff]
    %v1853 = vld [vmem:[#allocation4 + $0x188] sm:$0xff]
    %v1854 = vld [vmem:[#allocation4 + $0x190] sm:$0xff]
    %v1855 = vld [vmem:[#allocation4 + $0x198] sm:$0xff]
    %v1856 = vld [vmem:[#allocation4 + $0x1a0] sm:$0xff]
    %v1857 = vld [vmem:[#allocation4 + $0x1a8] sm:$0xff]
    %v1858 = vld [vmem:[#allocation4 + $0x1b0] sm:$0xff]
    %v1859 = vld [vmem:[#allocation4 + $0x1b8] sm:$0xff]
    %v1860 = vld [vmem:[#allocation4 + $0x1c0] sm:$0xff]
    %v1861 = vld [vmem:[#allocation4 + $0x1c8] sm:$0xff]
    %v1862 = vld [vmem:[#allocation4 + $0x1d0] sm:$0xff]
    %v1863 = vld [vmem:[#allocation4 + $0x1d8] sm:$0xff]
    %v1864 = vld [vmem:[#allocation4 + $0x1e0] sm:$0xff]
    %v1865 = vld [vmem:[#allocation4 + $0x1e8] sm:$0xff]
    %v1866 = vld [vmem:[#allocation4 + $0x1f0] sm:$0xff]
    %v1867 = vld [vmem:[#allocation4 + $0x1f8] sm:$0xff]
    %1868 = vmatpush.msra.mxu0 %v1864
    %1869 = vmatpush.msra.mxu0 %v1860
    %1870 = vmatpush.msra.mxu0 %v1856
    %1871 = vmatpush.msra.mxu0 %v1852
    %1872 = vmatpush.msra.mxu0 %v1848
    %1873 = vmatpush.msra.mxu0 %v1844
    %1874 = vmatpush.msra.mxu0 %v1840
    %1875 = vmatpush.msra.mxu0 %v1836
    %1876 = vmatpush.msra.mxu0 %v1832
    %1877 = vmatpush.msra.mxu0 %v1828
    %1878 = vmatpush.msra.mxu0 %v1824
    %1879 = vmatpush.msra.mxu0 %v1820
    %1880 = vmatpush.msra.mxu0 %v1816
    %1881 = vmatpush.msra.mxu0 %v1812
    %1882 = vmatpush.msra.mxu0 %v1808
    %1883 = vmatpush.msra.mxu0 %v1804
    %1884 = vmatmul.f32.gmra.mxu0 %v1582
    %v1885 = vpop.f32.mrf.mxu0
    %v1886 = vadd.f32 0.0, %v1885
    %1887 = vdwg.mxu0
    %1888 = vmatpush.msra.mxu0 %v1865
    %1889 = vmatpush.msra.mxu0 %v1861
    %1890 = vmatpush.msra.mxu0 %v1857
    %1891 = vmatpush.msra.mxu0 %v1853
    %1892 = vmatpush.msra.mxu0 %v1849
    %1893 = vmatpush.msra.mxu0 %v1845
    %1894 = vmatpush.msra.mxu0 %v1841
    %1895 = vmatpush.msra.mxu0 %v1837
    %1896 = vmatpush.msra.mxu0 %v1833
    %1897 = vmatpush.msra.mxu0 %v1829
    %1898 = vmatpush.msra.mxu0 %v1825
    %1899 = vmatpush.msra.mxu0 %v1821
    %1900 = vmatpush.msra.mxu0 %v1817
    %1901 = vmatpush.msra.mxu0 %v1813
    %1902 = vmatpush.msra.mxu0 %v1809
    %1903 = vmatpush.msra.mxu0 %v1805
    %1904 = vmatmul.f32.gmra.mxu0 %v1582
    %v1905 = vpop.f32.mrf.mxu0
    %v1906 = vadd.f32 0.0, %v1905
    %1907 = vdwg.mxu0
    %1908 = vmatpush.msra.mxu0 %v1866
    %1909 = vmatpush.msra.mxu0 %v1862
    %1910 = vmatpush.msra.mxu0 %v1858
    %1911 = vmatpush.msra.mxu0 %v1854
    %1912 = vmatpush.msra.mxu0 %v1850
    %1913 = vmatpush.msra.mxu0 %v1846
    %1914 = vmatpush.msra.mxu0 %v1842
    %1915 = vmatpush.msra.mxu0 %v1838
    %1916 = vmatpush.msra.mxu0 %v1834
    %1917 = vmatpush.msra.mxu0 %v1830
    %1918 = vmatpush.msra.mxu0 %v1826
    %1919 = vmatpush.msra.mxu0 %v1822
    %1920 = vmatpush.msra.mxu0 %v1818
    %1921 = vmatpush.msra.mxu0 %v1814
    %1922 = vmatpush.msra.mxu0 %v1810
    %1923 = vmatpush.msra.mxu0 %v1806
    %1924 = vmatmul.f32.gmra.mxu0 %v1582
    %v1925 = vpop.f32.mrf.mxu0
    %v1926 = vadd.f32 0.0, %v1925
    %1927 = vdwg.mxu0
    %1928 = vmatpush.msra.mxu0 %v1867
    %1929 = vmatpush.msra.mxu0 %v1863
    %1930 = vmatpush.msra.mxu0 %v1859
    %1931 = vmatpush.msra.mxu0 %v1855
    %1932 = vmatpush.msra.mxu0 %v1851
    %1933 = vmatpush.msra.mxu0 %v1847
    %1934 = vmatpush.msra.mxu0 %v1843
    %1935 = vmatpush.msra.mxu0 %v1839
    %1936 = vmatpush.msra.mxu0 %v1835
    %1937 = vmatpush.msra.mxu0 %v1831
    %1938 = vmatpush.msra.mxu0 %v1827
    %1939 = vmatpush.msra.mxu0 %v1823
    %1940 = vmatpush.msra.mxu0 %v1819
    %1941 = vmatpush.msra.mxu0 %v1815
    %1942 = vmatpush.msra.mxu0 %v1811
    %1943 = vmatpush.msra.mxu0 %v1807
    %1944 = vmatmul.f32.gmra.mxu0 %v1582
    %v1945 = vpop.f32.mrf.mxu0
    %v1946 = vadd.f32 0.0, %v1945
    %1947 = vdwg.mxu0
    %v1948 = vadd.f32 %v1800, %v1886
    %v1949 = vadd.f32 %v1801, %v1906
    %v1950 = vadd.f32 %v1802, %v1926
    %v1951 = vadd.f32 %v1803, %v1946
    %v1952 = vxor.u32 %v1948, 2147483648
    %v1953 = vmul.f32 %v1952, 1.442695
    %v1954 = vpow.pop %v1953
    %v1955 = vadd.f32 %v1954, 1.0
    %v1956 = vrcp.pop %v1955
    %v1957 = vmul.f32 %v1955, %v1956
    %v1958 = vsub.f32 1.0, %v1957
    %v1959 = vmul.f32 %v1956, %v1958
    %v1960 = vadd.f32 %v1956, %v1959
    %vm1961 = vweird.f32 %v1955
    %vm1962 = vweird.f32 %v1956
    %vm1963 = vmor %vm1961, %vm1962
    %v1964 = vsel %vm1963, %v1956, %v1960
    %v1965 = vand.u32 2147483647, %v1955
    %vm1966 = vcmp.eq.f32.partialorder %v1965, 8.507059e+37
    %v1967 = vand.u32 %v1955, 2147483648
    %v1968 = vor.u32 1.1754944e-38, %v1967
    %v1969 = vsel %vm1966, %v1968, %v1964
    %v1970 = vmul.f32 1.0, %v1969
    %v1971 = vxor.u32 %v1949, 2147483648
    %v1972 = vmul.f32 %v1971, 1.442695
    %v1973 = vpow.pop %v1972
    %v1974 = vadd.f32 %v1973, 1.0
    %v1975 = vrcp.pop %v1974
    %v1976 = vmul.f32 %v1974, %v1975
    %v1977 = vsub.f32 1.0, %v1976
    %v1978 = vmul.f32 %v1975, %v1977
    %v1979 = vadd.f32 %v1975, %v1978
    %vm1980 = vweird.f32 %v1974
    %vm1981 = vweird.f32 %v1975
    %vm1982 = vmor %vm1980, %vm1981
    %v1983 = vsel %vm1982, %v1975, %v1979
    %v1984 = vand.u32 2147483647, %v1974
    %vm1985 = vcmp.eq.f32.partialorder %v1984, 8.507059e+37
    %v1986 = vand.u32 %v1974, 2147483648
    %v1987 = vor.u32 1.1754944e-38, %v1986
    %v1988 = vsel %vm1985, %v1987, %v1983
    %v1989 = vmul.f32 1.0, %v1988
    %v1990 = vtanh.pop %v1950
    %v1991 = vxor.u32 %v1951, 2147483648
    %v1992 = vmul.f32 %v1991, 1.442695
    %v1993 = vpow.pop %v1992
    %v1994 = vadd.f32 %v1993, 1.0
    %v1995 = vrcp.pop %v1994
    %v1996 = vmul.f32 %v1994, %v1995
    %v1997 = vsub.f32 1.0, %v1996
    %v1998 = vmul.f32 %v1995, %v1997
    %v1999 = vadd.f32 %v1995, %v1998
    %vm2000 = vweird.f32 %v1994
    %vm2001 = vweird.f32 %v1995
    %vm2002 = vmor %vm2000, %vm2001
    %v2003 = vsel %vm2002, %v1995, %v1999
    %v2004 = vand.u32 2147483647, %v1994
    %vm2005 = vcmp.eq.f32.partialorder %v2004, 8.507059e+37
    %v2006 = vand.u32 %v1994, 2147483648
    %v2007 = vor.u32 1.1754944e-38, %v2006
    %v2008 = vsel %vm2005, %v2007, %v2003
    %v2009 = vmul.f32 1.0, %v2008
    %v2010 = vmul.f32 %v1989, %v1580
    %v2011 = vmul.f32 %v1970, %v1990
    %v2012 = vadd.f32 %v2010, %v2011
    %v2013 = vtanh.pop %v2012
    %v2014 = vmul.f32 %v2009, %v2013
    %v2015 = vld [vmem:[%s6] sm:$0xff]
    %v2016 = vld [vmem:[%s6 + $0x8] sm:$0xff]
    %v2017 = vld [vmem:[%s6 + $0x10] sm:$0xff]
    %v2018 = vld [vmem:[%s6 + $0x18] sm:$0xff]
    %v2019 = vld [vmem:[%s6 + $0x20] sm:$0xff]
    %v2020 = vld [vmem:[%s6 + $0x28] sm:$0xff]
    %v2021 = vld [vmem:[%s6 + $0x30] sm:$0xff]
    %v2022 = vld [vmem:[%s6 + $0x38] sm:$0xff]
    %v2023 = vld [vmem:[%s6 + $0x40] sm:$0xff]
    %v2024 = vld [vmem:[%s6 + $0x48] sm:$0xff]
    %v2025 = vld [vmem:[%s6 + $0x50] sm:$0xff]
    %v2026 = vld [vmem:[%s6 + $0x58] sm:$0xff]
    %v2027 = vld [vmem:[%s6 + $0x60] sm:$0xff]
    %v2028 = vld [vmem:[%s6 + $0x68] sm:$0xff]
    %v2029 = vld [vmem:[%s6 + $0x70] sm:$0xff]
    %v2030 = vld [vmem:[%s6 + $0x78] sm:$0xff]
    %v2031 = vld [vmem:[%s7] sm:$0x1]
    %v2033 = vperm.slane %v2031, 0
    %2035 = vmatpush.msra.mxu0 %v2030
    %2036 = vmatpush.msra.mxu0 %v2029
    %2037 = vmatpush.msra.mxu0 %v2028
    %2038 = vmatpush.msra.mxu0 %v2027
    %2039 = vmatpush.msra.mxu0 %v2026
    %2040 = vmatpush.msra.mxu0 %v2025
    %2041 = vmatpush.msra.mxu0 %v2024
    %2042 = vmatpush.msra.mxu0 %v2023
    %2043 = vmatpush.msra.mxu0 %v2022
    %2044 = vmatpush.msra.mxu0 %v2021
    %2045 = vmatpush.msra.mxu0 %v2020
    %2046 = vmatpush.msra.mxu0 %v2019
    %2047 = vmatpush.msra.mxu0 %v2018
    %2048 = vmatpush.msra.mxu0 %v2017
    %2049 = vmatpush.msra.mxu0 %v2016
    %2050 = vmatpush.msra.mxu0 %v2015
    %2051 = vmatmul.f32.gmra.mxu0 %v2014
    %v2052 = vpop.f32.mrf.mxu0
    %v2053 = vadd.f32 %v2033, %v2052
    %2054 = vdwg.mxu0
    %s2055 = scalar_lea.vmem [#allocation9], 16
    %2056 = vst [vmem:[%s2055] sm:$0xff] %v2053
    %v2057 = vsel %vm1351, %v2053, -1e+30
    %2058 = vmax.xlane.f32.xlu0 %v2057
    %v2059 = vpop.xlane.xlu0 %2058
    %vm2060 = vcmp.ge.f32.partialorder %v2057, %v2059
    %vm2061 = vmand %vm2060, %vm1351
    %v2062 = vsel %vm2061, %v1350, 128.0
    %2063 = vmin.xlane.f32.xlu0 %v2062
    %v2064 = vpop.xlane.xlu0 %2063
    %vm2065 = vcmp.eq.f32.partialorder %v1350, %v2064
    %v2066 = vsel %vm2065, 1, 0
    %v2067 = vcvt.s32.f32 %v2066
    %v2068 = vld [vmem:[#allocation7] sm:$0xff]
    %v2069 = vld [vmem:[#allocation7 + $0x8] sm:$0xff]
    %v2070 = vld [vmem:[#allocation7 + $0x10] sm:$0xff]
    %v2071 = vld [vmem:[#allocation7 + $0x18] sm:$0xff]
    %v2072 = vld [vmem:[#allocation7 + $0x20] sm:$0xff]
    %v2073 = vld [vmem:[#allocation7 + $0x28] sm:$0xff]
    %v2074 = vld [vmem:[#allocation7 + $0x30] sm:$0xff]
    %v2075 = vld [vmem:[#allocation7 + $0x38] sm:$0xff]
    %v2076 = vld [vmem:[#allocation7 + $0x40] sm:$0xff]
    %v2077 = vld [vmem:[#allocation7 + $0x48] sm:$0xff]
    %v2078 = vld [vmem:[#allocation7 + $0x50] sm:$0xff]
    %v2079 = vld [vmem:[#allocation7 + $0x58] sm:$0xff]
    %v2080 = vld [vmem:[#allocation7 + $0x60] sm:$0xff]
    %v2081 = vld [vmem:[#allocation7 + $0x68] sm:$0xff]
    %v2082 = vld [vmem:[#allocation7 + $0x70] sm:$0xff]
    %v2083 = vld [vmem:[#allocation7 + $0x78] sm:$0xff]
    %v2084 = vld [vmem:[#allocation7 + $0x80] sm:$0xff]
    %v2085 = vld [vmem:[#allocation7 + $0x88] sm:$0xff]
    %v2086 = vld [vmem:[#allocation7 + $0x90] sm:$0xff]
    %v2087 = vld [vmem:[#allocation7 + $0x98] sm:$0xff]
    %v2088 = vld [vmem:[#allocation7 + $0xa0] sm:$0xff]
    %v2089 = vld [vmem:[#allocation7 + $0xa8] sm:$0xff]
    %v2090 = vld [vmem:[#allocation7 + $0xb0] sm:$0xff]
    %v2091 = vld [vmem:[#allocation7 + $0xb8] sm:$0xff]
    %v2092 = vld [vmem:[#allocation7 + $0xc0] sm:$0xff]
    %v2093 = vld [vmem:[#allocation7 + $0xc8] sm:$0xff]
    %v2094 = vld [vmem:[#allocation7 + $0xd0] sm:$0xff]
    %v2095 = vld [vmem:[#allocation7 + $0xd8] sm:$0xff]
    %v2096 = vld [vmem:[#allocation7 + $0xe0] sm:$0xff]
    %v2097 = vld [vmem:[#allocation7 + $0xe8] sm:$0xff]
    %v2098 = vld [vmem:[#allocation7 + $0xf0] sm:$0xff]
    %v2099 = vld [vmem:[#allocation7 + $0xf8] sm:$0xff]
    %v2100 = vld [vmem:[#allocation7 + $0x100] sm:$0xff]
    %v2101 = vld [vmem:[#allocation7 + $0x108] sm:$0xff]
    %v2102 = vld [vmem:[#allocation7 + $0x110] sm:$0xff]
    %v2103 = vld [vmem:[#allocation7 + $0x118] sm:$0xff]
    %v2104 = vld [vmem:[#allocation7 + $0x120] sm:$0xff]
    %v2105 = vld [vmem:[#allocation7 + $0x128] sm:$0xff]
    %v2106 = vld [vmem:[#allocation7 + $0x130] sm:$0xff]
    %v2107 = vld [vmem:[#allocation7 + $0x138] sm:$0xff]
    %v2108 = vld [vmem:[#allocation7 + $0x140] sm:$0xff]
    %v2109 = vld [vmem:[#allocation7 + $0x148] sm:$0xff]
    %v2110 = vld [vmem:[#allocation7 + $0x150] sm:$0xff]
    %v2111 = vld [vmem:[#allocation7 + $0x158] sm:$0xff]
    %v2112 = vld [vmem:[#allocation7 + $0x160] sm:$0xff]
    %v2113 = vld [vmem:[#allocation7 + $0x168] sm:$0xff]
    %v2114 = vld [vmem:[#allocation7 + $0x170] sm:$0xff]
    %v2115 = vld [vmem:[#allocation7 + $0x178] sm:$0xff]
    %v2116 = vld [vmem:[#allocation7 + $0x180] sm:$0xff]
    %v2117 = vld [vmem:[#allocation7 + $0x188] sm:$0xff]
    %v2118 = vld [vmem:[#allocation7 + $0x190] sm:$0xff]
    %v2119 = vld [vmem:[#allocation7 + $0x198] sm:$0xff]
    %v2120 = vld [vmem:[#allocation7 + $0x1a0] sm:$0xff]
    %v2121 = vld [vmem:[#allocation7 + $0x1a8] sm:$0xff]
    %v2122 = vld [vmem:[#allocation7 + $0x1b0] sm:$0xff]
    %v2123 = vld [vmem:[#allocation7 + $0x1b8] sm:$0xff]
    %v2124 = vld [vmem:[#allocation7 + $0x1c0] sm:$0xff]
    %v2125 = vld [vmem:[#allocation7 + $0x1c8] sm:$0xff]
    %v2126 = vld [vmem:[#allocation7 + $0x1d0] sm:$0xff]
    %v2127 = vld [vmem:[#allocation7 + $0x1d8] sm:$0xff]
    %v2128 = vld [vmem:[#allocation7 + $0x1e0] sm:$0xff]
    %v2129 = vld [vmem:[#allocation7 + $0x1e8] sm:$0xff]
    %v2130 = vld [vmem:[#allocation7 + $0x1f0] sm:$0xff]
    %v2131 = vld [vmem:[#allocation7 + $0x1f8] sm:$0xff]
    %2132 = vmatpush.msra.mxu0 %v2128
    %2133 = vmatpush.msra.mxu0 %v2124
    %2134 = vmatpush.msra.mxu0 %v2120
    %2135 = vmatpush.msra.mxu0 %v2116
    %2136 = vmatpush.msra.mxu0 %v2112
    %2137 = vmatpush.msra.mxu0 %v2108
    %2138 = vmatpush.msra.mxu0 %v2104
    %2139 = vmatpush.msra.mxu0 %v2100
    %2140 = vmatpush.msra.mxu0 %v2096
    %2141 = vmatpush.msra.mxu0 %v2092
    %2142 = vmatpush.msra.mxu0 %v2088
    %2143 = vmatpush.msra.mxu0 %v2084
    %2144 = vmatpush.msra.mxu0 %v2080
    %2145 = vmatpush.msra.mxu0 %v2076
    %2146 = vmatpush.msra.mxu0 %v2072
    %2147 = vmatpush.msra.mxu0 %v2068
    %2148 = vmatmul.f32.gmra.mxu0 %v2067
    %v2149 = vpop.f32.mrf.mxu0
    %v2150 = vadd.f32 0.0, %v2149
    %2151 = vdwg.mxu0
    %2152 = vmatpush.msra.mxu0 %v2129
    %2153 = vmatpush.msra.mxu0 %v2125
    %2154 = vmatpush.msra.mxu0 %v2121
    %2155 = vmatpush.msra.mxu0 %v2117
    %2156 = vmatpush.msra.mxu0 %v2113
    %2157 = vmatpush.msra.mxu0 %v2109
    %2158 = vmatpush.msra.mxu0 %v2105
    %2159 = vmatpush.msra.mxu0 %v2101
    %2160 = vmatpush.msra.mxu0 %v2097
    %2161 = vmatpush.msra.mxu0 %v2093
    %2162 = vmatpush.msra.mxu0 %v2089
    %2163 = vmatpush.msra.mxu0 %v2085
    %2164 = vmatpush.msra.mxu0 %v2081
    %2165 = vmatpush.msra.mxu0 %v2077
    %2166 = vmatpush.msra.mxu0 %v2073
    %2167 = vmatpush.msra.mxu0 %v2069
    %2168 = vmatmul.f32.gmra.mxu0 %v2067
    %v2169 = vpop.f32.mrf.mxu0
    %v2170 = vadd.f32 0.0, %v2169
    %2171 = vdwg.mxu0
    %2172 = vmatpush.msra.mxu0 %v2130
    %2173 = vmatpush.msra.mxu0 %v2126
    %2174 = vmatpush.msra.mxu0 %v2122
    %2175 = vmatpush.msra.mxu0 %v2118
    %2176 = vmatpush.msra.mxu0 %v2114
    %2177 = vmatpush.msra.mxu0 %v2110
    %2178 = vmatpush.msra.mxu0 %v2106
    %2179 = vmatpush.msra.mxu0 %v2102
    %2180 = vmatpush.msra.mxu0 %v2098
    %2181 = vmatpush.msra.mxu0 %v2094
    %2182 = vmatpush.msra.mxu0 %v2090
    %2183 = vmatpush.msra.mxu0 %v2086
    %2184 = vmatpush.msra.mxu0 %v2082
    %2185 = vmatpush.msra.mxu0 %v2078
    %2186 = vmatpush.msra.mxu0 %v2074
    %2187 = vmatpush.msra.mxu0 %v2070
    %2188 = vmatmul.f32.gmra.mxu0 %v2067
    %v2189 = vpop.f32.mrf.mxu0
    %v2190 = vadd.f32 0.0, %v2189
    %2191 = vdwg.mxu0
    %2192 = vmatpush.msra.mxu0 %v2131
    %2193 = vmatpush.msra.mxu0 %v2127
    %2194 = vmatpush.msra.mxu0 %v2123
    %2195 = vmatpush.msra.mxu0 %v2119
    %2196 = vmatpush.msra.mxu0 %v2115
    %2197 = vmatpush.msra.mxu0 %v2111
    %2198 = vmatpush.msra.mxu0 %v2107
    %2199 = vmatpush.msra.mxu0 %v2103
    %2200 = vmatpush.msra.mxu0 %v2099
    %2201 = vmatpush.msra.mxu0 %v2095
    %2202 = vmatpush.msra.mxu0 %v2091
    %2203 = vmatpush.msra.mxu0 %v2087
    %2204 = vmatpush.msra.mxu0 %v2083
    %2205 = vmatpush.msra.mxu0 %v2079
    %2206 = vmatpush.msra.mxu0 %v2075
    %2207 = vmatpush.msra.mxu0 %v2071
    %2208 = vmatmul.f32.gmra.mxu0 %v2067
    %v2209 = vpop.f32.mrf.mxu0
    %v2210 = vadd.f32 0.0, %v2209
    %2211 = vdwg.mxu0
    %s2212 = sld [smem:[#allocation3 + $0x2]]
    %p2213 = scmp.ne.s32.totalorder %s2212, 0
    %s2214 = scalar_select %p2213, 1, 0
    %s2215 = scvt.s32.f32 %s2214
    %s2216 = scalar_lea.vmem %s3, 64
    %v2217 = vld [vmem:[%s2216] sm:$0xff]
    %v2218 = vld [vmem:[%s2216 + $0x8] sm:$0xff]
    %v2219 = vld [vmem:[%s2216 + $0x10] sm:$0xff]
    %v2220 = vld [vmem:[%s2216 + $0x18] sm:$0xff]
    %v2221 = vstv %s2215
    %v2222 = vmul.f32 %v2217, %v2221
    %v2223 = vmul.f32 %v2218, %v2221
    %v2224 = vmul.f32 %v2219, %v2221
    %v2225 = vmul.f32 %v2220, %v2221
    %s2226 = ssub.f32 1.0, %s2215
    %v2227 = vstv %s2226
    %v2228 = vmul.f32 %v2150, %v2227
    %v2229 = vmul.f32 %v2170, %v2227
    %v2230 = vmul.f32 %v2190, %v2227
    %v2231 = vmul.f32 %v2210, %v2227
    %v2232 = vadd.f32 %v2222, %v2228
    %v2233 = vadd.f32 %v2223, %v2229
    %v2234 = vadd.f32 %v2224, %v2230
    %v2235 = vadd.f32 %v2225, %v2231
    %v2236 = vld [vmem:[#allocation4] sm:$0xff]
    %v2237 = vld [vmem:[#allocation4 + $0x8] sm:$0xff]
    %v2238 = vld [vmem:[#allocation4 + $0x10] sm:$0xff]
    %v2239 = vld [vmem:[#allocation4 + $0x18] sm:$0xff]
    %v2240 = vld [vmem:[#allocation4 + $0x20] sm:$0xff]
    %v2241 = vld [vmem:[#allocation4 + $0x28] sm:$0xff]
    %v2242 = vld [vmem:[#allocation4 + $0x30] sm:$0xff]
    %v2243 = vld [vmem:[#allocation4 + $0x38] sm:$0xff]
    %v2244 = vld [vmem:[#allocation4 + $0x40] sm:$0xff]
    %v2245 = vld [vmem:[#allocation4 + $0x48] sm:$0xff]
    %v2246 = vld [vmem:[#allocation4 + $0x50] sm:$0xff]
    %v2247 = vld [vmem:[#allocation4 + $0x58] sm:$0xff]
    %v2248 = vld [vmem:[#allocation4 + $0x60] sm:$0xff]
    %v2249 = vld [vmem:[#allocation4 + $0x68] sm:$0xff]
    %v2250 = vld [vmem:[#allocation4 + $0x70] sm:$0xff]
    %v2251 = vld [vmem:[#allocation4 + $0x78] sm:$0xff]
    %v2252 = vld [vmem:[#allocation4 + $0x80] sm:$0xff]
    %v2253 = vld [vmem:[#allocation4 + $0x88] sm:$0xff]
    %v2254 = vld [vmem:[#allocation4 + $0x90] sm:$0xff]
    %v2255 = vld [vmem:[#allocation4 + $0x98] sm:$0xff]
    %v2256 = vld [vmem:[#allocation4 + $0xa0] sm:$0xff]
    %v2257 = vld [vmem:[#allocation4 + $0xa8] sm:$0xff]
    %v2258 = vld [vmem:[#allocation4 + $0xb0] sm:$0xff]
    %v2259 = vld [vmem:[#allocation4 + $0xb8] sm:$0xff]
    %v2260 = vld [vmem:[#allocation4 + $0xc0] sm:$0xff]
    %v2261 = vld [vmem:[#allocation4 + $0xc8] sm:$0xff]
    %v2262 = vld [vmem:[#allocation4 + $0xd0] sm:$0xff]
    %v2263 = vld [vmem:[#allocation4 + $0xd8] sm:$0xff]
    %v2264 = vld [vmem:[#allocation4 + $0xe0] sm:$0xff]
    %v2265 = vld [vmem:[#allocation4 + $0xe8] sm:$0xff]
    %v2266 = vld [vmem:[#allocation4 + $0xf0] sm:$0xff]
    %v2267 = vld [vmem:[#allocation4 + $0xf8] sm:$0xff]
    %v2268 = vld [vmem:[#allocation4 + $0x100] sm:$0xff]
    %v2269 = vld [vmem:[#allocation4 + $0x108] sm:$0xff]
    %v2270 = vld [vmem:[#allocation4 + $0x110] sm:$0xff]
    %v2271 = vld [vmem:[#allocation4 + $0x118] sm:$0xff]
    %v2272 = vld [vmem:[#allocation4 + $0x120] sm:$0xff]
    %v2273 = vld [vmem:[#allocation4 + $0x128] sm:$0xff]
    %v2274 = vld [vmem:[#allocation4 + $0x130] sm:$0xff]
    %v2275 = vld [vmem:[#allocation4 + $0x138] sm:$0xff]
    %v2276 = vld [vmem:[#allocation4 + $0x140] sm:$0xff]
    %v2277 = vld [vmem:[#allocation4 + $0x148] sm:$0xff]
    %v2278 = vld [vmem:[#allocation4 + $0x150] sm:$0xff]
    %v2279 = vld [vmem:[#allocation4 + $0x158] sm:$0xff]
    %v2280 = vld [vmem:[#allocation4 + $0x160] sm:$0xff]
    %v2281 = vld [vmem:[#allocation4 + $0x168] sm:$0xff]
    %v2282 = vld [vmem:[#allocation4 + $0x170] sm:$0xff]
    %v2283 = vld [vmem:[#allocation4 + $0x178] sm:$0xff]
    %v2284 = vld [vmem:[#allocation4 + $0x180] sm:$0xff]
    %v2285 = vld [vmem:[#allocation4 + $0x188] sm:$0xff]
    %v2286 = vld [vmem:[#allocation4 + $0x190] sm:$0xff]
    %v2287 = vld [vmem:[#allocation4 + $0x198] sm:$0xff]
    %v2288 = vld [vmem:[#allocation4 + $0x1a0] sm:$0xff]
    %v2289 = vld [vmem:[#allocation4 + $0x1a8] sm:$0xff]
    %v2290 = vld [vmem:[#allocation4 + $0x1b0] sm:$0xff]
    %v2291 = vld [vmem:[#allocation4 + $0x1b8] sm:$0xff]
    %v2292 = vld [vmem:[#allocation4 + $0x1c0] sm:$0xff]
    %v2293 = vld [vmem:[#allocation4 + $0x1c8] sm:$0xff]
    %v2294 = vld [vmem:[#allocation4 + $0x1d0] sm:$0xff]
    %v2295 = vld [vmem:[#allocation4 + $0x1d8] sm:$0xff]
    %v2296 = vld [vmem:[#allocation4 + $0x1e0] sm:$0xff]
    %v2297 = vld [vmem:[#allocation4 + $0x1e8] sm:$0xff]
    %v2298 = vld [vmem:[#allocation4 + $0x1f0] sm:$0xff]
    %v2299 = vld [vmem:[#allocation4 + $0x1f8] sm:$0xff]
    %2300 = vmatpush.msra.mxu0 %v2296
    %2301 = vmatpush.msra.mxu0 %v2292
    %2302 = vmatpush.msra.mxu0 %v2288
    %2303 = vmatpush.msra.mxu0 %v2284
    %2304 = vmatpush.msra.mxu0 %v2280
    %2305 = vmatpush.msra.mxu0 %v2276
    %2306 = vmatpush.msra.mxu0 %v2272
    %2307 = vmatpush.msra.mxu0 %v2268
    %2308 = vmatpush.msra.mxu0 %v2264
    %2309 = vmatpush.msra.mxu0 %v2260
    %2310 = vmatpush.msra.mxu0 %v2256
    %2311 = vmatpush.msra.mxu0 %v2252
    %2312 = vmatpush.msra.mxu0 %v2248
    %2313 = vmatpush.msra.mxu0 %v2244
    %2314 = vmatpush.msra.mxu0 %v2240
    %2315 = vmatpush.msra.mxu0 %v2236
    %2316 = vmatmul.f32.gmra.mxu0 %v2014
    %v2317 = vpop.f32.mrf.mxu0
    %v2318 = vadd.f32 0.0, %v2317
    %2319 = vdwg.mxu0
    %2320 = vmatpush.msra.mxu0 %v2297
    %2321 = vmatpush.msra.mxu0 %v2293
    %2322 = vmatpush.msra.mxu0 %v2289
    %2323 = vmatpush.msra.mxu0 %v2285
    %2324 = vmatpush.msra.mxu0 %v2281
    %2325 = vmatpush.msra.mxu0 %v2277
    %2326 = vmatpush.msra.mxu0 %v2273
    %2327 = vmatpush.msra.mxu0 %v2269
    %2328 = vmatpush.msra.mxu0 %v2265
    %2329 = vmatpush.msra.mxu0 %v2261
    %2330 = vmatpush.msra.mxu0 %v2257
    %2331 = vmatpush.msra.mxu0 %v2253
    %2332 = vmatpush.msra.mxu0 %v2249
    %2333 = vmatpush.msra.mxu0 %v2245
    %2334 = vmatpush.msra.mxu0 %v2241
    %2335 = vmatpush.msra.mxu0 %v2237
    %2336 = vmatmul.f32.gmra.mxu0 %v2014
    %v2337 = vpop.f32.mrf.mxu0
    %v2338 = vadd.f32 0.0, %v2337
    %2339 = vdwg.mxu0
    %2340 = vmatpush.msra.mxu0 %v2298
    %2341 = vmatpush.msra.mxu0 %v2294
    %2342 = vmatpush.msra.mxu0 %v2290
    %2343 = vmatpush.msra.mxu0 %v2286
    %2344 = vmatpush.msra.mxu0 %v2282
    %2345 = vmatpush.msra.mxu0 %v2278
    %2346 = vmatpush.msra.mxu0 %v2274
    %2347 = vmatpush.msra.mxu0 %v2270
    %2348 = vmatpush.msra.mxu0 %v2266
    %2349 = vmatpush.msra.mxu0 %v2262
    %2350 = vmatpush.msra.mxu0 %v2258
    %2351 = vmatpush.msra.mxu0 %v2254
    %2352 = vmatpush.msra.mxu0 %v2250
    %2353 = vmatpush.msra.mxu0 %v2246
    %2354 = vmatpush.msra.mxu0 %v2242
    %2355 = vmatpush.msra.mxu0 %v2238
    %2356 = vmatmul.f32.gmra.mxu0 %v2014
    %v2357 = vpop.f32.mrf.mxu0
    %v2358 = vadd.f32 0.0, %v2357
    %2359 = vdwg.mxu0
    %2360 = vmatpush.msra.mxu0 %v2299
    %2361 = vmatpush.msra.mxu0 %v2295
    %2362 = vmatpush.msra.mxu0 %v2291
    %2363 = vmatpush.msra.mxu0 %v2287
    %2364 = vmatpush.msra.mxu0 %v2283
    %2365 = vmatpush.msra.mxu0 %v2279
    %2366 = vmatpush.msra.mxu0 %v2275
    %2367 = vmatpush.msra.mxu0 %v2271
    %2368 = vmatpush.msra.mxu0 %v2267
    %2369 = vmatpush.msra.mxu0 %v2263
    %2370 = vmatpush.msra.mxu0 %v2259
    %2371 = vmatpush.msra.mxu0 %v2255
    %2372 = vmatpush.msra.mxu0 %v2251
    %2373 = vmatpush.msra.mxu0 %v2247
    %2374 = vmatpush.msra.mxu0 %v2243
    %2375 = vmatpush.msra.mxu0 %v2239
    %2376 = vmatmul.f32.gmra.mxu0 %v2014
    %v2377 = vpop.f32.mrf.mxu0
    %v2378 = vadd.f32 0.0, %v2377
    %2379 = vdwg.mxu0
    %v2380 = vadd.f32 %v2232, %v2318
    %v2381 = vadd.f32 %v2233, %v2338
    %v2382 = vadd.f32 %v2234, %v2358
    %v2383 = vadd.f32 %v2235, %v2378
    %v2384 = vxor.u32 %v2380, 2147483648
    %v2385 = vmul.f32 %v2384, 1.442695
    %v2386 = vpow.pop %v2385
    %v2387 = vadd.f32 %v2386, 1.0
    %v2388 = vrcp.pop %v2387
    %v2389 = vmul.f32 %v2387, %v2388
    %v2390 = vsub.f32 1.0, %v2389
    %v2391 = vmul.f32 %v2388, %v2390
    %v2392 = vadd.f32 %v2388, %v2391
    %vm2393 = vweird.f32 %v2387
    %vm2394 = vweird.f32 %v2388
    %vm2395 = vmor %vm2393, %vm2394
    %v2396 = vsel %vm2395, %v2388, %v2392
    %v2397 = vand.u32 2147483647, %v2387
    %vm2398 = vcmp.eq.f32.partialorder %v2397, 8.507059e+37
    %v2399 = vand.u32 %v2387, 2147483648
    %v2400 = vor.u32 1.1754944e-38, %v2399
    %v2401 = vsel %vm2398, %v2400, %v2396
    %v2402 = vmul.f32 1.0, %v2401
    %v2403 = vxor.u32 %v2381, 2147483648
    %v2404 = vmul.f32 %v2403, 1.442695
    %v2405 = vpow.pop %v2404
    %v2406 = vadd.f32 %v2405, 1.0
    %v2407 = vrcp.pop %v2406
    %v2408 = vmul.f32 %v2406, %v2407
    %v2409 = vsub.f32 1.0, %v2408
    %v2410 = vmul.f32 %v2407, %v2409
    %v2411 = vadd.f32 %v2407, %v2410
    %vm2412 = vweird.f32 %v2406
    %vm2413 = vweird.f32 %v2407
    %vm2414 = vmor %vm2412, %vm2413
    %v2415 = vsel %vm2414, %v2407, %v2411
    %v2416 = vand.u32 2147483647, %v2406
    %vm2417 = vcmp.eq.f32.partialorder %v2416, 8.507059e+37
    %v2418 = vand.u32 %v2406, 2147483648
    %v2419 = vor.u32 1.1754944e-38, %v2418
    %v2420 = vsel %vm2417, %v2419, %v2415
    %v2421 = vmul.f32 1.0, %v2420
    %v2422 = vtanh.pop %v2382
    %v2423 = vxor.u32 %v2383, 2147483648
    %v2424 = vmul.f32 %v2423, 1.442695
    %v2425 = vpow.pop %v2424
    %v2426 = vadd.f32 %v2425, 1.0
    %v2427 = vrcp.pop %v2426
    %v2428 = vmul.f32 %v2426, %v2427
    %v2429 = vsub.f32 1.0, %v2428
    %v2430 = vmul.f32 %v2427, %v2429
    %v2431 = vadd.f32 %v2427, %v2430
    %vm2432 = vweird.f32 %v2426
    %vm2433 = vweird.f32 %v2427
    %vm2434 = vmor %vm2432, %vm2433
    %v2435 = vsel %vm2434, %v2427, %v2431
    %v2436 = vand.u32 2147483647, %v2426
    %vm2437 = vcmp.eq.f32.partialorder %v2436, 8.507059e+37
    %v2438 = vand.u32 %v2426, 2147483648
    %v2439 = vor.u32 1.1754944e-38, %v2438
    %v2440 = vsel %vm2437, %v2439, %v2435
    %v2441 = vmul.f32 1.0, %v2440
    %v2442 = vmul.f32 %v2421, %v2012
    %v2443 = vmul.f32 %v2402, %v2422
    %v2444 = vadd.f32 %v2442, %v2443
    %v2445 = vtanh.pop %v2444
    %v2446 = vmul.f32 %v2441, %v2445
    %v2447 = vld [vmem:[%s6] sm:$0xff]
    %v2448 = vld [vmem:[%s6 + $0x8] sm:$0xff]
    %v2449 = vld [vmem:[%s6 + $0x10] sm:$0xff]
    %v2450 = vld [vmem:[%s6 + $0x18] sm:$0xff]
    %v2451 = vld [vmem:[%s6 + $0x20] sm:$0xff]
    %v2452 = vld [vmem:[%s6 + $0x28] sm:$0xff]
    %v2453 = vld [vmem:[%s6 + $0x30] sm:$0xff]
    %v2454 = vld [vmem:[%s6 + $0x38] sm:$0xff]
    %v2455 = vld [vmem:[%s6 + $0x40] sm:$0xff]
    %v2456 = vld [vmem:[%s6 + $0x48] sm:$0xff]
    %v2457 = vld [vmem:[%s6 + $0x50] sm:$0xff]
    %v2458 = vld [vmem:[%s6 + $0x58] sm:$0xff]
    %v2459 = vld [vmem:[%s6 + $0x60] sm:$0xff]
    %v2460 = vld [vmem:[%s6 + $0x68] sm:$0xff]
    %v2461 = vld [vmem:[%s6 + $0x70] sm:$0xff]
    %v2462 = vld [vmem:[%s6 + $0x78] sm:$0xff]
    %v2463 = vld [vmem:[%s7] sm:$0x1]
    %v2465 = vperm.slane %v2463, 0
    %2467 = vmatpush.msra.mxu0 %v2462
    %2468 = vmatpush.msra.mxu0 %v2461
    %2469 = vmatpush.msra.mxu0 %v2460
    %2470 = vmatpush.msra.mxu0 %v2459
    %2471 = vmatpush.msra.mxu0 %v2458
    %2472 = vmatpush.msra.mxu0 %v2457
    %2473 = vmatpush.msra.mxu0 %v2456
    %2474 = vmatpush.msra.mxu0 %v2455
    %2475 = vmatpush.msra.mxu0 %v2454
    %2476 = vmatpush.msra.mxu0 %v2453
    %2477 = vmatpush.msra.mxu0 %v2452
    %2478 = vmatpush.msra.mxu0 %v2451
    %2479 = vmatpush.msra.mxu0 %v2450
    %2480 = vmatpush.msra.mxu0 %v2449
    %2481 = vmatpush.msra.mxu0 %v2448
    %2482 = vmatpush.msra.mxu0 %v2447
    %2483 = vmatmul.f32.gmra.mxu0 %v2446
    %v2484 = vpop.f32.mrf.mxu0
    %v2485 = vadd.f32 %v2465, %v2484
    %2486 = vdwg.mxu0
    %s2487 = scalar_lea.vmem [#allocation9], 24
    %2488 = vst [vmem:[%s2487] sm:$0xff] %v2485
    %v2489 = vsel %vm1351, %v2485, -1e+30
    %2490 = vmax.xlane.f32.xlu0 %v2489
    %v2491 = vpop.xlane.xlu0 %2490
    %vm2492 = vcmp.ge.f32.partialorder %v2489, %v2491
    %vm2493 = vmand %vm2492, %vm1351
    %v2494 = vsel %vm2493, %v1350, 128.0
    %2495 = vmin.xlane.f32.xlu0 %v2494
    %v2496 = vpop.xlane.xlu0 %2495
    %vm2497 = vcmp.eq.f32.partialorder %v1350, %v2496
    %v2498 = vsel %vm2497, 1, 0
    %v2499 = vcvt.s32.f32 %v2498
    %v2500 = vld [vmem:[#allocation7] sm:$0xff]
    %v2501 = vld [vmem:[#allocation7 + $0x8] sm:$0xff]
    %v2502 = vld [vmem:[#allocation7 + $0x10] sm:$0xff]
    %v2503 = vld [vmem:[#allocation7 + $0x18] sm:$0xff]
    %v2504 = vld [vmem:[#allocation7 + $0x20] sm:$0xff]
    %v2505 = vld [vmem:[#allocation7 + $0x28] sm:$0xff]
    %v2506 = vld [vmem:[#allocation7 + $0x30] sm:$0xff]
    %v2507 = vld [vmem:[#allocation7 + $0x38] sm:$0xff]
    %v2508 = vld [vmem:[#allocation7 + $0x40] sm:$0xff]
    %v2509 = vld [vmem:[#allocation7 + $0x48] sm:$0xff]
    %v2510 = vld [vmem:[#allocation7 + $0x50] sm:$0xff]
    %v2511 = vld [vmem:[#allocation7 + $0x58] sm:$0xff]
    %v2512 = vld [vmem:[#allocation7 + $0x60] sm:$0xff]
    %v2513 = vld [vmem:[#allocation7 + $0x68] sm:$0xff]
    %v2514 = vld [vmem:[#allocation7 + $0x70] sm:$0xff]
    %v2515 = vld [vmem:[#allocation7 + $0x78] sm:$0xff]
    %v2516 = vld [vmem:[#allocation7 + $0x80] sm:$0xff]
    %v2517 = vld [vmem:[#allocation7 + $0x88] sm:$0xff]
    %v2518 = vld [vmem:[#allocation7 + $0x90] sm:$0xff]
    %v2519 = vld [vmem:[#allocation7 + $0x98] sm:$0xff]
    %v2520 = vld [vmem:[#allocation7 + $0xa0] sm:$0xff]
    %v2521 = vld [vmem:[#allocation7 + $0xa8] sm:$0xff]
    %v2522 = vld [vmem:[#allocation7 + $0xb0] sm:$0xff]
    %v2523 = vld [vmem:[#allocation7 + $0xb8] sm:$0xff]
    %v2524 = vld [vmem:[#allocation7 + $0xc0] sm:$0xff]
    %v2525 = vld [vmem:[#allocation7 + $0xc8] sm:$0xff]
    %v2526 = vld [vmem:[#allocation7 + $0xd0] sm:$0xff]
    %v2527 = vld [vmem:[#allocation7 + $0xd8] sm:$0xff]
    %v2528 = vld [vmem:[#allocation7 + $0xe0] sm:$0xff]
    %v2529 = vld [vmem:[#allocation7 + $0xe8] sm:$0xff]
    %v2530 = vld [vmem:[#allocation7 + $0xf0] sm:$0xff]
    %v2531 = vld [vmem:[#allocation7 + $0xf8] sm:$0xff]
    %v2532 = vld [vmem:[#allocation7 + $0x100] sm:$0xff]
    %v2533 = vld [vmem:[#allocation7 + $0x108] sm:$0xff]
    %v2534 = vld [vmem:[#allocation7 + $0x110] sm:$0xff]
    %v2535 = vld [vmem:[#allocation7 + $0x118] sm:$0xff]
    %v2536 = vld [vmem:[#allocation7 + $0x120] sm:$0xff]
    %v2537 = vld [vmem:[#allocation7 + $0x128] sm:$0xff]
    %v2538 = vld [vmem:[#allocation7 + $0x130] sm:$0xff]
    %v2539 = vld [vmem:[#allocation7 + $0x138] sm:$0xff]
    %v2540 = vld [vmem:[#allocation7 + $0x140] sm:$0xff]
    %v2541 = vld [vmem:[#allocation7 + $0x148] sm:$0xff]
    %v2542 = vld [vmem:[#allocation7 + $0x150] sm:$0xff]
    %v2543 = vld [vmem:[#allocation7 + $0x158] sm:$0xff]
    %v2544 = vld [vmem:[#allocation7 + $0x160] sm:$0xff]
    %v2545 = vld [vmem:[#allocation7 + $0x168] sm:$0xff]
    %v2546 = vld [vmem:[#allocation7 + $0x170] sm:$0xff]
    %v2547 = vld [vmem:[#allocation7 + $0x178] sm:$0xff]
    %v2548 = vld [vmem:[#allocation7 + $0x180] sm:$0xff]
    %v2549 = vld [vmem:[#allocation7 + $0x188] sm:$0xff]
    %v2550 = vld [vmem:[#allocation7 + $0x190] sm:$0xff]
    %v2551 = vld [vmem:[#allocation7 + $0x198] sm:$0xff]
    %v2552 = vld [vmem:[#allocation7 + $0x1a0] sm:$0xff]
    %v2553 = vld [vmem:[#allocation7 + $0x1a8] sm:$0xff]
    %v2554 = vld [vmem:[#allocation7 + $0x1b0] sm:$0xff]
    %v2555 = vld [vmem:[#allocation7 + $0x1b8] sm:$0xff]
    %v2556 = vld [vmem:[#allocation7 + $0x1c0] sm:$0xff]
    %v2557 = vld [vmem:[#allocation7 + $0x1c8] sm:$0xff]
    %v2558 = vld [vmem:[#allocation7 + $0x1d0] sm:$0xff]
    %v2559 = vld [vmem:[#allocation7 + $0x1d8] sm:$0xff]
    %v2560 = vld [vmem:[#allocation7 + $0x1e0] sm:$0xff]
    %v2561 = vld [vmem:[#allocation7 + $0x1e8] sm:$0xff]
    %v2562 = vld [vmem:[#allocation7 + $0x1f0] sm:$0xff]
    %v2563 = vld [vmem:[#allocation7 + $0x1f8] sm:$0xff]
    %2564 = vmatpush.msra.mxu0 %v2560
    %2565 = vmatpush.msra.mxu0 %v2556
    %2566 = vmatpush.msra.mxu0 %v2552
    %2567 = vmatpush.msra.mxu0 %v2548
    %2568 = vmatpush.msra.mxu0 %v2544
    %2569 = vmatpush.msra.mxu0 %v2540
    %2570 = vmatpush.msra.mxu0 %v2536
    %2571 = vmatpush.msra.mxu0 %v2532
    %2572 = vmatpush.msra.mxu0 %v2528
    %2573 = vmatpush.msra.mxu0 %v2524
    %2574 = vmatpush.msra.mxu0 %v2520
    %2575 = vmatpush.msra.mxu0 %v2516
    %2576 = vmatpush.msra.mxu0 %v2512
    %2577 = vmatpush.msra.mxu0 %v2508
    %2578 = vmatpush.msra.mxu0 %v2504
    %2579 = vmatpush.msra.mxu0 %v2500
    %2580 = vmatmul.f32.gmra.mxu0 %v2499
    %v2581 = vpop.f32.mrf.mxu0
    %v2582 = vadd.f32 0.0, %v2581
    %2583 = vdwg.mxu0
    %2584 = vmatpush.msra.mxu0 %v2561
    %2585 = vmatpush.msra.mxu0 %v2557
    %2586 = vmatpush.msra.mxu0 %v2553
    %2587 = vmatpush.msra.mxu0 %v2549
    %2588 = vmatpush.msra.mxu0 %v2545
    %2589 = vmatpush.msra.mxu0 %v2541
    %2590 = vmatpush.msra.mxu0 %v2537
    %2591 = vmatpush.msra.mxu0 %v2533
    %2592 = vmatpush.msra.mxu0 %v2529
    %2593 = vmatpush.msra.mxu0 %v2525
    %2594 = vmatpush.msra.mxu0 %v2521
    %2595 = vmatpush.msra.mxu0 %v2517
    %2596 = vmatpush.msra.mxu0 %v2513
    %2597 = vmatpush.msra.mxu0 %v2509
    %2598 = vmatpush.msra.mxu0 %v2505
    %2599 = vmatpush.msra.mxu0 %v2501
    %2600 = vmatmul.f32.gmra.mxu0 %v2499
    %v2601 = vpop.f32.mrf.mxu0
    %v2602 = vadd.f32 0.0, %v2601
    %2603 = vdwg.mxu0
    %2604 = vmatpush.msra.mxu0 %v2562
    %2605 = vmatpush.msra.mxu0 %v2558
    %2606 = vmatpush.msra.mxu0 %v2554
    %2607 = vmatpush.msra.mxu0 %v2550
    %2608 = vmatpush.msra.mxu0 %v2546
    %2609 = vmatpush.msra.mxu0 %v2542
    %2610 = vmatpush.msra.mxu0 %v2538
    %2611 = vmatpush.msra.mxu0 %v2534
    %2612 = vmatpush.msra.mxu0 %v2530
    %2613 = vmatpush.msra.mxu0 %v2526
    %2614 = vmatpush.msra.mxu0 %v2522
    %2615 = vmatpush.msra.mxu0 %v2518
    %2616 = vmatpush.msra.mxu0 %v2514
    %2617 = vmatpush.msra.mxu0 %v2510
    %2618 = vmatpush.msra.mxu0 %v2506
    %2619 = vmatpush.msra.mxu0 %v2502
    %2620 = vmatmul.f32.gmra.mxu0 %v2499
    %v2621 = vpop.f32.mrf.mxu0
    %v2622 = vadd.f32 0.0, %v2621
    %2623 = vdwg.mxu0
    %2624 = vmatpush.msra.mxu0 %v2563
    %2625 = vmatpush.msra.mxu0 %v2559
    %2626 = vmatpush.msra.mxu0 %v2555
    %2627 = vmatpush.msra.mxu0 %v2551
    %2628 = vmatpush.msra.mxu0 %v2547
    %2629 = vmatpush.msra.mxu0 %v2543
    %2630 = vmatpush.msra.mxu0 %v2539
    %2631 = vmatpush.msra.mxu0 %v2535
    %2632 = vmatpush.msra.mxu0 %v2531
    %2633 = vmatpush.msra.mxu0 %v2527
    %2634 = vmatpush.msra.mxu0 %v2523
    %2635 = vmatpush.msra.mxu0 %v2519
    %2636 = vmatpush.msra.mxu0 %v2515
    %2637 = vmatpush.msra.mxu0 %v2511
    %2638 = vmatpush.msra.mxu0 %v2507
    %2639 = vmatpush.msra.mxu0 %v2503
    %2640 = vmatmul.f32.gmra.mxu0 %v2499
    %v2641 = vpop.f32.mrf.mxu0
    %v2642 = vadd.f32 0.0, %v2641
    %2643 = vdwg.mxu0
    %s2644 = sld [smem:[#allocation3 + $0x3]]
    %p2645 = scmp.ne.s32.totalorder %s2644, 0
    %s2646 = scalar_select %p2645, 1, 0
    %s2647 = scvt.s32.f32 %s2646
    %s2648 = scalar_lea.vmem %s3, 96
    %v2649 = vld [vmem:[%s2648] sm:$0xff]
    %v2650 = vld [vmem:[%s2648 + $0x8] sm:$0xff]
    %v2651 = vld [vmem:[%s2648 + $0x10] sm:$0xff]
    %v2652 = vld [vmem:[%s2648 + $0x18] sm:$0xff]
    %v2653 = vstv %s2647
    %v2654 = vmul.f32 %v2649, %v2653
    %v2655 = vmul.f32 %v2650, %v2653
    %v2656 = vmul.f32 %v2651, %v2653
    %v2657 = vmul.f32 %v2652, %v2653
    %s2658 = ssub.f32 1.0, %s2647
    %v2659 = vstv %s2658
    %v2660 = vmul.f32 %v2582, %v2659
    %v2661 = vmul.f32 %v2602, %v2659
    %v2662 = vmul.f32 %v2622, %v2659
    %v2663 = vmul.f32 %v2642, %v2659
    %v2664 = vadd.f32 %v2654, %v2660
    %v2665 = vadd.f32 %v2655, %v2661
    %v2666 = vadd.f32 %v2656, %v2662
    %v2667 = vadd.f32 %v2657, %v2663
    %v2668 = vld [vmem:[#allocation4] sm:$0xff]
    %v2669 = vld [vmem:[#allocation4 + $0x8] sm:$0xff]
    %v2670 = vld [vmem:[#allocation4 + $0x10] sm:$0xff]
    %v2671 = vld [vmem:[#allocation4 + $0x18] sm:$0xff]
    %v2672 = vld [vmem:[#allocation4 + $0x20] sm:$0xff]
    %v2673 = vld [vmem:[#allocation4 + $0x28] sm:$0xff]
    %v2674 = vld [vmem:[#allocation4 + $0x30] sm:$0xff]
    %v2675 = vld [vmem:[#allocation4 + $0x38] sm:$0xff]
    %v2676 = vld [vmem:[#allocation4 + $0x40] sm:$0xff]
    %v2677 = vld [vmem:[#allocation4 + $0x48] sm:$0xff]
    %v2678 = vld [vmem:[#allocation4 + $0x50] sm:$0xff]
    %v2679 = vld [vmem:[#allocation4 + $0x58] sm:$0xff]
    %v2680 = vld [vmem:[#allocation4 + $0x60] sm:$0xff]
    %v2681 = vld [vmem:[#allocation4 + $0x68] sm:$0xff]
    %v2682 = vld [vmem:[#allocation4 + $0x70] sm:$0xff]
    %v2683 = vld [vmem:[#allocation4 + $0x78] sm:$0xff]
    %v2684 = vld [vmem:[#allocation4 + $0x80] sm:$0xff]
    %v2685 = vld [vmem:[#allocation4 + $0x88] sm:$0xff]
    %v2686 = vld [vmem:[#allocation4 + $0x90] sm:$0xff]
    %v2687 = vld [vmem:[#allocation4 + $0x98] sm:$0xff]
    %v2688 = vld [vmem:[#allocation4 + $0xa0] sm:$0xff]
    %v2689 = vld [vmem:[#allocation4 + $0xa8] sm:$0xff]
    %v2690 = vld [vmem:[#allocation4 + $0xb0] sm:$0xff]
    %v2691 = vld [vmem:[#allocation4 + $0xb8] sm:$0xff]
    %v2692 = vld [vmem:[#allocation4 + $0xc0] sm:$0xff]
    %v2693 = vld [vmem:[#allocation4 + $0xc8] sm:$0xff]
    %v2694 = vld [vmem:[#allocation4 + $0xd0] sm:$0xff]
    %v2695 = vld [vmem:[#allocation4 + $0xd8] sm:$0xff]
    %v2696 = vld [vmem:[#allocation4 + $0xe0] sm:$0xff]
    %v2697 = vld [vmem:[#allocation4 + $0xe8] sm:$0xff]
    %v2698 = vld [vmem:[#allocation4 + $0xf0] sm:$0xff]
    %v2699 = vld [vmem:[#allocation4 + $0xf8] sm:$0xff]
    %v2700 = vld [vmem:[#allocation4 + $0x100] sm:$0xff]
    %v2701 = vld [vmem:[#allocation4 + $0x108] sm:$0xff]
    %v2702 = vld [vmem:[#allocation4 + $0x110] sm:$0xff]
    %v2703 = vld [vmem:[#allocation4 + $0x118] sm:$0xff]
    %v2704 = vld [vmem:[#allocation4 + $0x120] sm:$0xff]
    %v2705 = vld [vmem:[#allocation4 + $0x128] sm:$0xff]
    %v2706 = vld [vmem:[#allocation4 + $0x130] sm:$0xff]
    %v2707 = vld [vmem:[#allocation4 + $0x138] sm:$0xff]
    %v2708 = vld [vmem:[#allocation4 + $0x140] sm:$0xff]
    %v2709 = vld [vmem:[#allocation4 + $0x148] sm:$0xff]
    %v2710 = vld [vmem:[#allocation4 + $0x150] sm:$0xff]
    %v2711 = vld [vmem:[#allocation4 + $0x158] sm:$0xff]
    %v2712 = vld [vmem:[#allocation4 + $0x160] sm:$0xff]
    %v2713 = vld [vmem:[#allocation4 + $0x168] sm:$0xff]
    %v2714 = vld [vmem:[#allocation4 + $0x170] sm:$0xff]
    %v2715 = vld [vmem:[#allocation4 + $0x178] sm:$0xff]
    %v2716 = vld [vmem:[#allocation4 + $0x180] sm:$0xff]
    %v2717 = vld [vmem:[#allocation4 + $0x188] sm:$0xff]
    %v2718 = vld [vmem:[#allocation4 + $0x190] sm:$0xff]
    %v2719 = vld [vmem:[#allocation4 + $0x198] sm:$0xff]
    %v2720 = vld [vmem:[#allocation4 + $0x1a0] sm:$0xff]
    %v2721 = vld [vmem:[#allocation4 + $0x1a8] sm:$0xff]
    %v2722 = vld [vmem:[#allocation4 + $0x1b0] sm:$0xff]
    %v2723 = vld [vmem:[#allocation4 + $0x1b8] sm:$0xff]
    %v2724 = vld [vmem:[#allocation4 + $0x1c0] sm:$0xff]
    %v2725 = vld [vmem:[#allocation4 + $0x1c8] sm:$0xff]
    %v2726 = vld [vmem:[#allocation4 + $0x1d0] sm:$0xff]
    %v2727 = vld [vmem:[#allocation4 + $0x1d8] sm:$0xff]
    %v2728 = vld [vmem:[#allocation4 + $0x1e0] sm:$0xff]
    %v2729 = vld [vmem:[#allocation4 + $0x1e8] sm:$0xff]
    %v2730 = vld [vmem:[#allocation4 + $0x1f0] sm:$0xff]
    %v2731 = vld [vmem:[#allocation4 + $0x1f8] sm:$0xff]
    %2732 = vmatpush.msra.mxu0 %v2728
    %2733 = vmatpush.msra.mxu0 %v2724
    %2734 = vmatpush.msra.mxu0 %v2720
    %2735 = vmatpush.msra.mxu0 %v2716
    %2736 = vmatpush.msra.mxu0 %v2712
    %2737 = vmatpush.msra.mxu0 %v2708
    %2738 = vmatpush.msra.mxu0 %v2704
    %2739 = vmatpush.msra.mxu0 %v2700
    %2740 = vmatpush.msra.mxu0 %v2696
    %2741 = vmatpush.msra.mxu0 %v2692
    %2742 = vmatpush.msra.mxu0 %v2688
    %2743 = vmatpush.msra.mxu0 %v2684
    %2744 = vmatpush.msra.mxu0 %v2680
    %2745 = vmatpush.msra.mxu0 %v2676
    %2746 = vmatpush.msra.mxu0 %v2672
    %2747 = vmatpush.msra.mxu0 %v2668
    %2748 = vmatmul.f32.gmra.mxu0 %v2446
    %v2749 = vpop.f32.mrf.mxu0
    %v2750 = vadd.f32 0.0, %v2749
    %2751 = vdwg.mxu0
    %2752 = vmatpush.msra.mxu0 %v2729
    %2753 = vmatpush.msra.mxu0 %v2725
    %2754 = vmatpush.msra.mxu0 %v2721
    %2755 = vmatpush.msra.mxu0 %v2717
    %2756 = vmatpush.msra.mxu0 %v2713
    %2757 = vmatpush.msra.mxu0 %v2709
    %2758 = vmatpush.msra.mxu0 %v2705
    %2759 = vmatpush.msra.mxu0 %v2701
    %2760 = vmatpush.msra.mxu0 %v2697
    %2761 = vmatpush.msra.mxu0 %v2693
    %2762 = vmatpush.msra.mxu0 %v2689
    %2763 = vmatpush.msra.mxu0 %v2685
    %2764 = vmatpush.msra.mxu0 %v2681
    %2765 = vmatpush.msra.mxu0 %v2677
    %2766 = vmatpush.msra.mxu0 %v2673
    %2767 = vmatpush.msra.mxu0 %v2669
    %2768 = vmatmul.f32.gmra.mxu0 %v2446
    %v2769 = vpop.f32.mrf.mxu0
    %v2770 = vadd.f32 0.0, %v2769
    %2771 = vdwg.mxu0
    %2772 = vmatpush.msra.mxu0 %v2730
    %2773 = vmatpush.msra.mxu0 %v2726
    %2774 = vmatpush.msra.mxu0 %v2722
    %2775 = vmatpush.msra.mxu0 %v2718
    %2776 = vmatpush.msra.mxu0 %v2714
    %2777 = vmatpush.msra.mxu0 %v2710
    %2778 = vmatpush.msra.mxu0 %v2706
    %2779 = vmatpush.msra.mxu0 %v2702
    %2780 = vmatpush.msra.mxu0 %v2698
    %2781 = vmatpush.msra.mxu0 %v2694
    %2782 = vmatpush.msra.mxu0 %v2690
    %2783 = vmatpush.msra.mxu0 %v2686
    %2784 = vmatpush.msra.mxu0 %v2682
    %2785 = vmatpush.msra.mxu0 %v2678
    %2786 = vmatpush.msra.mxu0 %v2674
    %2787 = vmatpush.msra.mxu0 %v2670
    %2788 = vmatmul.f32.gmra.mxu0 %v2446
    %v2789 = vpop.f32.mrf.mxu0
    %v2790 = vadd.f32 0.0, %v2789
    %2791 = vdwg.mxu0
    %2792 = vmatpush.msra.mxu0 %v2731
    %2793 = vmatpush.msra.mxu0 %v2727
    %2794 = vmatpush.msra.mxu0 %v2723
    %2795 = vmatpush.msra.mxu0 %v2719
    %2796 = vmatpush.msra.mxu0 %v2715
    %2797 = vmatpush.msra.mxu0 %v2711
    %2798 = vmatpush.msra.mxu0 %v2707
    %2799 = vmatpush.msra.mxu0 %v2703
    %2800 = vmatpush.msra.mxu0 %v2699
    %2801 = vmatpush.msra.mxu0 %v2695
    %2802 = vmatpush.msra.mxu0 %v2691
    %2803 = vmatpush.msra.mxu0 %v2687
    %2804 = vmatpush.msra.mxu0 %v2683
    %2805 = vmatpush.msra.mxu0 %v2679
    %2806 = vmatpush.msra.mxu0 %v2675
    %2807 = vmatpush.msra.mxu0 %v2671
    %2808 = vmatmul.f32.gmra.mxu0 %v2446
    %v2809 = vpop.f32.mrf.mxu0
    %v2810 = vadd.f32 0.0, %v2809
    %2811 = vdwg.mxu0
    %v2812 = vadd.f32 %v2664, %v2750
    %v2813 = vadd.f32 %v2665, %v2770
    %v2814 = vadd.f32 %v2666, %v2790
    %v2815 = vadd.f32 %v2667, %v2810
    %v2816 = vxor.u32 %v2812, 2147483648
    %v2817 = vmul.f32 %v2816, 1.442695
    %v2818 = vpow.pop %v2817
    %v2819 = vadd.f32 %v2818, 1.0
    %v2820 = vrcp.pop %v2819
    %v2821 = vmul.f32 %v2819, %v2820
    %v2822 = vsub.f32 1.0, %v2821
    %v2823 = vmul.f32 %v2820, %v2822
    %v2824 = vadd.f32 %v2820, %v2823
    %vm2825 = vweird.f32 %v2819
    %vm2826 = vweird.f32 %v2820
    %vm2827 = vmor %vm2825, %vm2826
    %v2828 = vsel %vm2827, %v2820, %v2824
    %v2829 = vand.u32 2147483647, %v2819
    %vm2830 = vcmp.eq.f32.partialorder %v2829, 8.507059e+37
    %v2831 = vand.u32 %v2819, 2147483648
    %v2832 = vor.u32 1.1754944e-38, %v2831
    %v2833 = vsel %vm2830, %v2832, %v2828
    %v2834 = vmul.f32 1.0, %v2833
    %v2835 = vxor.u32 %v2813, 2147483648
    %v2836 = vmul.f32 %v2835, 1.442695
    %v2837 = vpow.pop %v2836
    %v2838 = vadd.f32 %v2837, 1.0
    %v2839 = vrcp.pop %v2838
    %v2840 = vmul.f32 %v2838, %v2839
    %v2841 = vsub.f32 1.0, %v2840
    %v2842 = vmul.f32 %v2839, %v2841
    %v2843 = vadd.f32 %v2839, %v2842
    %vm2844 = vweird.f32 %v2838
    %vm2845 = vweird.f32 %v2839
    %vm2846 = vmor %vm2844, %vm2845
    %v2847 = vsel %vm2846, %v2839, %v2843
    %v2848 = vand.u32 2147483647, %v2838
    %vm2849 = vcmp.eq.f32.partialorder %v2848, 8.507059e+37
    %v2850 = vand.u32 %v2838, 2147483648
    %v2851 = vor.u32 1.1754944e-38, %v2850
    %v2852 = vsel %vm2849, %v2851, %v2847
    %v2853 = vmul.f32 1.0, %v2852
    %v2854 = vtanh.pop %v2814
    %v2855 = vxor.u32 %v2815, 2147483648
    %v2856 = vmul.f32 %v2855, 1.442695
    %v2857 = vpow.pop %v2856
    %v2858 = vadd.f32 %v2857, 1.0
    %v2859 = vrcp.pop %v2858
    %v2860 = vmul.f32 %v2858, %v2859
    %v2861 = vsub.f32 1.0, %v2860
    %v2862 = vmul.f32 %v2859, %v2861
    %v2863 = vadd.f32 %v2859, %v2862
    %vm2864 = vweird.f32 %v2858
    %vm2865 = vweird.f32 %v2859
    %vm2866 = vmor %vm2864, %vm2865
    %v2867 = vsel %vm2866, %v2859, %v2863
    %v2868 = vand.u32 2147483647, %v2858
    %vm2869 = vcmp.eq.f32.partialorder %v2868, 8.507059e+37
    %v2870 = vand.u32 %v2858, 2147483648
    %v2871 = vor.u32 1.1754944e-38, %v2870
    %v2872 = vsel %vm2869, %v2871, %v2867
    %v2873 = vmul.f32 1.0, %v2872
    %v2874 = vmul.f32 %v2853, %v2444
    %v2875 = vmul.f32 %v2834, %v2854
    %v2876 = vadd.f32 %v2874, %v2875
    %v2877 = vtanh.pop %v2876
    %v2878 = vmul.f32 %v2873, %v2877
    %v2879 = vld [vmem:[%s6] sm:$0xff]
    %v2880 = vld [vmem:[%s6 + $0x8] sm:$0xff]
    %v2881 = vld [vmem:[%s6 + $0x10] sm:$0xff]
    %v2882 = vld [vmem:[%s6 + $0x18] sm:$0xff]
    %v2883 = vld [vmem:[%s6 + $0x20] sm:$0xff]
    %v2884 = vld [vmem:[%s6 + $0x28] sm:$0xff]
    %v2885 = vld [vmem:[%s6 + $0x30] sm:$0xff]
    %v2886 = vld [vmem:[%s6 + $0x38] sm:$0xff]
    %v2887 = vld [vmem:[%s6 + $0x40] sm:$0xff]
    %v2888 = vld [vmem:[%s6 + $0x48] sm:$0xff]
    %v2889 = vld [vmem:[%s6 + $0x50] sm:$0xff]
    %v2890 = vld [vmem:[%s6 + $0x58] sm:$0xff]
    %v2891 = vld [vmem:[%s6 + $0x60] sm:$0xff]
    %v2892 = vld [vmem:[%s6 + $0x68] sm:$0xff]
    %v2893 = vld [vmem:[%s6 + $0x70] sm:$0xff]
    %v2894 = vld [vmem:[%s6 + $0x78] sm:$0xff]
    %v2895 = vld [vmem:[%s7] sm:$0x1]
    %v2897 = vperm.slane %v2895, 0
    %2899 = vmatpush.msra.mxu0 %v2894
    %2900 = vmatpush.msra.mxu0 %v2893
    %2901 = vmatpush.msra.mxu0 %v2892
    %2902 = vmatpush.msra.mxu0 %v2891
    %2903 = vmatpush.msra.mxu0 %v2890
    %2904 = vmatpush.msra.mxu0 %v2889
    %2905 = vmatpush.msra.mxu0 %v2888
    %2906 = vmatpush.msra.mxu0 %v2887
    %2907 = vmatpush.msra.mxu0 %v2886
    %2908 = vmatpush.msra.mxu0 %v2885
    %2909 = vmatpush.msra.mxu0 %v2884
    %2910 = vmatpush.msra.mxu0 %v2883
    %2911 = vmatpush.msra.mxu0 %v2882
    %2912 = vmatpush.msra.mxu0 %v2881
    %2913 = vmatpush.msra.mxu0 %v2880
    %2914 = vmatpush.msra.mxu0 %v2879
    %2915 = vmatmul.f32.gmra.mxu0 %v2878
    %v2916 = vpop.f32.mrf.mxu0
    %v2917 = vadd.f32 %v2897, %v2916
    %2918 = vdwg.mxu0
    %s2919 = scalar_lea.vmem [#allocation9], 32
    %2920 = vst [vmem:[%s2919] sm:$0xff] %v2917
    %v2921 = vsel %vm1351, %v2917, -1e+30
    %2922 = vmax.xlane.f32.xlu0 %v2921
    %v2923 = vpop.xlane.xlu0 %2922
    %vm2924 = vcmp.ge.f32.partialorder %v2921, %v2923
    %vm2925 = vmand %vm2924, %vm1351
    %v2926 = vsel %vm2925, %v1350, 128.0
    %2927 = vmin.xlane.f32.xlu0 %v2926
    %v2928 = vpop.xlane.xlu0 %2927
    %vm2929 = vcmp.eq.f32.partialorder %v1350, %v2928
    %v2930 = vsel %vm2929, 1, 0
    %v2931 = vcvt.s32.f32 %v2930
    %v2932 = vld [vmem:[#allocation7] sm:$0xff]
    %v2933 = vld [vmem:[#allocation7 + $0x8] sm:$0xff]
    %v2934 = vld [vmem:[#allocation7 + $0x10] sm:$0xff]
    %v2935 = vld [vmem:[#allocation7 + $0x18] sm:$0xff]
    %v2936 = vld [vmem:[#allocation7 + $0x20] sm:$0xff]
    %v2937 = vld [vmem:[#allocation7 + $0x28] sm:$0xff]
    %v2938 = vld [vmem:[#allocation7 + $0x30] sm:$0xff]
    %v2939 = vld [vmem:[#allocation7 + $0x38] sm:$0xff]
    %v2940 = vld [vmem:[#allocation7 + $0x40] sm:$0xff]
    %v2941 = vld [vmem:[#allocation7 + $0x48] sm:$0xff]
    %v2942 = vld [vmem:[#allocation7 + $0x50] sm:$0xff]
    %v2943 = vld [vmem:[#allocation7 + $0x58] sm:$0xff]
    %v2944 = vld [vmem:[#allocation7 + $0x60] sm:$0xff]
    %v2945 = vld [vmem:[#allocation7 + $0x68] sm:$0xff]
    %v2946 = vld [vmem:[#allocation7 + $0x70] sm:$0xff]
    %v2947 = vld [vmem:[#allocation7 + $0x78] sm:$0xff]
    %v2948 = vld [vmem:[#allocation7 + $0x80] sm:$0xff]
    %v2949 = vld [vmem:[#allocation7 + $0x88] sm:$0xff]
    %v2950 = vld [vmem:[#allocation7 + $0x90] sm:$0xff]
    %v2951 = vld [vmem:[#allocation7 + $0x98] sm:$0xff]
    %v2952 = vld [vmem:[#allocation7 + $0xa0] sm:$0xff]
    %v2953 = vld [vmem:[#allocation7 + $0xa8] sm:$0xff]
    %v2954 = vld [vmem:[#allocation7 + $0xb0] sm:$0xff]
    %v2955 = vld [vmem:[#allocation7 + $0xb8] sm:$0xff]
    %v2956 = vld [vmem:[#allocation7 + $0xc0] sm:$0xff]
    %v2957 = vld [vmem:[#allocation7 + $0xc8] sm:$0xff]
    %v2958 = vld [vmem:[#allocation7 + $0xd0] sm:$0xff]
    %v2959 = vld [vmem:[#allocation7 + $0xd8] sm:$0xff]
    %v2960 = vld [vmem:[#allocation7 + $0xe0] sm:$0xff]
    %v2961 = vld [vmem:[#allocation7 + $0xe8] sm:$0xff]
    %v2962 = vld [vmem:[#allocation7 + $0xf0] sm:$0xff]
    %v2963 = vld [vmem:[#allocation7 + $0xf8] sm:$0xff]
    %v2964 = vld [vmem:[#allocation7 + $0x100] sm:$0xff]
    %v2965 = vld [vmem:[#allocation7 + $0x108] sm:$0xff]
    %v2966 = vld [vmem:[#allocation7 + $0x110] sm:$0xff]
    %v2967 = vld [vmem:[#allocation7 + $0x118] sm:$0xff]
    %v2968 = vld [vmem:[#allocation7 + $0x120] sm:$0xff]
    %v2969 = vld [vmem:[#allocation7 + $0x128] sm:$0xff]
    %v2970 = vld [vmem:[#allocation7 + $0x130] sm:$0xff]
    %v2971 = vld [vmem:[#allocation7 + $0x138] sm:$0xff]
    %v2972 = vld [vmem:[#allocation7 + $0x140] sm:$0xff]
    %v2973 = vld [vmem:[#allocation7 + $0x148] sm:$0xff]
    %v2974 = vld [vmem:[#allocation7 + $0x150] sm:$0xff]
    %v2975 = vld [vmem:[#allocation7 + $0x158] sm:$0xff]
    %v2976 = vld [vmem:[#allocation7 + $0x160] sm:$0xff]
    %v2977 = vld [vmem:[#allocation7 + $0x168] sm:$0xff]
    %v2978 = vld [vmem:[#allocation7 + $0x170] sm:$0xff]
    %v2979 = vld [vmem:[#allocation7 + $0x178] sm:$0xff]
    %v2980 = vld [vmem:[#allocation7 + $0x180] sm:$0xff]
    %v2981 = vld [vmem:[#allocation7 + $0x188] sm:$0xff]
    %v2982 = vld [vmem:[#allocation7 + $0x190] sm:$0xff]
    %v2983 = vld [vmem:[#allocation7 + $0x198] sm:$0xff]
    %v2984 = vld [vmem:[#allocation7 + $0x1a0] sm:$0xff]
    %v2985 = vld [vmem:[#allocation7 + $0x1a8] sm:$0xff]
    %v2986 = vld [vmem:[#allocation7 + $0x1b0] sm:$0xff]
    %v2987 = vld [vmem:[#allocation7 + $0x1b8] sm:$0xff]
    %v2988 = vld [vmem:[#allocation7 + $0x1c0] sm:$0xff]
    %v2989 = vld [vmem:[#allocation7 + $0x1c8] sm:$0xff]
    %v2990 = vld [vmem:[#allocation7 + $0x1d0] sm:$0xff]
    %v2991 = vld [vmem:[#allocation7 + $0x1d8] sm:$0xff]
    %v2992 = vld [vmem:[#allocation7 + $0x1e0] sm:$0xff]
    %v2993 = vld [vmem:[#allocation7 + $0x1e8] sm:$0xff]
    %v2994 = vld [vmem:[#allocation7 + $0x1f0] sm:$0xff]
    %v2995 = vld [vmem:[#allocation7 + $0x1f8] sm:$0xff]
    %2996 = vmatpush.msra.mxu0 %v2992
    %2997 = vmatpush.msra.mxu0 %v2988
    %2998 = vmatpush.msra.mxu0 %v2984
    %2999 = vmatpush.msra.mxu0 %v2980
    %3000 = vmatpush.msra.mxu0 %v2976
    %3001 = vmatpush.msra.mxu0 %v2972
    %3002 = vmatpush.msra.mxu0 %v2968
    %3003 = vmatpush.msra.mxu0 %v2964
    %3004 = vmatpush.msra.mxu0 %v2960
    %3005 = vmatpush.msra.mxu0 %v2956
    %3006 = vmatpush.msra.mxu0 %v2952
    %3007 = vmatpush.msra.mxu0 %v2948
    %3008 = vmatpush.msra.mxu0 %v2944
    %3009 = vmatpush.msra.mxu0 %v2940
    %3010 = vmatpush.msra.mxu0 %v2936
    %3011 = vmatpush.msra.mxu0 %v2932
    %3012 = vmatmul.f32.gmra.mxu0 %v2931
    %v3013 = vpop.f32.mrf.mxu0
    %v3014 = vadd.f32 0.0, %v3013
    %3015 = vdwg.mxu0
    %3016 = vmatpush.msra.mxu0 %v2993
    %3017 = vmatpush.msra.mxu0 %v2989
    %3018 = vmatpush.msra.mxu0 %v2985
    %3019 = vmatpush.msra.mxu0 %v2981
    %3020 = vmatpush.msra.mxu0 %v2977
    %3021 = vmatpush.msra.mxu0 %v2973
    %3022 = vmatpush.msra.mxu0 %v2969
    %3023 = vmatpush.msra.mxu0 %v2965
    %3024 = vmatpush.msra.mxu0 %v2961
    %3025 = vmatpush.msra.mxu0 %v2957
    %3026 = vmatpush.msra.mxu0 %v2953
    %3027 = vmatpush.msra.mxu0 %v2949
    %3028 = vmatpush.msra.mxu0 %v2945
    %3029 = vmatpush.msra.mxu0 %v2941
    %3030 = vmatpush.msra.mxu0 %v2937
    %3031 = vmatpush.msra.mxu0 %v2933
    %3032 = vmatmul.f32.gmra.mxu0 %v2931
    %v3033 = vpop.f32.mrf.mxu0
    %v3034 = vadd.f32 0.0, %v3033
    %3035 = vdwg.mxu0
    %3036 = vmatpush.msra.mxu0 %v2994
    %3037 = vmatpush.msra.mxu0 %v2990
    %3038 = vmatpush.msra.mxu0 %v2986
    %3039 = vmatpush.msra.mxu0 %v2982
    %3040 = vmatpush.msra.mxu0 %v2978
    %3041 = vmatpush.msra.mxu0 %v2974
    %3042 = vmatpush.msra.mxu0 %v2970
    %3043 = vmatpush.msra.mxu0 %v2966
    %3044 = vmatpush.msra.mxu0 %v2962
    %3045 = vmatpush.msra.mxu0 %v2958
    %3046 = vmatpush.msra.mxu0 %v2954
    %3047 = vmatpush.msra.mxu0 %v2950
    %3048 = vmatpush.msra.mxu0 %v2946
    %3049 = vmatpush.msra.mxu0 %v2942
    %3050 = vmatpush.msra.mxu0 %v2938
    %3051 = vmatpush.msra.mxu0 %v2934
    %3052 = vmatmul.f32.gmra.mxu0 %v2931
    %v3053 = vpop.f32.mrf.mxu0
    %v3054 = vadd.f32 0.0, %v3053
    %3055 = vdwg.mxu0
    %3056 = vmatpush.msra.mxu0 %v2995
    %3057 = vmatpush.msra.mxu0 %v2991
    %3058 = vmatpush.msra.mxu0 %v2987
    %3059 = vmatpush.msra.mxu0 %v2983
    %3060 = vmatpush.msra.mxu0 %v2979
    %3061 = vmatpush.msra.mxu0 %v2975
    %3062 = vmatpush.msra.mxu0 %v2971
    %3063 = vmatpush.msra.mxu0 %v2967
    %3064 = vmatpush.msra.mxu0 %v2963
    %3065 = vmatpush.msra.mxu0 %v2959
    %3066 = vmatpush.msra.mxu0 %v2955
    %3067 = vmatpush.msra.mxu0 %v2951
    %3068 = vmatpush.msra.mxu0 %v2947
    %3069 = vmatpush.msra.mxu0 %v2943
    %3070 = vmatpush.msra.mxu0 %v2939
    %3071 = vmatpush.msra.mxu0 %v2935
    %3072 = vmatmul.f32.gmra.mxu0 %v2931
    %v3073 = vpop.f32.mrf.mxu0
    %v3074 = vadd.f32 0.0, %v3073
    %3075 = vdwg.mxu0
    %s3076 = sld [smem:[#allocation3 + $0x4]]
    %p3077 = scmp.ne.s32.totalorder %s3076, 0
    %s3078 = scalar_select %p3077, 1, 0
    %s3079 = scvt.s32.f32 %s3078
    %s3080 = scalar_lea.vmem %s3, 128
    %v3081 = vld [vmem:[%s3080] sm:$0xff]
    %v3082 = vld [vmem:[%s3080 + $0x8] sm:$0xff]
    %v3083 = vld [vmem:[%s3080 + $0x10] sm:$0xff]
    %v3084 = vld [vmem:[%s3080 + $0x18] sm:$0xff]
    %v3085 = vstv %s3079
    %v3086 = vmul.f32 %v3081, %v3085
    %v3087 = vmul.f32 %v3082, %v3085
    %v3088 = vmul.f32 %v3083, %v3085
    %v3089 = vmul.f32 %v3084, %v3085
    %s3090 = ssub.f32 1.0, %s3079
    %v3091 = vstv %s3090
    %v3092 = vmul.f32 %v3014, %v3091
    %v3093 = vmul.f32 %v3034, %v3091
    %v3094 = vmul.f32 %v3054, %v3091
    %v3095 = vmul.f32 %v3074, %v3091
    %v3096 = vadd.f32 %v3086, %v3092
    %v3097 = vadd.f32 %v3087, %v3093
    %v3098 = vadd.f32 %v3088, %v3094
    %v3099 = vadd.f32 %v3089, %v3095
    %v3100 = vld [vmem:[#allocation4] sm:$0xff]
    %v3101 = vld [vmem:[#allocation4 + $0x8] sm:$0xff]
    %v3102 = vld [vmem:[#allocation4 + $0x10] sm:$0xff]
    %v3103 = vld [vmem:[#allocation4 + $0x18] sm:$0xff]
    %v3104 = vld [vmem:[#allocation4 + $0x20] sm:$0xff]
    %v3105 = vld [vmem:[#allocation4 + $0x28] sm:$0xff]
    %v3106 = vld [vmem:[#allocation4 + $0x30] sm:$0xff]
    %v3107 = vld [vmem:[#allocation4 + $0x38] sm:$0xff]
    %v3108 = vld [vmem:[#allocation4 + $0x40] sm:$0xff]
    %v3109 = vld [vmem:[#allocation4 + $0x48] sm:$0xff]
    %v3110 = vld [vmem:[#allocation4 + $0x50] sm:$0xff]
    %v3111 = vld [vmem:[#allocation4 + $0x58] sm:$0xff]
    %v3112 = vld [vmem:[#allocation4 + $0x60] sm:$0xff]
    %v3113 = vld [vmem:[#allocation4 + $0x68] sm:$0xff]
    %v3114 = vld [vmem:[#allocation4 + $0x70] sm:$0xff]
    %v3115 = vld [vmem:[#allocation4 + $0x78] sm:$0xff]
    %v3116 = vld [vmem:[#allocation4 + $0x80] sm:$0xff]
    %v3117 = vld [vmem:[#allocation4 + $0x88] sm:$0xff]
    %v3118 = vld [vmem:[#allocation4 + $0x90] sm:$0xff]
    %v3119 = vld [vmem:[#allocation4 + $0x98] sm:$0xff]
    %v3120 = vld [vmem:[#allocation4 + $0xa0] sm:$0xff]
    %v3121 = vld [vmem:[#allocation4 + $0xa8] sm:$0xff]
    %v3122 = vld [vmem:[#allocation4 + $0xb0] sm:$0xff]
    %v3123 = vld [vmem:[#allocation4 + $0xb8] sm:$0xff]
    %v3124 = vld [vmem:[#allocation4 + $0xc0] sm:$0xff]
    %v3125 = vld [vmem:[#allocation4 + $0xc8] sm:$0xff]
    %v3126 = vld [vmem:[#allocation4 + $0xd0] sm:$0xff]
    %v3127 = vld [vmem:[#allocation4 + $0xd8] sm:$0xff]
    %v3128 = vld [vmem:[#allocation4 + $0xe0] sm:$0xff]
    %v3129 = vld [vmem:[#allocation4 + $0xe8] sm:$0xff]
    %v3130 = vld [vmem:[#allocation4 + $0xf0] sm:$0xff]
    %v3131 = vld [vmem:[#allocation4 + $0xf8] sm:$0xff]
    %v3132 = vld [vmem:[#allocation4 + $0x100] sm:$0xff]
    %v3133 = vld [vmem:[#allocation4 + $0x108] sm:$0xff]
    %v3134 = vld [vmem:[#allocation4 + $0x110] sm:$0xff]
    %v3135 = vld [vmem:[#allocation4 + $0x118] sm:$0xff]
    %v3136 = vld [vmem:[#allocation4 + $0x120] sm:$0xff]
    %v3137 = vld [vmem:[#allocation4 + $0x128] sm:$0xff]
    %v3138 = vld [vmem:[#allocation4 + $0x130] sm:$0xff]
    %v3139 = vld [vmem:[#allocation4 + $0x138] sm:$0xff]
    %v3140 = vld [vmem:[#allocation4 + $0x140] sm:$0xff]
    %v3141 = vld [vmem:[#allocation4 + $0x148] sm:$0xff]
    %v3142 = vld [vmem:[#allocation4 + $0x150] sm:$0xff]
    %v3143 = vld [vmem:[#allocation4 + $0x158] sm:$0xff]
    %v3144 = vld [vmem:[#allocation4 + $0x160] sm:$0xff]
    %v3145 = vld [vmem:[#allocation4 + $0x168] sm:$0xff]
    %v3146 = vld [vmem:[#allocation4 + $0x170] sm:$0xff]
    %v3147 = vld [vmem:[#allocation4 + $0x178] sm:$0xff]
    %v3148 = vld [vmem:[#allocation4 + $0x180] sm:$0xff]
    %v3149 = vld [vmem:[#allocation4 + $0x188] sm:$0xff]
    %v3150 = vld [vmem:[#allocation4 + $0x190] sm:$0xff]
    %v3151 = vld [vmem:[#allocation4 + $0x198] sm:$0xff]
    %v3152 = vld [vmem:[#allocation4 + $0x1a0] sm:$0xff]
    %v3153 = vld [vmem:[#allocation4 + $0x1a8] sm:$0xff]
    %v3154 = vld [vmem:[#allocation4 + $0x1b0] sm:$0xff]
    %v3155 = vld [vmem:[#allocation4 + $0x1b8] sm:$0xff]
    %v3156 = vld [vmem:[#allocation4 + $0x1c0] sm:$0xff]
    %v3157 = vld [vmem:[#allocation4 + $0x1c8] sm:$0xff]
    %v3158 = vld [vmem:[#allocation4 + $0x1d0] sm:$0xff]
    %v3159 = vld [vmem:[#allocation4 + $0x1d8] sm:$0xff]
    %v3160 = vld [vmem:[#allocation4 + $0x1e0] sm:$0xff]
    %v3161 = vld [vmem:[#allocation4 + $0x1e8] sm:$0xff]
    %v3162 = vld [vmem:[#allocation4 + $0x1f0] sm:$0xff]
    %v3163 = vld [vmem:[#allocation4 + $0x1f8] sm:$0xff]
    %3164 = vmatpush.msra.mxu0 %v3160
    %3165 = vmatpush.msra.mxu0 %v3156
    %3166 = vmatpush.msra.mxu0 %v3152
    %3167 = vmatpush.msra.mxu0 %v3148
    %3168 = vmatpush.msra.mxu0 %v3144
    %3169 = vmatpush.msra.mxu0 %v3140
    %3170 = vmatpush.msra.mxu0 %v3136
    %3171 = vmatpush.msra.mxu0 %v3132
    %3172 = vmatpush.msra.mxu0 %v3128
    %3173 = vmatpush.msra.mxu0 %v3124
    %3174 = vmatpush.msra.mxu0 %v3120
    %3175 = vmatpush.msra.mxu0 %v3116
    %3176 = vmatpush.msra.mxu0 %v3112
    %3177 = vmatpush.msra.mxu0 %v3108
    %3178 = vmatpush.msra.mxu0 %v3104
    %3179 = vmatpush.msra.mxu0 %v3100
    %3180 = vmatmul.f32.gmra.mxu0 %v2878
    %v3181 = vpop.f32.mrf.mxu0
    %v3182 = vadd.f32 0.0, %v3181
    %3183 = vdwg.mxu0
    %3184 = vmatpush.msra.mxu0 %v3161
    %3185 = vmatpush.msra.mxu0 %v3157
    %3186 = vmatpush.msra.mxu0 %v3153
    %3187 = vmatpush.msra.mxu0 %v3149
    %3188 = vmatpush.msra.mxu0 %v3145
    %3189 = vmatpush.msra.mxu0 %v3141
    %3190 = vmatpush.msra.mxu0 %v3137
    %3191 = vmatpush.msra.mxu0 %v3133
    %3192 = vmatpush.msra.mxu0 %v3129
    %3193 = vmatpush.msra.mxu0 %v3125
    %3194 = vmatpush.msra.mxu0 %v3121
    %3195 = vmatpush.msra.mxu0 %v3117
    %3196 = vmatpush.msra.mxu0 %v3113
    %3197 = vmatpush.msra.mxu0 %v3109
    %3198 = vmatpush.msra.mxu0 %v3105
    %3199 = vmatpush.msra.mxu0 %v3101
    %3200 = vmatmul.f32.gmra.mxu0 %v2878
    %v3201 = vpop.f32.mrf.mxu0
    %v3202 = vadd.f32 0.0, %v3201
    %3203 = vdwg.mxu0
    %3204 = vmatpush.msra.mxu0 %v3162
    %3205 = vmatpush.msra.mxu0 %v3158
    %3206 = vmatpush.msra.mxu0 %v3154
    %3207 = vmatpush.msra.mxu0 %v3150
    %3208 = vmatpush.msra.mxu0 %v3146
    %3209 = vmatpush.msra.mxu0 %v3142
    %3210 = vmatpush.msra.mxu0 %v3138
    %3211 = vmatpush.msra.mxu0 %v3134
    %3212 = vmatpush.msra.mxu0 %v3130
    %3213 = vmatpush.msra.mxu0 %v3126
    %3214 = vmatpush.msra.mxu0 %v3122
    %3215 = vmatpush.msra.mxu0 %v3118
    %3216 = vmatpush.msra.mxu0 %v3114
    %3217 = vmatpush.msra.mxu0 %v3110
    %3218 = vmatpush.msra.mxu0 %v3106
    %3219 = vmatpush.msra.mxu0 %v3102
    %3220 = vmatmul.f32.gmra.mxu0 %v2878
    %v3221 = vpop.f32.mrf.mxu0
    %v3222 = vadd.f32 0.0, %v3221
    %3223 = vdwg.mxu0
    %3224 = vmatpush.msra.mxu0 %v3163
    %3225 = vmatpush.msra.mxu0 %v3159
    %3226 = vmatpush.msra.mxu0 %v3155
    %3227 = vmatpush.msra.mxu0 %v3151
    %3228 = vmatpush.msra.mxu0 %v3147
    %3229 = vmatpush.msra.mxu0 %v3143
    %3230 = vmatpush.msra.mxu0 %v3139
    %3231 = vmatpush.msra.mxu0 %v3135
    %3232 = vmatpush.msra.mxu0 %v3131
    %3233 = vmatpush.msra.mxu0 %v3127
    %3234 = vmatpush.msra.mxu0 %v3123
    %3235 = vmatpush.msra.mxu0 %v3119
    %3236 = vmatpush.msra.mxu0 %v3115
    %3237 = vmatpush.msra.mxu0 %v3111
    %3238 = vmatpush.msra.mxu0 %v3107
    %3239 = vmatpush.msra.mxu0 %v3103
    %3240 = vmatmul.f32.gmra.mxu0 %v2878
    %v3241 = vpop.f32.mrf.mxu0
    %v3242 = vadd.f32 0.0, %v3241
    %3243 = vdwg.mxu0
    %v3244 = vadd.f32 %v3096, %v3182
    %v3245 = vadd.f32 %v3097, %v3202
    %v3246 = vadd.f32 %v3098, %v3222
    %v3247 = vadd.f32 %v3099, %v3242
    %v3248 = vxor.u32 %v3244, 2147483648
    %v3249 = vmul.f32 %v3248, 1.442695
    %v3250 = vpow.pop %v3249
    %v3251 = vadd.f32 %v3250, 1.0
    %v3252 = vrcp.pop %v3251
    %v3253 = vmul.f32 %v3251, %v3252
    %v3254 = vsub.f32 1.0, %v3253
    %v3255 = vmul.f32 %v3252, %v3254
    %v3256 = vadd.f32 %v3252, %v3255
    %vm3257 = vweird.f32 %v3251
    %vm3258 = vweird.f32 %v3252
    %vm3259 = vmor %vm3257, %vm3258
    %v3260 = vsel %vm3259, %v3252, %v3256
    %v3261 = vand.u32 2147483647, %v3251
    %vm3262 = vcmp.eq.f32.partialorder %v3261, 8.507059e+37
    %v3263 = vand.u32 %v3251, 2147483648
    %v3264 = vor.u32 1.1754944e-38, %v3263
    %v3265 = vsel %vm3262, %v3264, %v3260
    %v3266 = vmul.f32 1.0, %v3265
    %v3267 = vxor.u32 %v3245, 2147483648
    %v3268 = vmul.f32 %v3267, 1.442695
    %v3269 = vpow.pop %v3268
    %v3270 = vadd.f32 %v3269, 1.0
    %v3271 = vrcp.pop %v3270
    %v3272 = vmul.f32 %v3270, %v3271
    %v3273 = vsub.f32 1.0, %v3272
    %v3274 = vmul.f32 %v3271, %v3273
    %v3275 = vadd.f32 %v3271, %v3274
    %vm3276 = vweird.f32 %v3270
    %vm3277 = vweird.f32 %v3271
    %vm3278 = vmor %vm3276, %vm3277
    %v3279 = vsel %vm3278, %v3271, %v3275
    %v3280 = vand.u32 2147483647, %v3270
    %vm3281 = vcmp.eq.f32.partialorder %v3280, 8.507059e+37
    %v3282 = vand.u32 %v3270, 2147483648
    %v3283 = vor.u32 1.1754944e-38, %v3282
    %v3284 = vsel %vm3281, %v3283, %v3279
    %v3285 = vmul.f32 1.0, %v3284
    %v3286 = vtanh.pop %v3246
    %v3287 = vxor.u32 %v3247, 2147483648
    %v3288 = vmul.f32 %v3287, 1.442695
    %v3289 = vpow.pop %v3288
    %v3290 = vadd.f32 %v3289, 1.0
    %v3291 = vrcp.pop %v3290
    %v3292 = vmul.f32 %v3290, %v3291
    %v3293 = vsub.f32 1.0, %v3292
    %v3294 = vmul.f32 %v3291, %v3293
    %v3295 = vadd.f32 %v3291, %v3294
    %vm3296 = vweird.f32 %v3290
    %vm3297 = vweird.f32 %v3291
    %vm3298 = vmor %vm3296, %vm3297
    %v3299 = vsel %vm3298, %v3291, %v3295
    %v3300 = vand.u32 2147483647, %v3290
    %vm3301 = vcmp.eq.f32.partialorder %v3300, 8.507059e+37
    %v3302 = vand.u32 %v3290, 2147483648
    %v3303 = vor.u32 1.1754944e-38, %v3302
    %v3304 = vsel %vm3301, %v3303, %v3299
    %v3305 = vmul.f32 1.0, %v3304
    %v3306 = vmul.f32 %v3285, %v2876
    %v3307 = vmul.f32 %v3266, %v3286
    %v3308 = vadd.f32 %v3306, %v3307
    %v3309 = vtanh.pop %v3308
    %v3310 = vmul.f32 %v3305, %v3309
    %v3311 = vld [vmem:[%s6] sm:$0xff]
    %v3312 = vld [vmem:[%s6 + $0x8] sm:$0xff]
    %v3313 = vld [vmem:[%s6 + $0x10] sm:$0xff]
    %v3314 = vld [vmem:[%s6 + $0x18] sm:$0xff]
    %v3315 = vld [vmem:[%s6 + $0x20] sm:$0xff]
    %v3316 = vld [vmem:[%s6 + $0x28] sm:$0xff]
    %v3317 = vld [vmem:[%s6 + $0x30] sm:$0xff]
    %v3318 = vld [vmem:[%s6 + $0x38] sm:$0xff]
    %v3319 = vld [vmem:[%s6 + $0x40] sm:$0xff]
    %v3320 = vld [vmem:[%s6 + $0x48] sm:$0xff]
    %v3321 = vld [vmem:[%s6 + $0x50] sm:$0xff]
    %v3322 = vld [vmem:[%s6 + $0x58] sm:$0xff]
    %v3323 = vld [vmem:[%s6 + $0x60] sm:$0xff]
    %v3324 = vld [vmem:[%s6 + $0x68] sm:$0xff]
    %v3325 = vld [vmem:[%s6 + $0x70] sm:$0xff]
    %v3326 = vld [vmem:[%s6 + $0x78] sm:$0xff]
    %v3327 = vld [vmem:[%s7] sm:$0x1]
    %v3329 = vperm.slane %v3327, 0
    %3331 = vmatpush.msra.mxu0 %v3326
    %3332 = vmatpush.msra.mxu0 %v3325
    %3333 = vmatpush.msra.mxu0 %v3324
    %3334 = vmatpush.msra.mxu0 %v3323
    %3335 = vmatpush.msra.mxu0 %v3322
    %3336 = vmatpush.msra.mxu0 %v3321
    %3337 = vmatpush.msra.mxu0 %v3320
    %3338 = vmatpush.msra.mxu0 %v3319
    %3339 = vmatpush.msra.mxu0 %v3318
    %3340 = vmatpush.msra.mxu0 %v3317
    %3341 = vmatpush.msra.mxu0 %v3316
    %3342 = vmatpush.msra.mxu0 %v3315
    %3343 = vmatpush.msra.mxu0 %v3314
    %3344 = vmatpush.msra.mxu0 %v3313
    %3345 = vmatpush.msra.mxu0 %v3312
    %3346 = vmatpush.msra.mxu0 %v3311
    %3347 = vmatmul.f32.gmra.mxu0 %v3310
    %v3348 = vpop.f32.mrf.mxu0
    %v3349 = vadd.f32 %v3329, %v3348
    %3350 = vdwg.mxu0
    %s3351 = scalar_lea.vmem [#allocation9], 40
    %3352 = vst [vmem:[%s3351] sm:$0xff] %v3349
    %v3353 = vsel %vm1351, %v3349, -1e+30
    %3354 = vmax.xlane.f32.xlu0 %v3353
    %v3355 = vpop.xlane.xlu0 %3354
    %vm3356 = vcmp.ge.f32.partialorder %v3353, %v3355
    %vm3357 = vmand %vm3356, %vm1351
    %v3358 = vsel %vm3357, %v1350, 128.0
    %3359 = vmin.xlane.f32.xlu0 %v3358
    %v3360 = vpop.xlane.xlu0 %3359
    %vm3361 = vcmp.eq.f32.partialorder %v1350, %v3360
    %v3362 = vsel %vm3361, 1, 0
    %v3363 = vcvt.s32.f32 %v3362
    %v3364 = vld [vmem:[#allocation7] sm:$0xff]
    %v3365 = vld [vmem:[#allocation7 + $0x8] sm:$0xff]
    %v3366 = vld [vmem:[#allocation7 + $0x10] sm:$0xff]
    %v3367 = vld [vmem:[#allocation7 + $0x18] sm:$0xff]
    %v3368 = vld [vmem:[#allocation7 + $0x20] sm:$0xff]
    %v3369 = vld [vmem:[#allocation7 + $0x28] sm:$0xff]
    %v3370 = vld [vmem:[#allocation7 + $0x30] sm:$0xff]
    %v3371 = vld [vmem:[#allocation7 + $0x38] sm:$0xff]
    %v3372 = vld [vmem:[#allocation7 + $0x40] sm:$0xff]
    %v3373 = vld [vmem:[#allocation7 + $0x48] sm:$0xff]
    %v3374 = vld [vmem:[#allocation7 + $0x50] sm:$0xff]
    %v3375 = vld [vmem:[#allocation7 + $0x58] sm:$0xff]
    %v3376 = vld [vmem:[#allocation7 + $0x60] sm:$0xff]
    %v3377 = vld [vmem:[#allocation7 + $0x68] sm:$0xff]
    %v3378 = vld [vmem:[#allocation7 + $0x70] sm:$0xff]
    %v3379 = vld [vmem:[#allocation7 + $0x78] sm:$0xff]
    %v3380 = vld [vmem:[#allocation7 + $0x80] sm:$0xff]
    %v3381 = vld [vmem:[#allocation7 + $0x88] sm:$0xff]
    %v3382 = vld [vmem:[#allocation7 + $0x90] sm:$0xff]
    %v3383 = vld [vmem:[#allocation7 + $0x98] sm:$0xff]
    %v3384 = vld [vmem:[#allocation7 + $0xa0] sm:$0xff]
    %v3385 = vld [vmem:[#allocation7 + $0xa8] sm:$0xff]
    %v3386 = vld [vmem:[#allocation7 + $0xb0] sm:$0xff]
    %v3387 = vld [vmem:[#allocation7 + $0xb8] sm:$0xff]
    %v3388 = vld [vmem:[#allocation7 + $0xc0] sm:$0xff]
    %v3389 = vld [vmem:[#allocation7 + $0xc8] sm:$0xff]
    %v3390 = vld [vmem:[#allocation7 + $0xd0] sm:$0xff]
    %v3391 = vld [vmem:[#allocation7 + $0xd8] sm:$0xff]
    %v3392 = vld [vmem:[#allocation7 + $0xe0] sm:$0xff]
    %v3393 = vld [vmem:[#allocation7 + $0xe8] sm:$0xff]
    %v3394 = vld [vmem:[#allocation7 + $0xf0] sm:$0xff]
    %v3395 = vld [vmem:[#allocation7 + $0xf8] sm:$0xff]
    %v3396 = vld [vmem:[#allocation7 + $0x100] sm:$0xff]
    %v3397 = vld [vmem:[#allocation7 + $0x108] sm:$0xff]
    %v3398 = vld [vmem:[#allocation7 + $0x110] sm:$0xff]
    %v3399 = vld [vmem:[#allocation7 + $0x118] sm:$0xff]
    %v3400 = vld [vmem:[#allocation7 + $0x120] sm:$0xff]
    %v3401 = vld [vmem:[#allocation7 + $0x128] sm:$0xff]
    %v3402 = vld [vmem:[#allocation7 + $0x130] sm:$0xff]
    %v3403 = vld [vmem:[#allocation7 + $0x138] sm:$0xff]
    %v3404 = vld [vmem:[#allocation7 + $0x140] sm:$0xff]
    %v3405 = vld [vmem:[#allocation7 + $0x148] sm:$0xff]
    %v3406 = vld [vmem:[#allocation7 + $0x150] sm:$0xff]
    %v3407 = vld [vmem:[#allocation7 + $0x158] sm:$0xff]
    %v3408 = vld [vmem:[#allocation7 + $0x160] sm:$0xff]
    %v3409 = vld [vmem:[#allocation7 + $0x168] sm:$0xff]
    %v3410 = vld [vmem:[#allocation7 + $0x170] sm:$0xff]
    %v3411 = vld [vmem:[#allocation7 + $0x178] sm:$0xff]
    %v3412 = vld [vmem:[#allocation7 + $0x180] sm:$0xff]
    %v3413 = vld [vmem:[#allocation7 + $0x188] sm:$0xff]
    %v3414 = vld [vmem:[#allocation7 + $0x190] sm:$0xff]
    %v3415 = vld [vmem:[#allocation7 + $0x198] sm:$0xff]
    %v3416 = vld [vmem:[#allocation7 + $0x1a0] sm:$0xff]
    %v3417 = vld [vmem:[#allocation7 + $0x1a8] sm:$0xff]
    %v3418 = vld [vmem:[#allocation7 + $0x1b0] sm:$0xff]
    %v3419 = vld [vmem:[#allocation7 + $0x1b8] sm:$0xff]
    %v3420 = vld [vmem:[#allocation7 + $0x1c0] sm:$0xff]
    %v3421 = vld [vmem:[#allocation7 + $0x1c8] sm:$0xff]
    %v3422 = vld [vmem:[#allocation7 + $0x1d0] sm:$0xff]
    %v3423 = vld [vmem:[#allocation7 + $0x1d8] sm:$0xff]
    %v3424 = vld [vmem:[#allocation7 + $0x1e0] sm:$0xff]
    %v3425 = vld [vmem:[#allocation7 + $0x1e8] sm:$0xff]
    %v3426 = vld [vmem:[#allocation7 + $0x1f0] sm:$0xff]
    %v3427 = vld [vmem:[#allocation7 + $0x1f8] sm:$0xff]
    %3428 = vmatpush.msra.mxu0 %v3424
    %3429 = vmatpush.msra.mxu0 %v3420
    %3430 = vmatpush.msra.mxu0 %v3416
    %3431 = vmatpush.msra.mxu0 %v3412
    %3432 = vmatpush.msra.mxu0 %v3408
    %3433 = vmatpush.msra.mxu0 %v3404
    %3434 = vmatpush.msra.mxu0 %v3400
    %3435 = vmatpush.msra.mxu0 %v3396
    %3436 = vmatpush.msra.mxu0 %v3392
    %3437 = vmatpush.msra.mxu0 %v3388
    %3438 = vmatpush.msra.mxu0 %v3384
    %3439 = vmatpush.msra.mxu0 %v3380
    %3440 = vmatpush.msra.mxu0 %v3376
    %3441 = vmatpush.msra.mxu0 %v3372
    %3442 = vmatpush.msra.mxu0 %v3368
    %3443 = vmatpush.msra.mxu0 %v3364
    %3444 = vmatmul.f32.gmra.mxu0 %v3363
    %v3445 = vpop.f32.mrf.mxu0
    %v3446 = vadd.f32 0.0, %v3445
    %3447 = vdwg.mxu0
    %3448 = vmatpush.msra.mxu0 %v3425
    %3449 = vmatpush.msra.mxu0 %v3421
    %3450 = vmatpush.msra.mxu0 %v3417
    %3451 = vmatpush.msra.mxu0 %v3413
    %3452 = vmatpush.msra.mxu0 %v3409
    %3453 = vmatpush.msra.mxu0 %v3405
    %3454 = vmatpush.msra.mxu0 %v3401
    %3455 = vmatpush.msra.mxu0 %v3397
    %3456 = vmatpush.msra.mxu0 %v3393
    %3457 = vmatpush.msra.mxu0 %v3389
    %3458 = vmatpush.msra.mxu0 %v3385
    %3459 = vmatpush.msra.mxu0 %v3381
    %3460 = vmatpush.msra.mxu0 %v3377
    %3461 = vmatpush.msra.mxu0 %v3373
    %3462 = vmatpush.msra.mxu0 %v3369
    %3463 = vmatpush.msra.mxu0 %v3365
    %3464 = vmatmul.f32.gmra.mxu0 %v3363
    %v3465 = vpop.f32.mrf.mxu0
    %v3466 = vadd.f32 0.0, %v3465
    %3467 = vdwg.mxu0
    %3468 = vmatpush.msra.mxu0 %v3426
    %3469 = vmatpush.msra.mxu0 %v3422
    %3470 = vmatpush.msra.mxu0 %v3418
    %3471 = vmatpush.msra.mxu0 %v3414
    %3472 = vmatpush.msra.mxu0 %v3410
    %3473 = vmatpush.msra.mxu0 %v3406
    %3474 = vmatpush.msra.mxu0 %v3402
    %3475 = vmatpush.msra.mxu0 %v3398
    %3476 = vmatpush.msra.mxu0 %v3394
    %3477 = vmatpush.msra.mxu0 %v3390
    %3478 = vmatpush.msra.mxu0 %v3386
    %3479 = vmatpush.msra.mxu0 %v3382
    %3480 = vmatpush.msra.mxu0 %v3378
    %3481 = vmatpush.msra.mxu0 %v3374
    %3482 = vmatpush.msra.mxu0 %v3370
    %3483 = vmatpush.msra.mxu0 %v3366
    %3484 = vmatmul.f32.gmra.mxu0 %v3363
    %v3485 = vpop.f32.mrf.mxu0
    %v3486 = vadd.f32 0.0, %v3485
    %3487 = vdwg.mxu0
    %3488 = vmatpush.msra.mxu0 %v3427
    %3489 = vmatpush.msra.mxu0 %v3423
    %3490 = vmatpush.msra.mxu0 %v3419
    %3491 = vmatpush.msra.mxu0 %v3415
    %3492 = vmatpush.msra.mxu0 %v3411
    %3493 = vmatpush.msra.mxu0 %v3407
    %3494 = vmatpush.msra.mxu0 %v3403
    %3495 = vmatpush.msra.mxu0 %v3399
    %3496 = vmatpush.msra.mxu0 %v3395
    %3497 = vmatpush.msra.mxu0 %v3391
    %3498 = vmatpush.msra.mxu0 %v3387
    %3499 = vmatpush.msra.mxu0 %v3383
    %3500 = vmatpush.msra.mxu0 %v3379
    %3501 = vmatpush.msra.mxu0 %v3375
    %3502 = vmatpush.msra.mxu0 %v3371
    %3503 = vmatpush.msra.mxu0 %v3367
    %3504 = vmatmul.f32.gmra.mxu0 %v3363
    %v3505 = vpop.f32.mrf.mxu0
    %v3506 = vadd.f32 0.0, %v3505
    %3507 = vdwg.mxu0
    %s3508 = sld [smem:[#allocation3 + $0x5]]
    %p3509 = scmp.ne.s32.totalorder %s3508, 0
    %s3510 = scalar_select %p3509, 1, 0
    %s3511 = scvt.s32.f32 %s3510
    %s3512 = scalar_lea.vmem %s3, 160
    %v3513 = vld [vmem:[%s3512] sm:$0xff]
    %v3514 = vld [vmem:[%s3512 + $0x8] sm:$0xff]
    %v3515 = vld [vmem:[%s3512 + $0x10] sm:$0xff]
    %v3516 = vld [vmem:[%s3512 + $0x18] sm:$0xff]
    %v3517 = vstv %s3511
    %v3518 = vmul.f32 %v3513, %v3517
    %v3519 = vmul.f32 %v3514, %v3517
    %v3520 = vmul.f32 %v3515, %v3517
    %v3521 = vmul.f32 %v3516, %v3517
    %s3522 = ssub.f32 1.0, %s3511
    %v3523 = vstv %s3522
    %v3524 = vmul.f32 %v3446, %v3523
    %v3525 = vmul.f32 %v3466, %v3523
    %v3526 = vmul.f32 %v3486, %v3523
    %v3527 = vmul.f32 %v3506, %v3523
    %v3528 = vadd.f32 %v3518, %v3524
    %v3529 = vadd.f32 %v3519, %v3525
    %v3530 = vadd.f32 %v3520, %v3526
    %v3531 = vadd.f32 %v3521, %v3527
    %v3532 = vld [vmem:[#allocation4] sm:$0xff]
    %v3533 = vld [vmem:[#allocation4 + $0x8] sm:$0xff]
    %v3534 = vld [vmem:[#allocation4 + $0x10] sm:$0xff]
    %v3535 = vld [vmem:[#allocation4 + $0x18] sm:$0xff]
    %v3536 = vld [vmem:[#allocation4 + $0x20] sm:$0xff]
    %v3537 = vld [vmem:[#allocation4 + $0x28] sm:$0xff]
    %v3538 = vld [vmem:[#allocation4 + $0x30] sm:$0xff]
    %v3539 = vld [vmem:[#allocation4 + $0x38] sm:$0xff]
    %v3540 = vld [vmem:[#allocation4 + $0x40] sm:$0xff]
    %v3541 = vld [vmem:[#allocation4 + $0x48] sm:$0xff]
    %v3542 = vld [vmem:[#allocation4 + $0x50] sm:$0xff]
    %v3543 = vld [vmem:[#allocation4 + $0x58] sm:$0xff]
    %v3544 = vld [vmem:[#allocation4 + $0x60] sm:$0xff]
    %v3545 = vld [vmem:[#allocation4 + $0x68] sm:$0xff]
    %v3546 = vld [vmem:[#allocation4 + $0x70] sm:$0xff]
    %v3547 = vld [vmem:[#allocation4 + $0x78] sm:$0xff]
    %v3548 = vld [vmem:[#allocation4 + $0x80] sm:$0xff]
    %v3549 = vld [vmem:[#allocation4 + $0x88] sm:$0xff]
    %v3550 = vld [vmem:[#allocation4 + $0x90] sm:$0xff]
    %v3551 = vld [vmem:[#allocation4 + $0x98] sm:$0xff]
    %v3552 = vld [vmem:[#allocation4 + $0xa0] sm:$0xff]
    %v3553 = vld [vmem:[#allocation4 + $0xa8] sm:$0xff]
    %v3554 = vld [vmem:[#allocation4 + $0xb0] sm:$0xff]
    %v3555 = vld [vmem:[#allocation4 + $0xb8] sm:$0xff]
    %v3556 = vld [vmem:[#allocation4 + $0xc0] sm:$0xff]
    %v3557 = vld [vmem:[#allocation4 + $0xc8] sm:$0xff]
    %v3558 = vld [vmem:[#allocation4 + $0xd0] sm:$0xff]
    %v3559 = vld [vmem:[#allocation4 + $0xd8] sm:$0xff]
    %v3560 = vld [vmem:[#allocation4 + $0xe0] sm:$0xff]
    %v3561 = vld [vmem:[#allocation4 + $0xe8] sm:$0xff]
    %v3562 = vld [vmem:[#allocation4 + $0xf0] sm:$0xff]
    %v3563 = vld [vmem:[#allocation4 + $0xf8] sm:$0xff]
    %v3564 = vld [vmem:[#allocation4 + $0x100] sm:$0xff]
    %v3565 = vld [vmem:[#allocation4 + $0x108] sm:$0xff]
    %v3566 = vld [vmem:[#allocation4 + $0x110] sm:$0xff]
    %v3567 = vld [vmem:[#allocation4 + $0x118] sm:$0xff]
    %v3568 = vld [vmem:[#allocation4 + $0x120] sm:$0xff]
    %v3569 = vld [vmem:[#allocation4 + $0x128] sm:$0xff]
    %v3570 = vld [vmem:[#allocation4 + $0x130] sm:$0xff]
    %v3571 = vld [vmem:[#allocation4 + $0x138] sm:$0xff]
    %v3572 = vld [vmem:[#allocation4 + $0x140] sm:$0xff]
    %v3573 = vld [vmem:[#allocation4 + $0x148] sm:$0xff]
    %v3574 = vld [vmem:[#allocation4 + $0x150] sm:$0xff]
    %v3575 = vld [vmem:[#allocation4 + $0x158] sm:$0xff]
    %v3576 = vld [vmem:[#allocation4 + $0x160] sm:$0xff]
    %v3577 = vld [vmem:[#allocation4 + $0x168] sm:$0xff]
    %v3578 = vld [vmem:[#allocation4 + $0x170] sm:$0xff]
    %v3579 = vld [vmem:[#allocation4 + $0x178] sm:$0xff]
    %v3580 = vld [vmem:[#allocation4 + $0x180] sm:$0xff]
    %v3581 = vld [vmem:[#allocation4 + $0x188] sm:$0xff]
    %v3582 = vld [vmem:[#allocation4 + $0x190] sm:$0xff]
    %v3583 = vld [vmem:[#allocation4 + $0x198] sm:$0xff]
    %v3584 = vld [vmem:[#allocation4 + $0x1a0] sm:$0xff]
    %v3585 = vld [vmem:[#allocation4 + $0x1a8] sm:$0xff]
    %v3586 = vld [vmem:[#allocation4 + $0x1b0] sm:$0xff]
    %v3587 = vld [vmem:[#allocation4 + $0x1b8] sm:$0xff]
    %v3588 = vld [vmem:[#allocation4 + $0x1c0] sm:$0xff]
    %v3589 = vld [vmem:[#allocation4 + $0x1c8] sm:$0xff]
    %v3590 = vld [vmem:[#allocation4 + $0x1d0] sm:$0xff]
    %v3591 = vld [vmem:[#allocation4 + $0x1d8] sm:$0xff]
    %v3592 = vld [vmem:[#allocation4 + $0x1e0] sm:$0xff]
    %v3593 = vld [vmem:[#allocation4 + $0x1e8] sm:$0xff]
    %v3594 = vld [vmem:[#allocation4 + $0x1f0] sm:$0xff]
    %v3595 = vld [vmem:[#allocation4 + $0x1f8] sm:$0xff]
    %3596 = vmatpush.msra.mxu0 %v3592
    %3597 = vmatpush.msra.mxu0 %v3588
    %3598 = vmatpush.msra.mxu0 %v3584
    %3599 = vmatpush.msra.mxu0 %v3580
    %3600 = vmatpush.msra.mxu0 %v3576
    %3601 = vmatpush.msra.mxu0 %v3572
    %3602 = vmatpush.msra.mxu0 %v3568
    %3603 = vmatpush.msra.mxu0 %v3564
    %3604 = vmatpush.msra.mxu0 %v3560
    %3605 = vmatpush.msra.mxu0 %v3556
    %3606 = vmatpush.msra.mxu0 %v3552
    %3607 = vmatpush.msra.mxu0 %v3548
    %3608 = vmatpush.msra.mxu0 %v3544
    %3609 = vmatpush.msra.mxu0 %v3540
    %3610 = vmatpush.msra.mxu0 %v3536
    %3611 = vmatpush.msra.mxu0 %v3532
    %3612 = vmatmul.f32.gmra.mxu0 %v3310
    %v3613 = vpop.f32.mrf.mxu0
    %v3614 = vadd.f32 0.0, %v3613
    %3615 = vdwg.mxu0
    %3616 = vmatpush.msra.mxu0 %v3593
    %3617 = vmatpush.msra.mxu0 %v3589
    %3618 = vmatpush.msra.mxu0 %v3585
    %3619 = vmatpush.msra.mxu0 %v3581
    %3620 = vmatpush.msra.mxu0 %v3577
    %3621 = vmatpush.msra.mxu0 %v3573
    %3622 = vmatpush.msra.mxu0 %v3569
    %3623 = vmatpush.msra.mxu0 %v3565
    %3624 = vmatpush.msra.mxu0 %v3561
    %3625 = vmatpush.msra.mxu0 %v3557
    %3626 = vmatpush.msra.mxu0 %v3553
    %3627 = vmatpush.msra.mxu0 %v3549
    %3628 = vmatpush.msra.mxu0 %v3545
    %3629 = vmatpush.msra.mxu0 %v3541
    %3630 = vmatpush.msra.mxu0 %v3537
    %3631 = vmatpush.msra.mxu0 %v3533
    %3632 = vmatmul.f32.gmra.mxu0 %v3310
    %v3633 = vpop.f32.mrf.mxu0
    %v3634 = vadd.f32 0.0, %v3633
    %3635 = vdwg.mxu0
    %3636 = vmatpush.msra.mxu0 %v3594
    %3637 = vmatpush.msra.mxu0 %v3590
    %3638 = vmatpush.msra.mxu0 %v3586
    %3639 = vmatpush.msra.mxu0 %v3582
    %3640 = vmatpush.msra.mxu0 %v3578
    %3641 = vmatpush.msra.mxu0 %v3574
    %3642 = vmatpush.msra.mxu0 %v3570
    %3643 = vmatpush.msra.mxu0 %v3566
    %3644 = vmatpush.msra.mxu0 %v3562
    %3645 = vmatpush.msra.mxu0 %v3558
    %3646 = vmatpush.msra.mxu0 %v3554
    %3647 = vmatpush.msra.mxu0 %v3550
    %3648 = vmatpush.msra.mxu0 %v3546
    %3649 = vmatpush.msra.mxu0 %v3542
    %3650 = vmatpush.msra.mxu0 %v3538
    %3651 = vmatpush.msra.mxu0 %v3534
    %3652 = vmatmul.f32.gmra.mxu0 %v3310
    %v3653 = vpop.f32.mrf.mxu0
    %v3654 = vadd.f32 0.0, %v3653
    %3655 = vdwg.mxu0
    %3656 = vmatpush.msra.mxu0 %v3595
    %3657 = vmatpush.msra.mxu0 %v3591
    %3658 = vmatpush.msra.mxu0 %v3587
    %3659 = vmatpush.msra.mxu0 %v3583
    %3660 = vmatpush.msra.mxu0 %v3579
    %3661 = vmatpush.msra.mxu0 %v3575
    %3662 = vmatpush.msra.mxu0 %v3571
    %3663 = vmatpush.msra.mxu0 %v3567
    %3664 = vmatpush.msra.mxu0 %v3563
    %3665 = vmatpush.msra.mxu0 %v3559
    %3666 = vmatpush.msra.mxu0 %v3555
    %3667 = vmatpush.msra.mxu0 %v3551
    %3668 = vmatpush.msra.mxu0 %v3547
    %3669 = vmatpush.msra.mxu0 %v3543
    %3670 = vmatpush.msra.mxu0 %v3539
    %3671 = vmatpush.msra.mxu0 %v3535
    %3672 = vmatmul.f32.gmra.mxu0 %v3310
    %v3673 = vpop.f32.mrf.mxu0
    %v3674 = vadd.f32 0.0, %v3673
    %3675 = vdwg.mxu0
    %v3676 = vadd.f32 %v3528, %v3614
    %v3677 = vadd.f32 %v3529, %v3634
    %v3678 = vadd.f32 %v3530, %v3654
    %v3679 = vadd.f32 %v3531, %v3674
    %v3680 = vxor.u32 %v3676, 2147483648
    %v3681 = vmul.f32 %v3680, 1.442695
    %v3682 = vpow.pop %v3681
    %v3683 = vadd.f32 %v3682, 1.0
    %v3684 = vrcp.pop %v3683
    %v3685 = vmul.f32 %v3683, %v3684
    %v3686 = vsub.f32 1.0, %v3685
    %v3687 = vmul.f32 %v3684, %v3686
    %v3688 = vadd.f32 %v3684, %v3687
    %vm3689 = vweird.f32 %v3683
    %vm3690 = vweird.f32 %v3684
    %vm3691 = vmor %vm3689, %vm3690
    %v3692 = vsel %vm3691, %v3684, %v3688
    %v3693 = vand.u32 2147483647, %v3683
    %vm3694 = vcmp.eq.f32.partialorder %v3693, 8.507059e+37
    %v3695 = vand.u32 %v3683, 2147483648
    %v3696 = vor.u32 1.1754944e-38, %v3695
    %v3697 = vsel %vm3694, %v3696, %v3692
    %v3698 = vmul.f32 1.0, %v3697
    %v3699 = vxor.u32 %v3677, 2147483648
    %v3700 = vmul.f32 %v3699, 1.442695
    %v3701 = vpow.pop %v3700
    %v3702 = vadd.f32 %v3701, 1.0
    %v3703 = vrcp.pop %v3702
    %v3704 = vmul.f32 %v3702, %v3703
    %v3705 = vsub.f32 1.0, %v3704
    %v3706 = vmul.f32 %v3703, %v3705
    %v3707 = vadd.f32 %v3703, %v3706
    %vm3708 = vweird.f32 %v3702
    %vm3709 = vweird.f32 %v3703
    %vm3710 = vmor %vm3708, %vm3709
    %v3711 = vsel %vm3710, %v3703, %v3707
    %v3712 = vand.u32 2147483647, %v3702
    %vm3713 = vcmp.eq.f32.partialorder %v3712, 8.507059e+37
    %v3714 = vand.u32 %v3702, 2147483648
    %v3715 = vor.u32 1.1754944e-38, %v3714
    %v3716 = vsel %vm3713, %v3715, %v3711
    %v3717 = vmul.f32 1.0, %v3716
    %v3718 = vtanh.pop %v3678
    %v3719 = vxor.u32 %v3679, 2147483648
    %v3720 = vmul.f32 %v3719, 1.442695
    %v3721 = vpow.pop %v3720
    %v3722 = vadd.f32 %v3721, 1.0
    %v3723 = vrcp.pop %v3722
    %v3724 = vmul.f32 %v3722, %v3723
    %v3725 = vsub.f32 1.0, %v3724
    %v3726 = vmul.f32 %v3723, %v3725
    %v3727 = vadd.f32 %v3723, %v3726
    %vm3728 = vweird.f32 %v3722
    %vm3729 = vweird.f32 %v3723
    %vm3730 = vmor %vm3728, %vm3729
    %v3731 = vsel %vm3730, %v3723, %v3727
    %v3732 = vand.u32 2147483647, %v3722
    %vm3733 = vcmp.eq.f32.partialorder %v3732, 8.507059e+37
    %v3734 = vand.u32 %v3722, 2147483648
    %v3735 = vor.u32 1.1754944e-38, %v3734
    %v3736 = vsel %vm3733, %v3735, %v3731
    %v3737 = vmul.f32 1.0, %v3736
    %v3738 = vmul.f32 %v3717, %v3308
    %v3739 = vmul.f32 %v3698, %v3718
    %v3740 = vadd.f32 %v3738, %v3739
    %v3741 = vtanh.pop %v3740
    %v3742 = vmul.f32 %v3737, %v3741
    %v3743 = vld [vmem:[%s6] sm:$0xff]
    %v3744 = vld [vmem:[%s6 + $0x8] sm:$0xff]
    %v3745 = vld [vmem:[%s6 + $0x10] sm:$0xff]
    %v3746 = vld [vmem:[%s6 + $0x18] sm:$0xff]
    %v3747 = vld [vmem:[%s6 + $0x20] sm:$0xff]
    %v3748 = vld [vmem:[%s6 + $0x28] sm:$0xff]
    %v3749 = vld [vmem:[%s6 + $0x30] sm:$0xff]
    %v3750 = vld [vmem:[%s6 + $0x38] sm:$0xff]
    %v3751 = vld [vmem:[%s6 + $0x40] sm:$0xff]
    %v3752 = vld [vmem:[%s6 + $0x48] sm:$0xff]
    %v3753 = vld [vmem:[%s6 + $0x50] sm:$0xff]
    %v3754 = vld [vmem:[%s6 + $0x58] sm:$0xff]
    %v3755 = vld [vmem:[%s6 + $0x60] sm:$0xff]
    %v3756 = vld [vmem:[%s6 + $0x68] sm:$0xff]
    %v3757 = vld [vmem:[%s6 + $0x70] sm:$0xff]
    %v3758 = vld [vmem:[%s6 + $0x78] sm:$0xff]
    %v3759 = vld [vmem:[%s7] sm:$0x1]
    %v3761 = vperm.slane %v3759, 0
    %3763 = vmatpush.msra.mxu0 %v3758
    %3764 = vmatpush.msra.mxu0 %v3757
    %3765 = vmatpush.msra.mxu0 %v3756
    %3766 = vmatpush.msra.mxu0 %v3755
    %3767 = vmatpush.msra.mxu0 %v3754
    %3768 = vmatpush.msra.mxu0 %v3753
    %3769 = vmatpush.msra.mxu0 %v3752
    %3770 = vmatpush.msra.mxu0 %v3751
    %3771 = vmatpush.msra.mxu0 %v3750
    %3772 = vmatpush.msra.mxu0 %v3749
    %3773 = vmatpush.msra.mxu0 %v3748
    %3774 = vmatpush.msra.mxu0 %v3747
    %3775 = vmatpush.msra.mxu0 %v3746
    %3776 = vmatpush.msra.mxu0 %v3745
    %3777 = vmatpush.msra.mxu0 %v3744
    %3778 = vmatpush.msra.mxu0 %v3743
    %3779 = vmatmul.f32.gmra.mxu0 %v3742
    %v3780 = vpop.f32.mrf.mxu0
    %v3781 = vadd.f32 %v3761, %v3780
    %3782 = vdwg.mxu0
    %s3783 = scalar_lea.vmem [#allocation9], 48
    %3784 = vst [vmem:[%s3783] sm:$0xff] %v3781
    %v3785 = vsel %vm1351, %v3781, -1e+30
    %3786 = vmax.xlane.f32.xlu0 %v3785
    %v3787 = vpop.xlane.xlu0 %3786
    %vm3788 = vcmp.ge.f32.partialorder %v3785, %v3787
    %vm3789 = vmand %vm3788, %vm1351
    %v3790 = vsel %vm3789, %v1350, 128.0
    %3791 = vmin.xlane.f32.xlu0 %v3790
    %v3792 = vpop.xlane.xlu0 %3791
    %vm3793 = vcmp.eq.f32.partialorder %v1350, %v3792
    %v3794 = vsel %vm3793, 1, 0
    %v3795 = vcvt.s32.f32 %v3794
    %v3796 = vld [vmem:[#allocation7] sm:$0xff]
    %v3797 = vld [vmem:[#allocation7 + $0x8] sm:$0xff]
    %v3798 = vld [vmem:[#allocation7 + $0x10] sm:$0xff]
    %v3799 = vld [vmem:[#allocation7 + $0x18] sm:$0xff]
    %v3800 = vld [vmem:[#allocation7 + $0x20] sm:$0xff]
    %v3801 = vld [vmem:[#allocation7 + $0x28] sm:$0xff]
    %v3802 = vld [vmem:[#allocation7 + $0x30] sm:$0xff]
    %v3803 = vld [vmem:[#allocation7 + $0x38] sm:$0xff]
    %v3804 = vld [vmem:[#allocation7 + $0x40] sm:$0xff]
    %v3805 = vld [vmem:[#allocation7 + $0x48] sm:$0xff]
    %v3806 = vld [vmem:[#allocation7 + $0x50] sm:$0xff]
    %v3807 = vld [vmem:[#allocation7 + $0x58] sm:$0xff]
    %v3808 = vld [vmem:[#allocation7 + $0x60] sm:$0xff]
    %v3809 = vld [vmem:[#allocation7 + $0x68] sm:$0xff]
    %v3810 = vld [vmem:[#allocation7 + $0x70] sm:$0xff]
    %v3811 = vld [vmem:[#allocation7 + $0x78] sm:$0xff]
    %v3812 = vld [vmem:[#allocation7 + $0x80] sm:$0xff]
    %v3813 = vld [vmem:[#allocation7 + $0x88] sm:$0xff]
    %v3814 = vld [vmem:[#allocation7 + $0x90] sm:$0xff]
    %v3815 = vld [vmem:[#allocation7 + $0x98] sm:$0xff]
    %v3816 = vld [vmem:[#allocation7 + $0xa0] sm:$0xff]
    %v3817 = vld [vmem:[#allocation7 + $0xa8] sm:$0xff]
    %v3818 = vld [vmem:[#allocation7 + $0xb0] sm:$0xff]
    %v3819 = vld [vmem:[#allocation7 + $0xb8] sm:$0xff]
    %v3820 = vld [vmem:[#allocation7 + $0xc0] sm:$0xff]
    %v3821 = vld [vmem:[#allocation7 + $0xc8] sm:$0xff]
    %v3822 = vld [vmem:[#allocation7 + $0xd0] sm:$0xff]
    %v3823 = vld [vmem:[#allocation7 + $0xd8] sm:$0xff]
    %v3824 = vld [vmem:[#allocation7 + $0xe0] sm:$0xff]
    %v3825 = vld [vmem:[#allocation7 + $0xe8] sm:$0xff]
    %v3826 = vld [vmem:[#allocation7 + $0xf0] sm:$0xff]
    %v3827 = vld [vmem:[#allocation7 + $0xf8] sm:$0xff]
    %v3828 = vld [vmem:[#allocation7 + $0x100] sm:$0xff]
    %v3829 = vld [vmem:[#allocation7 + $0x108] sm:$0xff]
    %v3830 = vld [vmem:[#allocation7 + $0x110] sm:$0xff]
    %v3831 = vld [vmem:[#allocation7 + $0x118] sm:$0xff]
    %v3832 = vld [vmem:[#allocation7 + $0x120] sm:$0xff]
    %v3833 = vld [vmem:[#allocation7 + $0x128] sm:$0xff]
    %v3834 = vld [vmem:[#allocation7 + $0x130] sm:$0xff]
    %v3835 = vld [vmem:[#allocation7 + $0x138] sm:$0xff]
    %v3836 = vld [vmem:[#allocation7 + $0x140] sm:$0xff]
    %v3837 = vld [vmem:[#allocation7 + $0x148] sm:$0xff]
    %v3838 = vld [vmem:[#allocation7 + $0x150] sm:$0xff]
    %v3839 = vld [vmem:[#allocation7 + $0x158] sm:$0xff]
    %v3840 = vld [vmem:[#allocation7 + $0x160] sm:$0xff]
    %v3841 = vld [vmem:[#allocation7 + $0x168] sm:$0xff]
    %v3842 = vld [vmem:[#allocation7 + $0x170] sm:$0xff]
    %v3843 = vld [vmem:[#allocation7 + $0x178] sm:$0xff]
    %v3844 = vld [vmem:[#allocation7 + $0x180] sm:$0xff]
    %v3845 = vld [vmem:[#allocation7 + $0x188] sm:$0xff]
    %v3846 = vld [vmem:[#allocation7 + $0x190] sm:$0xff]
    %v3847 = vld [vmem:[#allocation7 + $0x198] sm:$0xff]
    %v3848 = vld [vmem:[#allocation7 + $0x1a0] sm:$0xff]
    %v3849 = vld [vmem:[#allocation7 + $0x1a8] sm:$0xff]
    %v3850 = vld [vmem:[#allocation7 + $0x1b0] sm:$0xff]
    %v3851 = vld [vmem:[#allocation7 + $0x1b8] sm:$0xff]
    %v3852 = vld [vmem:[#allocation7 + $0x1c0] sm:$0xff]
    %v3853 = vld [vmem:[#allocation7 + $0x1c8] sm:$0xff]
    %v3854 = vld [vmem:[#allocation7 + $0x1d0] sm:$0xff]
    %v3855 = vld [vmem:[#allocation7 + $0x1d8] sm:$0xff]
    %v3856 = vld [vmem:[#allocation7 + $0x1e0] sm:$0xff]
    %v3857 = vld [vmem:[#allocation7 + $0x1e8] sm:$0xff]
    %v3858 = vld [vmem:[#allocation7 + $0x1f0] sm:$0xff]
    %v3859 = vld [vmem:[#allocation7 + $0x1f8] sm:$0xff]
    %3860 = vmatpush.msra.mxu0 %v3856
    %3861 = vmatpush.msra.mxu0 %v3852
    %3862 = vmatpush.msra.mxu0 %v3848
    %3863 = vmatpush.msra.mxu0 %v3844
    %3864 = vmatpush.msra.mxu0 %v3840
    %3865 = vmatpush.msra.mxu0 %v3836
    %3866 = vmatpush.msra.mxu0 %v3832
    %3867 = vmatpush.msra.mxu0 %v3828
    %3868 = vmatpush.msra.mxu0 %v3824
    %3869 = vmatpush.msra.mxu0 %v3820
    %3870 = vmatpush.msra.mxu0 %v3816
    %3871 = vmatpush.msra.mxu0 %v3812
    %3872 = vmatpush.msra.mxu0 %v3808
    %3873 = vmatpush.msra.mxu0 %v3804
    %3874 = vmatpush.msra.mxu0 %v3800
    %3875 = vmatpush.msra.mxu0 %v3796
    %3876 = vmatmul.f32.gmra.mxu0 %v3795
    %v3877 = vpop.f32.mrf.mxu0
    %v3878 = vadd.f32 0.0, %v3877
    %3879 = vdwg.mxu0
    %3880 = vmatpush.msra.mxu0 %v3857
    %3881 = vmatpush.msra.mxu0 %v3853
    %3882 = vmatpush.msra.mxu0 %v3849
    %3883 = vmatpush.msra.mxu0 %v3845
    %3884 = vmatpush.msra.mxu0 %v3841
    %3885 = vmatpush.msra.mxu0 %v3837
    %3886 = vmatpush.msra.mxu0 %v3833
    %3887 = vmatpush.msra.mxu0 %v3829
    %3888 = vmatpush.msra.mxu0 %v3825
    %3889 = vmatpush.msra.mxu0 %v3821
    %3890 = vmatpush.msra.mxu0 %v3817
    %3891 = vmatpush.msra.mxu0 %v3813
    %3892 = vmatpush.msra.mxu0 %v3809
    %3893 = vmatpush.msra.mxu0 %v3805
    %3894 = vmatpush.msra.mxu0 %v3801
    %3895 = vmatpush.msra.mxu0 %v3797
    %3896 = vmatmul.f32.gmra.mxu0 %v3795
    %v3897 = vpop.f32.mrf.mxu0
    %v3898 = vadd.f32 0.0, %v3897
    %3899 = vdwg.mxu0
    %3900 = vmatpush.msra.mxu0 %v3858
    %3901 = vmatpush.msra.mxu0 %v3854
    %3902 = vmatpush.msra.mxu0 %v3850
    %3903 = vmatpush.msra.mxu0 %v3846
    %3904 = vmatpush.msra.mxu0 %v3842
    %3905 = vmatpush.msra.mxu0 %v3838
    %3906 = vmatpush.msra.mxu0 %v3834
    %3907 = vmatpush.msra.mxu0 %v3830
    %3908 = vmatpush.msra.mxu0 %v3826
    %3909 = vmatpush.msra.mxu0 %v3822
    %3910 = vmatpush.msra.mxu0 %v3818
    %3911 = vmatpush.msra.mxu0 %v3814
    %3912 = vmatpush.msra.mxu0 %v3810
    %3913 = vmatpush.msra.mxu0 %v3806
    %3914 = vmatpush.msra.mxu0 %v3802
    %3915 = vmatpush.msra.mxu0 %v3798
    %3916 = vmatmul.f32.gmra.mxu0 %v3795
    %v3917 = vpop.f32.mrf.mxu0
    %v3918 = vadd.f32 0.0, %v3917
    %3919 = vdwg.mxu0
    %3920 = vmatpush.msra.mxu0 %v3859
    %3921 = vmatpush.msra.mxu0 %v3855
    %3922 = vmatpush.msra.mxu0 %v3851
    %3923 = vmatpush.msra.mxu0 %v3847
    %3924 = vmatpush.msra.mxu0 %v3843
    %3925 = vmatpush.msra.mxu0 %v3839
    %3926 = vmatpush.msra.mxu0 %v3835
    %3927 = vmatpush.msra.mxu0 %v3831
    %3928 = vmatpush.msra.mxu0 %v3827
    %3929 = vmatpush.msra.mxu0 %v3823
    %3930 = vmatpush.msra.mxu0 %v3819
    %3931 = vmatpush.msra.mxu0 %v3815
    %3932 = vmatpush.msra.mxu0 %v3811
    %3933 = vmatpush.msra.mxu0 %v3807
    %3934 = vmatpush.msra.mxu0 %v3803
    %3935 = vmatpush.msra.mxu0 %v3799
    %3936 = vmatmul.f32.gmra.mxu0 %v3795
    %v3937 = vpop.f32.mrf.mxu0
    %v3938 = vadd.f32 0.0, %v3937
    %3939 = vdwg.mxu0
    %s3940 = sld [smem:[#allocation3 + $0x6]]
    %p3941 = scmp.ne.s32.totalorder %s3940, 0
    %s3942 = scalar_select %p3941, 1, 0
    %s3943 = scvt.s32.f32 %s3942
    %s3944 = scalar_lea.vmem %s3, 192
    %v3945 = vld [vmem:[%s3944] sm:$0xff]
    %v3946 = vld [vmem:[%s3944 + $0x8] sm:$0xff]
    %v3947 = vld [vmem:[%s3944 + $0x10] sm:$0xff]
    %v3948 = vld [vmem:[%s3944 + $0x18] sm:$0xff]
    %v3949 = vstv %s3943
    %v3950 = vmul.f32 %v3945, %v3949
    %v3951 = vmul.f32 %v3946, %v3949
    %v3952 = vmul.f32 %v3947, %v3949
    %v3953 = vmul.f32 %v3948, %v3949
    %s3954 = ssub.f32 1.0, %s3943
    %v3955 = vstv %s3954
    %v3956 = vmul.f32 %v3878, %v3955
    %v3957 = vmul.f32 %v3898, %v3955
    %v3958 = vmul.f32 %v3918, %v3955
    %v3959 = vmul.f32 %v3938, %v3955
    %v3960 = vadd.f32 %v3950, %v3956
    %v3961 = vadd.f32 %v3951, %v3957
    %v3962 = vadd.f32 %v3952, %v3958
    %v3963 = vadd.f32 %v3953, %v3959
    %v3964 = vld [vmem:[#allocation4] sm:$0xff]
    %v3965 = vld [vmem:[#allocation4 + $0x8] sm:$0xff]
    %v3966 = vld [vmem:[#allocation4 + $0x10] sm:$0xff]
    %v3967 = vld [vmem:[#allocation4 + $0x18] sm:$0xff]
    %v3968 = vld [vmem:[#allocation4 + $0x20] sm:$0xff]
    %v3969 = vld [vmem:[#allocation4 + $0x28] sm:$0xff]
    %v3970 = vld [vmem:[#allocation4 + $0x30] sm:$0xff]
    %v3971 = vld [vmem:[#allocation4 + $0x38] sm:$0xff]
    %v3972 = vld [vmem:[#allocation4 + $0x40] sm:$0xff]
    %v3973 = vld [vmem:[#allocation4 + $0x48] sm:$0xff]
    %v3974 = vld [vmem:[#allocation4 + $0x50] sm:$0xff]
    %v3975 = vld [vmem:[#allocation4 + $0x58] sm:$0xff]
    %v3976 = vld [vmem:[#allocation4 + $0x60] sm:$0xff]
    %v3977 = vld [vmem:[#allocation4 + $0x68] sm:$0xff]
    %v3978 = vld [vmem:[#allocation4 + $0x70] sm:$0xff]
    %v3979 = vld [vmem:[#allocation4 + $0x78] sm:$0xff]
    %v3980 = vld [vmem:[#allocation4 + $0x80] sm:$0xff]
    %v3981 = vld [vmem:[#allocation4 + $0x88] sm:$0xff]
    %v3982 = vld [vmem:[#allocation4 + $0x90] sm:$0xff]
    %v3983 = vld [vmem:[#allocation4 + $0x98] sm:$0xff]
    %v3984 = vld [vmem:[#allocation4 + $0xa0] sm:$0xff]
    %v3985 = vld [vmem:[#allocation4 + $0xa8] sm:$0xff]
    %v3986 = vld [vmem:[#allocation4 + $0xb0] sm:$0xff]
    %v3987 = vld [vmem:[#allocation4 + $0xb8] sm:$0xff]
    %v3988 = vld [vmem:[#allocation4 + $0xc0] sm:$0xff]
    %v3989 = vld [vmem:[#allocation4 + $0xc8] sm:$0xff]
    %v3990 = vld [vmem:[#allocation4 + $0xd0] sm:$0xff]
    %v3991 = vld [vmem:[#allocation4 + $0xd8] sm:$0xff]
    %v3992 = vld [vmem:[#allocation4 + $0xe0] sm:$0xff]
    %v3993 = vld [vmem:[#allocation4 + $0xe8] sm:$0xff]
    %v3994 = vld [vmem:[#allocation4 + $0xf0] sm:$0xff]
    %v3995 = vld [vmem:[#allocation4 + $0xf8] sm:$0xff]
    %v3996 = vld [vmem:[#allocation4 + $0x100] sm:$0xff]
    %v3997 = vld [vmem:[#allocation4 + $0x108] sm:$0xff]
    %v3998 = vld [vmem:[#allocation4 + $0x110] sm:$0xff]
    %v3999 = vld [vmem:[#allocation4 + $0x118] sm:$0xff]
    %v4000 = vld [vmem:[#allocation4 + $0x120] sm:$0xff]
    %v4001 = vld [vmem:[#allocation4 + $0x128] sm:$0xff]
    %v4002 = vld [vmem:[#allocation4 + $0x130] sm:$0xff]
    %v4003 = vld [vmem:[#allocation4 + $0x138] sm:$0xff]
    %v4004 = vld [vmem:[#allocation4 + $0x140] sm:$0xff]
    %v4005 = vld [vmem:[#allocation4 + $0x148] sm:$0xff]
    %v4006 = vld [vmem:[#allocation4 + $0x150] sm:$0xff]
    %v4007 = vld [vmem:[#allocation4 + $0x158] sm:$0xff]
    %v4008 = vld [vmem:[#allocation4 + $0x160] sm:$0xff]
    %v4009 = vld [vmem:[#allocation4 + $0x168] sm:$0xff]
    %v4010 = vld [vmem:[#allocation4 + $0x170] sm:$0xff]
    %v4011 = vld [vmem:[#allocation4 + $0x178] sm:$0xff]
    %v4012 = vld [vmem:[#allocation4 + $0x180] sm:$0xff]
    %v4013 = vld [vmem:[#allocation4 + $0x188] sm:$0xff]
    %v4014 = vld [vmem:[#allocation4 + $0x190] sm:$0xff]
    %v4015 = vld [vmem:[#allocation4 + $0x198] sm:$0xff]
    %v4016 = vld [vmem:[#allocation4 + $0x1a0] sm:$0xff]
    %v4017 = vld [vmem:[#allocation4 + $0x1a8] sm:$0xff]
    %v4018 = vld [vmem:[#allocation4 + $0x1b0] sm:$0xff]
    %v4019 = vld [vmem:[#allocation4 + $0x1b8] sm:$0xff]
    %v4020 = vld [vmem:[#allocation4 + $0x1c0] sm:$0xff]
    %v4021 = vld [vmem:[#allocation4 + $0x1c8] sm:$0xff]
    %v4022 = vld [vmem:[#allocation4 + $0x1d0] sm:$0xff]
    %v4023 = vld [vmem:[#allocation4 + $0x1d8] sm:$0xff]
    %v4024 = vld [vmem:[#allocation4 + $0x1e0] sm:$0xff]
    %v4025 = vld [vmem:[#allocation4 + $0x1e8] sm:$0xff]
    %v4026 = vld [vmem:[#allocation4 + $0x1f0] sm:$0xff]
    %v4027 = vld [vmem:[#allocation4 + $0x1f8] sm:$0xff]
    %4028 = vmatpush.msra.mxu0 %v4024
    %4029 = vmatpush.msra.mxu0 %v4020
    %4030 = vmatpush.msra.mxu0 %v4016
    %4031 = vmatpush.msra.mxu0 %v4012
    %4032 = vmatpush.msra.mxu0 %v4008
    %4033 = vmatpush.msra.mxu0 %v4004
    %4034 = vmatpush.msra.mxu0 %v4000
    %4035 = vmatpush.msra.mxu0 %v3996
    %4036 = vmatpush.msra.mxu0 %v3992
    %4037 = vmatpush.msra.mxu0 %v3988
    %4038 = vmatpush.msra.mxu0 %v3984
    %4039 = vmatpush.msra.mxu0 %v3980
    %4040 = vmatpush.msra.mxu0 %v3976
    %4041 = vmatpush.msra.mxu0 %v3972
    %4042 = vmatpush.msra.mxu0 %v3968
    %4043 = vmatpush.msra.mxu0 %v3964
    %4044 = vmatmul.f32.gmra.mxu0 %v3742
    %v4045 = vpop.f32.mrf.mxu0
    %v4046 = vadd.f32 0.0, %v4045
    %4047 = vdwg.mxu0
    %4048 = vmatpush.msra.mxu0 %v4025
    %4049 = vmatpush.msra.mxu0 %v4021
    %4050 = vmatpush.msra.mxu0 %v4017
    %4051 = vmatpush.msra.mxu0 %v4013
    %4052 = vmatpush.msra.mxu0 %v4009
    %4053 = vmatpush.msra.mxu0 %v4005
    %4054 = vmatpush.msra.mxu0 %v4001
    %4055 = vmatpush.msra.mxu0 %v3997
    %4056 = vmatpush.msra.mxu0 %v3993
    %4057 = vmatpush.msra.mxu0 %v3989
    %4058 = vmatpush.msra.mxu0 %v3985
    %4059 = vmatpush.msra.mxu0 %v3981
    %4060 = vmatpush.msra.mxu0 %v3977
    %4061 = vmatpush.msra.mxu0 %v3973
    %4062 = vmatpush.msra.mxu0 %v3969
    %4063 = vmatpush.msra.mxu0 %v3965
    %4064 = vmatmul.f32.gmra.mxu0 %v3742
    %v4065 = vpop.f32.mrf.mxu0
    %v4066 = vadd.f32 0.0, %v4065
    %4067 = vdwg.mxu0
    %4068 = vmatpush.msra.mxu0 %v4026
    %4069 = vmatpush.msra.mxu0 %v4022
    %4070 = vmatpush.msra.mxu0 %v4018
    %4071 = vmatpush.msra.mxu0 %v4014
    %4072 = vmatpush.msra.mxu0 %v4010
    %4073 = vmatpush.msra.mxu0 %v4006
    %4074 = vmatpush.msra.mxu0 %v4002
    %4075 = vmatpush.msra.mxu0 %v3998
    %4076 = vmatpush.msra.mxu0 %v3994
    %4077 = vmatpush.msra.mxu0 %v3990
    %4078 = vmatpush.msra.mxu0 %v3986
    %4079 = vmatpush.msra.mxu0 %v3982
    %4080 = vmatpush.msra.mxu0 %v3978
    %4081 = vmatpush.msra.mxu0 %v3974
    %4082 = vmatpush.msra.mxu0 %v3970
    %4083 = vmatpush.msra.mxu0 %v3966
    %4084 = vmatmul.f32.gmra.mxu0 %v3742
    %v4085 = vpop.f32.mrf.mxu0
    %v4086 = vadd.f32 0.0, %v4085
    %4087 = vdwg.mxu0
    %4088 = vmatpush.msra.mxu0 %v4027
    %4089 = vmatpush.msra.mxu0 %v4023
    %4090 = vmatpush.msra.mxu0 %v4019
    %4091 = vmatpush.msra.mxu0 %v4015
    %4092 = vmatpush.msra.mxu0 %v4011
    %4093 = vmatpush.msra.mxu0 %v4007
    %4094 = vmatpush.msra.mxu0 %v4003
    %4095 = vmatpush.msra.mxu0 %v3999
    %4096 = vmatpush.msra.mxu0 %v3995
    %4097 = vmatpush.msra.mxu0 %v3991
    %4098 = vmatpush.msra.mxu0 %v3987
    %4099 = vmatpush.msra.mxu0 %v3983
    %4100 = vmatpush.msra.mxu0 %v3979
    %4101 = vmatpush.msra.mxu0 %v3975
    %4102 = vmatpush.msra.mxu0 %v3971
    %4103 = vmatpush.msra.mxu0 %v3967
    %4104 = vmatmul.f32.gmra.mxu0 %v3742
    %v4105 = vpop.f32.mrf.mxu0
    %v4106 = vadd.f32 0.0, %v4105
    %4107 = vdwg.mxu0
    %v4108 = vadd.f32 %v3960, %v4046
    %v4109 = vadd.f32 %v3961, %v4066
    %v4110 = vadd.f32 %v3962, %v4086
    %v4111 = vadd.f32 %v3963, %v4106
    %v4112 = vxor.u32 %v4108, 2147483648
    %v4113 = vmul.f32 %v4112, 1.442695
    %v4114 = vpow.pop %v4113
    %v4115 = vadd.f32 %v4114, 1.0
    %v4116 = vrcp.pop %v4115
    %v4117 = vmul.f32 %v4115, %v4116
    %v4118 = vsub.f32 1.0, %v4117
    %v4119 = vmul.f32 %v4116, %v4118
    %v4120 = vadd.f32 %v4116, %v4119
    %vm4121 = vweird.f32 %v4115
    %vm4122 = vweird.f32 %v4116
    %vm4123 = vmor %vm4121, %vm4122
    %v4124 = vsel %vm4123, %v4116, %v4120
    %v4125 = vand.u32 2147483647, %v4115
    %vm4126 = vcmp.eq.f32.partialorder %v4125, 8.507059e+37
    %v4127 = vand.u32 %v4115, 2147483648
    %v4128 = vor.u32 1.1754944e-38, %v4127
    %v4129 = vsel %vm4126, %v4128, %v4124
    %v4130 = vmul.f32 1.0, %v4129
    %v4131 = vxor.u32 %v4109, 2147483648
    %v4132 = vmul.f32 %v4131, 1.442695
    %v4133 = vpow.pop %v4132
    %v4134 = vadd.f32 %v4133, 1.0
    %v4135 = vrcp.pop %v4134
    %v4136 = vmul.f32 %v4134, %v4135
    %v4137 = vsub.f32 1.0, %v4136
    %v4138 = vmul.f32 %v4135, %v4137
    %v4139 = vadd.f32 %v4135, %v4138
    %vm4140 = vweird.f32 %v4134
    %vm4141 = vweird.f32 %v4135
    %vm4142 = vmor %vm4140, %vm4141
    %v4143 = vsel %vm4142, %v4135, %v4139
    %v4144 = vand.u32 2147483647, %v4134
    %vm4145 = vcmp.eq.f32.partialorder %v4144, 8.507059e+37
    %v4146 = vand.u32 %v4134, 2147483648
    %v4147 = vor.u32 1.1754944e-38, %v4146
    %v4148 = vsel %vm4145, %v4147, %v4143
    %v4149 = vmul.f32 1.0, %v4148
    %v4150 = vtanh.pop %v4110
    %v4151 = vxor.u32 %v4111, 2147483648
    %v4152 = vmul.f32 %v4151, 1.442695
    %v4153 = vpow.pop %v4152
    %v4154 = vadd.f32 %v4153, 1.0
    %v4155 = vrcp.pop %v4154
    %v4156 = vmul.f32 %v4154, %v4155
    %v4157 = vsub.f32 1.0, %v4156
    %v4158 = vmul.f32 %v4155, %v4157
    %v4159 = vadd.f32 %v4155, %v4158
    %vm4160 = vweird.f32 %v4154
    %vm4161 = vweird.f32 %v4155
    %vm4162 = vmor %vm4160, %vm4161
    %v4163 = vsel %vm4162, %v4155, %v4159
    %v4164 = vand.u32 2147483647, %v4154
    %vm4165 = vcmp.eq.f32.partialorder %v4164, 8.507059e+37
    %v4166 = vand.u32 %v4154, 2147483648
    %v4167 = vor.u32 1.1754944e-38, %v4166
    %v4168 = vsel %vm4165, %v4167, %v4163
    %v4169 = vmul.f32 1.0, %v4168
    %v4170 = vmul.f32 %v4149, %v3740
    %v4171 = vmul.f32 %v4130, %v4150
    %v4172 = vadd.f32 %v4170, %v4171
    %v4173 = vtanh.pop %v4172
    %v4174 = vmul.f32 %v4169, %v4173
    %v4175 = vld [vmem:[%s6] sm:$0xff]
    %v4176 = vld [vmem:[%s6 + $0x8] sm:$0xff]
    %v4177 = vld [vmem:[%s6 + $0x10] sm:$0xff]
    %v4178 = vld [vmem:[%s6 + $0x18] sm:$0xff]
    %v4179 = vld [vmem:[%s6 + $0x20] sm:$0xff]
    %v4180 = vld [vmem:[%s6 + $0x28] sm:$0xff]
    %v4181 = vld [vmem:[%s6 + $0x30] sm:$0xff]
    %v4182 = vld [vmem:[%s6 + $0x38] sm:$0xff]
    %v4183 = vld [vmem:[%s6 + $0x40] sm:$0xff]
    %v4184 = vld [vmem:[%s6 + $0x48] sm:$0xff]
    %v4185 = vld [vmem:[%s6 + $0x50] sm:$0xff]
    %v4186 = vld [vmem:[%s6 + $0x58] sm:$0xff]
    %v4187 = vld [vmem:[%s6 + $0x60] sm:$0xff]
    %v4188 = vld [vmem:[%s6 + $0x68] sm:$0xff]
    %v4189 = vld [vmem:[%s6 + $0x70] sm:$0xff]
    %v4190 = vld [vmem:[%s6 + $0x78] sm:$0xff]
    %v4191 = vld [vmem:[%s7] sm:$0x1]
    %v4193 = vperm.slane %v4191, 0
    %4195 = vmatpush.msra.mxu0 %v4190
    %4196 = vmatpush.msra.mxu0 %v4189
    %4197 = vmatpush.msra.mxu0 %v4188
    %4198 = vmatpush.msra.mxu0 %v4187
    %4199 = vmatpush.msra.mxu0 %v4186
    %4200 = vmatpush.msra.mxu0 %v4185
    %4201 = vmatpush.msra.mxu0 %v4184
    %4202 = vmatpush.msra.mxu0 %v4183
    %4203 = vmatpush.msra.mxu0 %v4182
    %4204 = vmatpush.msra.mxu0 %v4181
    %4205 = vmatpush.msra.mxu0 %v4180
    %4206 = vmatpush.msra.mxu0 %v4179
    %4207 = vmatpush.msra.mxu0 %v4178
    %4208 = vmatpush.msra.mxu0 %v4177
    %4209 = vmatpush.msra.mxu0 %v4176
    %4210 = vmatpush.msra.mxu0 %v4175
    %4211 = vmatmul.f32.gmra.mxu0 %v4174
    %v4212 = vpop.f32.mrf.mxu0
    %v4213 = vadd.f32 %v4193, %v4212
    %4214 = vdwg.mxu0
    %s4215 = scalar_lea.vmem [#allocation9], 56
    %4216 = vst [vmem:[%s4215] sm:$0xff] %v4213
    // Predicated region
    $region38: #{_seq2seq_forward.1} parent=1 // pred_check
      _
    $region39: #{_seq2seq_forward.1} parent=1 // pred_check_branch
      %4218 = sbr.rel (0) target = $region41
    $region40: #{_seq2seq_forward.1} parent=1 // pred_region
      %4220 = vsyncadd [#allocation6], 0
      %s4221 = sshll.u32 [#allocation9], 4
      %s4222 = int_to_ptr.vmem [resolvable:$true] %s4221
      %s4223 = sshll.u32 %s8, 4
      %s4224 = int_to_ptr.hbm [resolvable:$true] %s4223
      %4229 = dma.vmem_to_hbm [thread:$0]  %s4222, 1024, %s4224, [#allocation6], 128, 128, 8
    $region41: #{_seq2seq_forward.1} parent=1 // pred_fallthru
      _
    // Predicated region
    $region42: #{_seq2seq_forward.1} parent=1 // pred_check
      _
    $region43: #{_seq2seq_forward.1} parent=1 // pred_check_branch
      %4231 = sbr.rel (0) target = $region45
    $region44: #{_seq2seq_forward.1} parent=1 // pred_region
      %4233 = dma.done [#allocation6], 1024
    $region45: #{_seq2seq_forward.1} parent=1 // pred_fallthru
      _
    %4234 = vsyncpa [#allocation5], 1
    %4235 = vsyncpa [#allocation8], 1
    %4236 = vsyncpa [#allocation6], 1

</llo_original>
